<compile_context>
chip_gen: v5e
topology: v5e:2x2
jax: 0.10.0
libtpu: 0.0.40
codegen_flags: <defaults>
</compile_context>

<pallas_src>
import numpy as np
import jax
import jax.numpy as jnp
from jax.experimental import pallas as pl
from jax.experimental.pallas import tpu as pltpu

IN_DIM = 8919
HID_DIM = 64
EMB_DIMS = 32

HP = 128          # padded hidden width for the epilogue (W2 output / W3 input)
EP = 128          # padded output width -> lane-dense store; sliced to 32
MAX_TK = 8960     # target at most 1-2 K steps


def _round_up(x, m):
    return (x + m - 1) // m * m


def _k_tiling(K):
    """Pick (Kp, TK, n_steps) with TK a multiple of 128 and <= MAX_TK."""
    K128 = _round_up(K, 128)
    n_steps = max(1, -(-K128 // MAX_TK))
    TK = _round_up(-(-K128 // n_steps), 128)
    Kp = TK * n_steps
    return Kp, TK, n_steps


# --------------------------------------------------------------------------
# Fused MLP kernel.
# Grid = (Bp // TB, n_k_steps): batch axis "parallel", K axis "arbitrary".
# --------------------------------------------------------------------------
def _mlp_kernel(x_ref, w1_ref, b1_ref, w2_ref, b2_ref, w3_ref, b3_ref,
                o_ref, acc_ref):
    k = pl.program_id(1)

    @pl.when(k == 0)
    def _():
        acc_ref[...] = jnp.zeros_like(acc_ref)

    # Layer-1 partial product: bf16 operands, f32 accumulation on the MXU.
    acc_ref[...] += jnp.dot(x_ref[...], w1_ref[...],
                            preferred_element_type=jnp.float32)

    # Epilogue only on the last K step: bias + ReLU, then the two tiny layers
    # (bf16 operands, f32 accumulation) and one lane-dense output store.
    @pl.when(k == pl.num_programs(1) - 1)
    def _():
        h1 = jnp.maximum(acc_ref[...] + b1_ref[...], 0.0)          # [TB, 64] f32
        h1 = h1.astype(jnp.bfloat16)
        h2 = jnp.maximum(
            jnp.dot(h1, w2_ref[...], preferred_element_type=jnp.float32)
            + b2_ref[...], 0.0)                                     # [TB, HP] f32
        h2 = h2.astype(jnp.bfloat16)
        y = jnp.maximum(
            jnp.dot(h2, w3_ref[...], preferred_element_type=jnp.float32)
            + b3_ref[...], 0.0)                                     # [TB, EP] f32
        o_ref[...] = y.astype(o_ref.dtype)


def _build_call(Bp, TB, Kp, TK, n_steps):
    return pl.pallas_call(
        _mlp_kernel,
        out_shape=jax.ShapeDtypeStruct((Bp, EP), jnp.float32),
        grid_spec=pltpu.PrefetchScalarGridSpec(
            num_scalar_prefetch=0,
            grid=(Bp // TB, n_steps),
            in_specs=[
                pl.BlockSpec((TB, TK), lambda b, k: (b, k)),        # x   (bf16)
                pl.BlockSpec((TK, HID_DIM), lambda b, k: (k, 0)),   # W1  (bf16, 64-wide)
                pl.BlockSpec((1, HID_DIM), lambda b, k: (0, 0)),    # b1  (f32)
                pl.BlockSpec((HID_DIM, HP), lambda b, k: (0, 0)),   # W2  (bf16)
                pl.BlockSpec((1, HP), lambda b, k: (0, 0)),         # b2  (f32)
                pl.BlockSpec((HP, EP), lambda b, k: (0, 0)),        # W3  (bf16)
                pl.BlockSpec((1, EP), lambda b, k: (0, 0)),         # b3  (f32)
            ],
            out_specs=pl.BlockSpec((TB, EP), lambda b, k: (b, 0)),
            scratch_shapes=[pltpu.VMEM((TB, HID_DIM), jnp.float32)],
        ),
        compiler_params=pltpu.CompilerParams(
            dimension_semantics=("parallel", "arbitrary"),
            vmem_limit_bytes=32 * 1024 * 1024,
        ),
    )


# --------------------------------------------------------------------------
# One-time weight staging (transpose, pad, cast) -- NOT inside the per-call
# jit, so the padded/cast copies are made once and reused every forward.
# --------------------------------------------------------------------------
def prepare_params(params):
    Kp, _, _ = _k_tiling(IN_DIM)

    w1 = jnp.zeros((Kp, HID_DIM), jnp.bfloat16).at[:IN_DIM, :].set(
        params["w1"].T.astype(jnp.bfloat16))
    b1 = params["b1"].reshape(1, HID_DIM).astype(jnp.float32)

    w2 = jnp.zeros((HID_DIM, HP), jnp.bfloat16).at[:, :HID_DIM].set(
        params["w2"].T.astype(jnp.bfloat16))
    b2 = jnp.zeros((1, HP), jnp.float32).at[0, :HID_DIM].set(params["b2"])

    w3 = jnp.zeros((HP, EP), jnp.bfloat16).at[:HID_DIM, :EMB_DIMS].set(
        params["w3"].T.astype(jnp.bfloat16))
    b3 = jnp.zeros((1, EP), jnp.float32).at[0, :EMB_DIMS].set(params["b3"])

    return dict(w1=w1, b1=b1, w2=w2, b2=b2, w3=w3, b3=b3)


# --------------------------------------------------------------------------
# Per-call forward (only x padding/casting happens here; weights pre-staged).
# --------------------------------------------------------------------------
@jax.jit
def model_reports_forward(x, prepped):
    B, K = x.shape
    Kp, TK, n_steps = _k_tiling(K)

    TB = min(_round_up(B, 8), 128)     # batch tile (one tile at tiny B)
    Bp = _round_up(B, TB)

    # Pad only the 41 extra K columns and the few extra batch rows; cast bf16.
    x_p = jnp.pad(x.astype(jnp.bfloat16), ((0, Bp - B), (0, Kp - K)))

    out = _build_call(Bp, TB, Kp, TK, n_steps)(
        x_p, prepped["w1"], prepped["b1"], prepped["w2"], prepped["b2"],
        prepped["w3"], prepped["b3"])
    return out[:B, :EMB_DIMS]


# --------------------------------------------------------------------------
# Deterministic synthetic parameters (PyTorch nn.Linear default init shapes)
# --------------------------------------------------------------------------
def init_params(key):
    ks = jax.random.split(key, 6)

    def lin(kw, kb, fan_in, fan_out):
        bound = 1.0 / np.sqrt(fan_in)
        w = jax.random.uniform(kw, (fan_out, fan_in), jnp.float32, -bound, bound)
        b = jax.random.uniform(kb, (fan_out,), jnp.float32, -bound, bound)
        return w, b

    w1, b1 = lin(ks[0], ks[1], IN_DIM, HID_DIM)
    w2, b2 = lin(ks[2], ks[3], HID_DIM, HID_DIM)
    w3, b3 = lin(ks[4], ks[5], HID_DIM, EMB_DIMS)
    return dict(w1=w1, b1=b1, w2=w2, b2=b2, w3=w3, b3=b3)


def reference_forward(x, p):
    h = jax.nn.relu(x @ p["w1"].T + p["b1"])
    h = jax.nn.relu(h @ p["w2"].T + p["b2"])
    return jax.nn.relu(h @ p["w3"].T + p["b3"])


if __name__ == "__main__":
    key = jax.random.PRNGKey(0)
    pkey, xkey = jax.random.split(key)
    params = init_params(pkey)
    prepped = prepare_params(params)   # staged once, reused every call

    # The module hard-codes Linear(8919, 64) -> input features must be 8919.
    x = jax.random.normal(xkey, (2, IN_DIM), jnp.float32)

    out = jax.block_until_ready(model_reports_forward(x, prepped))
    assert out.shape == (2, EMB_DIMS)
    assert bool(jnp.all(jnp.isfinite(out)))

    # Pure-JAX f32 reference; tolerance accounts for the bf16 cast of x / W1
    # over the K=8919 reduction (f32 MXU accumulation).
    ref = reference_forward(x, params)
    assert bool(jnp.allclose(out, ref, rtol=5e-2, atol=1e-2))

    print("KERNEL_OK")
</pallas_src>

<mosaic_0001>
module attributes {stable_mosaic.version = 11 : i64} {
  func.func @_mlp_kernel(%arg0: i32, %arg1: i32, %arg2: memref<8x8960xbf16, #tpu.memory_space<vmem>>, %arg3: memref<8960x64xbf16, #tpu.memory_space<vmem>>, %arg4: memref<1x64xf32, #tpu.memory_space<vmem>>, %arg5: memref<64x128xbf16, #tpu.memory_space<vmem>>, %arg6: memref<1x128xf32, #tpu.memory_space<vmem>>, %arg7: memref<128x128xbf16, #tpu.memory_space<vmem>>, %arg8: memref<1x128xf32, #tpu.memory_space<vmem>>, %arg9: memref<8x128xf32, #tpu.memory_space<vmem>>, %arg10: memref<8x64xf32, #tpu.memory_space<vmem>>) attributes {dimension_semantics = [#tpu.dimension_semantics<parallel>, #tpu.dimension_semantics<arbitrary>], iteration_bounds = array<i64: 1, 1>, scalar_prefetch = 0 : i64, scratch_operands = 1 : i64, tpu.core_type = #tpu.core_type<tc>, window_params = [{transform_indices = @transform_0, window_bounds = array<i64: 8, 8960>}, {transform_indices = @transform_1, window_bounds = array<i64: 8960, 64>}, {pipeline_mode = #tpu.pipeline_mode<synchronous>, transform_indices = @transform_2, window_bounds = array<i64: 1, 64>}, {pipeline_mode = #tpu.pipeline_mode<synchronous>, transform_indices = @transform_3, window_bounds = array<i64: 64, 128>}, {pipeline_mode = #tpu.pipeline_mode<synchronous>, transform_indices = @transform_4, window_bounds = array<i64: 1, 128>}, {pipeline_mode = #tpu.pipeline_mode<synchronous>, transform_indices = @transform_5, window_bounds = array<i64: 128, 128>}, {pipeline_mode = #tpu.pipeline_mode<synchronous>, transform_indices = @transform_6, window_bounds = array<i64: 1, 128>}, {transform_indices = @transform_7, window_bounds = array<i64: 8, 128>}]} {
    %c0_i32 = arith.constant 0 : i32
    %0 = arith.cmpi eq, %arg1, %c0_i32 : i32
    %1 = arith.extui %0 : i1 to i32
    %c0_i32_0 = arith.constant 0 : i32
    %2 = arith.cmpi ne, %1, %c0_i32_0 : i32
    scf.if %2 {
      %cst_10 = arith.constant 0.000000e+00 : f32
      %12 = vector.broadcast %cst_10 : f32 to vector<8x64xf32>
      %c0_11 = arith.constant 0 : index
      %c0_12 = arith.constant 0 : index
      %13 = vector.load %arg10[%c0_11, %c0_12] : memref<8x64xf32, #tpu.memory_space<vmem>>, vector<8x64xf32>
      tpu.vector_store %arg10[%c0_11, %c0_12], %12 {strides = array<i32>} : memref<8x64xf32, #tpu.memory_space<vmem>>, vector<8x64xf32>,
    } else {
    }
    %c0 = arith.constant 0 : index
    %c0_1 = arith.constant 0 : index
    %3 = vector.load %arg10[%c0, %c0_1] : memref<8x64xf32, #tpu.memory_space<vmem>>, vector<8x64xf32>
    %c0_2 = arith.constant 0 : index
    %c0_3 = arith.constant 0 : index
    %4 = vector.load %arg2[%c0_2, %c0_3] : memref<8x8960xbf16, #tpu.memory_space<vmem>>, vector<8x8960xbf16>
    %c0_4 = arith.constant 0 : index
    %c0_5 = arith.constant 0 : index
    %5 = vector.load %arg3[%c0_4, %c0_5] : memref<8960x64xbf16, #tpu.memory_space<vmem>>, vector<8960x64xbf16>
    %cst = arith.constant dense<0.000000e+00> : vector<8x64xf32>
    %6 = tpu.matmul %4, %5, %cst {dimension_numbers = #tpu.dot_dimension_numbers<[1], [0], [0], [1], [0, 0, 1, 1], [], []>} : vector<8x8960xbf16>, vector<8960x64xbf16>, vector<8x64xf32> -> vector<8x64xf32>
    %7 = arith.addf %3, %6 : vector<8x64xf32>
    %c0_6 = arith.constant 0 : index
    %c0_7 = arith.constant 0 : index
    %8 = vector.load %arg10[%c0_6, %c0_7] : memref<8x64xf32, #tpu.memory_space<vmem>>, vector<8x64xf32>
    tpu.vector_store %arg10[%c0_6, %c0_7], %7 {strides = array<i32>} : memref<8x64xf32, #tpu.memory_space<vmem>>, vector<8x64xf32>,
    %c0_i32_8 = arith.constant 0 : i32
    %9 = arith.cmpi eq, %arg1, %c0_i32_8 : i32
    %10 = arith.extui %9 : i1 to i32
    %c0_i32_9 = arith.constant 0 : i32
    %11 = arith.cmpi ne, %10, %c0_i32_9 : i32
    scf.if %11 {
      %c0_10 = arith.constant 0 : index
      %c0_11 = arith.constant 0 : index
      %12 = vector.load %arg10[%c0_10, %c0_11] : memref<8x64xf32, #tpu.memory_space<vmem>>, vector<8x64xf32>
      %c0_12 = arith.constant 0 : index
      %c0_13 = arith.constant 0 : index
      %13 = vector.load %arg4[%c0_12, %c0_13] : memref<1x64xf32, #tpu.memory_space<vmem>>, vector<1x64xf32>
      %14 = vector.broadcast %13 : vector<1x64xf32> to vector<8x64xf32>
      %15 = arith.addf %12, %14 : vector<8x64xf32>
      %cst_14 = arith.constant 0.000000e+00 : f32
      %16 = vector.broadcast %cst_14 : f32 to vector<8x64xf32>
      %17 = arith.maximumf %15, %16 : vector<8x64xf32>
      %18 = arith.truncf %17 : vector<8x64xf32> to vector<8x64xbf16>
      %c0_15 = arith.constant 0 : index
      %c0_16 = arith.constant 0 : index
      %19 = vector.load %arg5[%c0_15, %c0_16] : memref<64x128xbf16, #tpu.memory_space<vmem>>, vector<64x128xbf16>
      %cst_17 = arith.constant dense<0.000000e+00> : vector<8x128xf32>
      %20 = tpu.matmul %18, %19, %cst_17 {dimension_numbers = #tpu.dot_dimension_numbers<[1], [0], [0], [1], [0, 0, 1, 1], [], []>} : vector<8x64xbf16>, vector<64x128xbf16>, vector<8x128xf32> -> vector<8x128xf32>
      %c0_18 = arith.constant 0 : index
      %c0_19 = arith.constant 0 : index
      %21 = vector.load %arg6[%c0_18, %c0_19] : memref<1x128xf32, #tpu.memory_space<vmem>>, vector<1x128xf32>
      %22 = vector.broadcast %21 : vector<1x128xf32> to vector<8x128xf32>
      %23 = arith.addf %20, %22 : vector<8x128xf32>
      %cst_20 = arith.constant 0.000000e+00 : f32
      %24 = vector.broadcast %cst_20 : f32 to vector<8x128xf32>
      %25 = arith.maximumf %23, %24 : vector<8x128xf32>
      %26 = arith.truncf %25 : vector<8x128xf32> to vector<8x128xbf16>
      %c0_21 = arith.constant 0 : index
      %c0_22 = arith.constant 0 : index
      %27 = vector.load %arg7[%c0_21, %c0_22] : memref<128x128xbf16, #tpu.memory_space<vmem>>, vector<128x128xbf16>
      %cst_23 = arith.constant dense<0.000000e+00> : vector<8x128xf32>
      %28 = tpu.matmul %26, %27, %cst_23 {dimension_numbers = #tpu.dot_dimension_numbers<[1], [0], [0], [1], [0, 0, 1, 1], [], []>} : vector<8x128xbf16>, vector<128x128xbf16>, vector<8x128xf32> -> vector<8x128xf32>
      %c0_24 = arith.constant 0 : index
      %c0_25 = arith.constant 0 : index
      %29 = vector.load %arg8[%c0_24, %c0_25] : memref<1x128xf32, #tpu.memory_space<vmem>>, vector<1x128xf32>
      %30 = vector.broadcast %29 : vector<1x128xf32> to vector<8x128xf32>
      %31 = arith.addf %28, %30 : vector<8x128xf32>
      %cst_26 = arith.constant 0.000000e+00 : f32
      %32 = vector.broadcast %cst_26 : f32 to vector<8x128xf32>
      %33 = arith.maximumf %31, %32 : vector<8x128xf32>
      %c0_27 = arith.constant 0 : index
      %c0_28 = arith.constant 0 : index
      %34 = vector.load %arg9[%c0_27, %c0_28] : memref<8x128xf32, #tpu.memory_space<vmem>>, vector<8x128xf32>
      tpu.vector_store %arg9[%c0_27, %c0_28], %33 {strides = array<i32>} : memref<8x128xf32, #tpu.memory_space<vmem>>, vector<8x128xf32>,
    } else {
    }
    return
  }
  func.func @transform_0(%arg0: i32, %arg1: i32) -> (i32, i32) {
    %c0_i32 = arith.constant 0 : i32
    return %arg0, %arg1 : i32, i32
  }
  func.func @transform_1(%arg0: i32, %arg1: i32) -> (i32, i32) {
    %c0_i32 = arith.constant 0 : i32
    %c0_i32_0 = arith.constant 0 : i32
    return %arg1, %c0_i32 : i32, i32
  }
  func.func @transform_2(%arg0: i32, %arg1: i32) -> (i32, i32) {
    %c0_i32 = arith.constant 0 : i32
    %c0_i32_0 = arith.constant 0 : i32
    %c0_i32_1 = arith.constant 0 : i32
    return %c0_i32, %c0_i32_0 : i32, i32
  }
  func.func @transform_3(%arg0: i32, %arg1: i32) -> (i32, i32) {
    %c0_i32 = arith.constant 0 : i32
    %c0_i32_0 = arith.constant 0 : i32
    %c0_i32_1 = arith.constant 0 : i32
    return %c0_i32, %c0_i32_0 : i32, i32
  }
  func.func @transform_4(%arg0: i32, %arg1: i32) -> (i32, i32) {
    %c0_i32 = arith.constant 0 : i32
    %c0_i32_0 = arith.constant 0 : i32
    %c0_i32_1 = arith.constant 0 : i32
    return %c0_i32, %c0_i32_0 : i32, i32
  }
  func.func @transform_5(%arg0: i32, %arg1: i32) -> (i32, i32) {
    %c0_i32 = arith.constant 0 : i32
    %c0_i32_0 = arith.constant 0 : i32
    %c0_i32_1 = arith.constant 0 : i32
    return %c0_i32, %c0_i32_0 : i32, i32
  }
  func.func @transform_6(%arg0: i32, %arg1: i32) -> (i32, i32) {
    %c0_i32 = arith.constant 0 : i32
    %c0_i32_0 = arith.constant 0 : i32
    %c0_i32_1 = arith.constant 0 : i32
    return %c0_i32, %c0_i32_0 : i32, i32
  }
  func.func @transform_7(%arg0: i32, %arg1: i32) -> (i32, i32) {
    %c0_i32 = arith.constant 0 : i32
    %c0_i32_0 = arith.constant 0 : i32
    return %arg0, %c0_i32 : i32, i32
  }
}

</mosaic_0001>

<llo_original>
// kernel: model_reports_forward.1
$region0: #{model_reports_forward.1}
  #allocation0 [shape = 'u32[]', space=smem, size = 0x4, offset = 0x4, fixed_abs, tag = 'smem constant byte address 0x4 - core index']
  #allocation1 [shape = 'u32[72,128]{1,0:T(1,128)}', space=vmem, size = 0x9000, scoped, tag = 'internal scratch']
  #allocation2 [shape = 'f32[8,64]{1,0:T(8,128)}', space=vmem, size = 0x1000, scoped, tag = 'scratch operand']
  %s0 = inlined_call_operand.vmem [shape: bf16[8,8960], index: 0, kind: input, shape index: {}]
  %s1 = inlined_call_operand.vmem [shape: bf16[8960,64], index: 1, kind: input, shape index: {}]
  %s2 = inlined_call_operand.vmem [shape: f32[1,64], index: 2, kind: input, shape index: {}]
  %s3 = inlined_call_operand.vmem [shape: bf16[64,128], index: 3, kind: input, shape index: {}]
  %s4 = inlined_call_operand.vmem [shape: f32[1,128], index: 4, kind: input, shape index: {}]
  %s5 = inlined_call_operand.vmem [shape: bf16[128,128], index: 5, kind: input, shape index: {}]
  %s6 = inlined_call_operand.vmem [shape: f32[1,128], index: 6, kind: input, shape index: {}]
  %s7 = inlined_call_operand.vmem [shape: f32[8,128], index: 7, kind: output, shape index: {}]
  %s8 = sld [smem:[#allocation0]]
  $region46: #{model_reports_forward.1} parent=0
    _
  %s10 = ssub.s32 1, %s8
  %s11 = scalar_select 0, %s10, %s8
  // Predicated region
  $region2: #{model_reports_forward.1} parent=0 // pred_check
    _
  $region3: #{model_reports_forward.1} parent=0 // pred_check_branch
    %13 = sbr.rel (0) target = $region5
  $region4: #{model_reports_forward.1} parent=0 // pred_region
    _
  $region5: #{model_reports_forward.1} parent=0 // pred_fallthru
    _
  // Predicated region
  $region6: #{model_reports_forward.1} parent=0 // pred_check
    _
  $region7: #{model_reports_forward.1} parent=0 // pred_check_branch
    %15 = sbr.rel (0) target = $region9
  $region8: #{model_reports_forward.1} parent=0 // pred_region
    _
  $region9: #{model_reports_forward.1} parent=0 // pred_fallthru
    _
  // Predicated region
  $region10: #{model_reports_forward.1} parent=0 // pred_check
    _
  $region11: #{model_reports_forward.1} parent=0 // pred_check_branch
    %17 = sbr.rel (0) target = $region13
  $region12: #{model_reports_forward.1} parent=0 // pred_region
    _
  $region13: #{model_reports_forward.1} parent=0 // pred_fallthru
    _
  // Predicated region
  $region14: #{model_reports_forward.1} parent=0 // pred_check
    _
  $region15: #{model_reports_forward.1} parent=0 // pred_check_branch
    %19 = sbr.rel (0) target = $region17
  $region16: #{model_reports_forward.1} parent=0 // pred_region
    _
  $region17: #{model_reports_forward.1} parent=0 // pred_fallthru
    _
  // Predicated region
  $region18: #{model_reports_forward.1} parent=0 // pred_check
    _
  $region19: #{model_reports_forward.1} parent=0 // pred_check_branch
    %21 = sbr.rel (0) target = $region21
  $region20: #{model_reports_forward.1} parent=0 // pred_region
    _
  $region21: #{model_reports_forward.1} parent=0 // pred_fallthru
    _
  // Predicated region
  $region22: #{model_reports_forward.1} parent=0 // pred_check
    _
  $region23: #{model_reports_forward.1} parent=0 // pred_check_branch
    %23 = sbr.rel (0) target = $region25
  $region24: #{model_reports_forward.1} parent=0 // pred_region
    _
  $region25: #{model_reports_forward.1} parent=0 // pred_fallthru
    _
  // Predicated region
  $region26: #{model_reports_forward.1} parent=0 // pred_check
    _
  $region27: #{model_reports_forward.1} parent=0 // pred_check_branch
    %25 = sbr.rel (0) target = $region29
  $region28: #{model_reports_forward.1} parent=0 // pred_region
    _
  $region29: #{model_reports_forward.1} parent=0 // pred_fallthru
    _
  %p27 = scmp.eq.s32.totalorder 0, 0
  // Predicated region
  $region30: #{model_reports_forward.1} parent=0 // pred_check
    %p28 = pneg %p27
  $region31: #{model_reports_forward.1} parent=0 // pred_check_branch
    %30 = sbr.rel (%p28) target = $region33
  $region32: #{model_reports_forward.1} parent=0 // pred_region
    %vm31 = vcmask 523264
    %32 = vst.msk [vmem:[#allocation2] sm:$0xff] %vm31, 0.0
  $region33: #{model_reports_forward.1} parent=0 // pred_fallthru
    _
  %v33 = vld [vmem:[#allocation2] sm:$0xff]
  %v34 = vld [vmem:[%s0] sm:$0xff]
  %v35 = vld [vmem:[%s0 + $0x8] sm:$0xff]
  %v36 = vld [vmem:[%s0 + $0x10] sm:$0xff]
  %v37 = vld [vmem:[%s0 + $0x18] sm:$0xff]
  %v38 = vld [vmem:[%s0 + $0x20] sm:$0xff]
  %v39 = vld [vmem:[%s0 + $0x28] sm:$0xff]
  %v40 = vld [vmem:[%s0 + $0x30] sm:$0xff]
  %v41 = vld [vmem:[%s0 + $0x38] sm:$0xff]
  %v42 = vld [vmem:[%s0 + $0x40] sm:$0xff]
  %v43 = vld [vmem:[%s0 + $0x48] sm:$0xff]
  %v44 = vld [vmem:[%s0 + $0x50] sm:$0xff]
  %v45 = vld [vmem:[%s0 + $0x58] sm:$0xff]
  %v46 = vld [vmem:[%s0 + $0x60] sm:$0xff]
  %v47 = vld [vmem:[%s0 + $0x68] sm:$0xff]
  %v48 = vld [vmem:[%s0 + $0x70] sm:$0xff]
  %v49 = vld [vmem:[%s0 + $0x78] sm:$0xff]
  %v50 = vld [vmem:[%s0 + $0x80] sm:$0xff]
  %v51 = vld [vmem:[%s0 + $0x88] sm:$0xff]
  %v52 = vld [vmem:[%s0 + $0x90] sm:$0xff]
  %v53 = vld [vmem:[%s0 + $0x98] sm:$0xff]
  %v54 = vld [vmem:[%s0 + $0xa0] sm:$0xff]
  %v55 = vld [vmem:[%s0 + $0xa8] sm:$0xff]
  %v56 = vld [vmem:[%s0 + $0xb0] sm:$0xff]
  %v57 = vld [vmem:[%s0 + $0xb8] sm:$0xff]
  %v58 = vld [vmem:[%s0 + $0xc0] sm:$0xff]
  %v59 = vld [vmem:[%s0 + $0xc8] sm:$0xff]
  %v60 = vld [vmem:[%s0 + $0xd0] sm:$0xff]
  %v61 = vld [vmem:[%s0 + $0xd8] sm:$0xff]
  %v62 = vld [vmem:[%s0 + $0xe0] sm:$0xff]
  %v63 = vld [vmem:[%s0 + $0xe8] sm:$0xff]
  %v64 = vld [vmem:[%s0 + $0xf0] sm:$0xff]
  %v65 = vld [vmem:[%s0 + $0xf8] sm:$0xff]
  %v66 = vld [vmem:[%s0 + $0x100] sm:$0xff]
  %v67 = vld [vmem:[%s0 + $0x108] sm:$0xff]
  %v68 = vld [vmem:[%s0 + $0x110] sm:$0xff]
  %v69 = vld [vmem:[%s1] sm:$0xf]
  %v70 = vld [vmem:[%s1 + $0x4] sm:$0xf]
  %v71 = vld [vmem:[%s1 + $0x8] sm:$0xf]
  %v72 = vld [vmem:[%s1 + $0xc] sm:$0xf]
  %v73 = vld [vmem:[%s1 + $0x10] sm:$0xf]
  %v74 = vld [vmem:[%s1 + $0x14] sm:$0xf]
  %v75 = vld [vmem:[%s1 + $0x18] sm:$0xf]
  %v76 = vld [vmem:[%s1 + $0x1c] sm:$0xf]
  %v77 = vld [vmem:[%s1 + $0x20] sm:$0xf]
  %v78 = vld [vmem:[%s1 + $0x24] sm:$0xf]
  %v79 = vld [vmem:[%s1 + $0x28] sm:$0xf]
  %v80 = vld [vmem:[%s1 + $0x2c] sm:$0xf]
  %v81 = vld [vmem:[%s1 + $0x30] sm:$0xf]
  %v82 = vld [vmem:[%s1 + $0x34] sm:$0xf]
  %v83 = vld [vmem:[%s1 + $0x38] sm:$0xf]
  %v84 = vld [vmem:[%s1 + $0x3c] sm:$0xf]
  %v85 = vld [vmem:[%s1 + $0x40] sm:$0xf]
  %v86 = vld [vmem:[%s1 + $0x44] sm:$0xf]
  %v87 = vld [vmem:[%s1 + $0x48] sm:$0xf]
  %v88 = vld [vmem:[%s1 + $0x4c] sm:$0xf]
  %v89 = vld [vmem:[%s1 + $0x50] sm:$0xf]
  %v90 = vld [vmem:[%s1 + $0x54] sm:$0xf]
  %v91 = vld [vmem:[%s1 + $0x58] sm:$0xf]
  %v92 = vld [vmem:[%s1 + $0x5c] sm:$0xf]
  %v93 = vld [vmem:[%s1 + $0x60] sm:$0xf]
  %v94 = vld [vmem:[%s1 + $0x64] sm:$0xf]
  %v95 = vld [vmem:[%s1 + $0x68] sm:$0xf]
  %v96 = vld [vmem:[%s1 + $0x6c] sm:$0xf]
  %v97 = vld [vmem:[%s1 + $0x70] sm:$0xf]
  %v98 = vld [vmem:[%s1 + $0x74] sm:$0xf]
  %v99 = vld [vmem:[%s1 + $0x78] sm:$0xf]
  %v100 = vld [vmem:[%s1 + $0x7c] sm:$0xf]
  %v101 = vld [vmem:[%s1 + $0x80] sm:$0xf]
  %v102 = vld [vmem:[%s1 + $0x84] sm:$0xf]
  %v103 = vld [vmem:[%s1 + $0x88] sm:$0xf]
  %v104 = vld [vmem:[%s1 + $0x8c] sm:$0xf]
  %v105 = vld [vmem:[%s1 + $0x90] sm:$0xf]
  %v106 = vld [vmem:[%s1 + $0x94] sm:$0xf]
  %v107 = vld [vmem:[%s1 + $0x98] sm:$0xf]
  %v108 = vld [vmem:[%s1 + $0x9c] sm:$0xf]
  %v109 = vld [vmem:[%s1 + $0xa0] sm:$0xf]
  %v110 = vld [vmem:[%s1 + $0xa4] sm:$0xf]
  %v111 = vld [vmem:[%s1 + $0xa8] sm:$0xf]
  %v112 = vld [vmem:[%s1 + $0xac] sm:$0xf]
  %v113 = vld [vmem:[%s1 + $0xb0] sm:$0xf]
  %v114 = vld [vmem:[%s1 + $0xb4] sm:$0xf]
  %v115 = vld [vmem:[%s1 + $0xb8] sm:$0xf]
  %v116 = vld [vmem:[%s1 + $0xbc] sm:$0xf]
  %v117 = vld [vmem:[%s1 + $0xc0] sm:$0xf]
  %v118 = vld [vmem:[%s1 + $0xc4] sm:$0xf]
  %v119 = vld [vmem:[%s1 + $0xc8] sm:$0xf]
  %v120 = vld [vmem:[%s1 + $0xcc] sm:$0xf]
  %v121 = vld [vmem:[%s1 + $0xd0] sm:$0xf]
  %v122 = vld [vmem:[%s1 + $0xd4] sm:$0xf]
  %v123 = vld [vmem:[%s1 + $0xd8] sm:$0xf]
  %v124 = vld [vmem:[%s1 + $0xdc] sm:$0xf]
  %v125 = vld [vmem:[%s1 + $0xe0] sm:$0xf]
  %v126 = vld [vmem:[%s1 + $0xe4] sm:$0xf]
  %v127 = vld [vmem:[%s1 + $0xe8] sm:$0xf]
  %v128 = vld [vmem:[%s1 + $0xec] sm:$0xf]
  %v129 = vld [vmem:[%s1 + $0xf0] sm:$0xf]
  %v130 = vld [vmem:[%s1 + $0xf4] sm:$0xf]
  %v131 = vld [vmem:[%s1 + $0xf8] sm:$0xf]
  %v132 = vld [vmem:[%s1 + $0xfc] sm:$0xf]
  %v133 = vld [vmem:[%s1 + $0x100] sm:$0xf]
  %v134 = vld [vmem:[%s1 + $0x104] sm:$0xf]
  %v135 = vld [vmem:[%s1 + $0x108] sm:$0xf]
  %v136 = vld [vmem:[%s1 + $0x10c] sm:$0xf]
  %v137 = vld [vmem:[%s1 + $0x110] sm:$0xf]
  %v138 = vld [vmem:[%s1 + $0x114] sm:$0xf]
  %v139 = vld [vmem:[%s1 + $0x118] sm:$0xf]
  %v140 = vld [vmem:[%s1 + $0x11c] sm:$0xf]
  %v141 = vld [vmem:[%s1 + $0x120] sm:$0xf]
  %v142 = vld [vmem:[%s1 + $0x124] sm:$0xf]
  %v143 = vld [vmem:[%s1 + $0x128] sm:$0xf]
  %v144 = vld [vmem:[%s1 + $0x12c] sm:$0xf]
  %v145 = vld [vmem:[%s1 + $0x130] sm:$0xf]
  %v146 = vld [vmem:[%s1 + $0x134] sm:$0xf]
  %v147 = vld [vmem:[%s1 + $0x138] sm:$0xf]
  %v148 = vld [vmem:[%s1 + $0x13c] sm:$0xf]
  %v149 = vld [vmem:[%s1 + $0x140] sm:$0xf]
  %v150 = vld [vmem:[%s1 + $0x144] sm:$0xf]
  %v151 = vld [vmem:[%s1 + $0x148] sm:$0xf]
  %v152 = vld [vmem:[%s1 + $0x14c] sm:$0xf]
  %v153 = vld [vmem:[%s1 + $0x150] sm:$0xf]
  %v154 = vld [vmem:[%s1 + $0x154] sm:$0xf]
  %v155 = vld [vmem:[%s1 + $0x158] sm:$0xf]
  %v156 = vld [vmem:[%s1 + $0x15c] sm:$0xf]
  %v157 = vld [vmem:[%s1 + $0x160] sm:$0xf]
  %v158 = vld [vmem:[%s1 + $0x164] sm:$0xf]
  %v159 = vld [vmem:[%s1 + $0x168] sm:$0xf]
  %v160 = vld [vmem:[%s1 + $0x16c] sm:$0xf]
  %v161 = vld [vmem:[%s1 + $0x170] sm:$0xf]
  %v162 = vld [vmem:[%s1 + $0x174] sm:$0xf]
  %v163 = vld [vmem:[%s1 + $0x178] sm:$0xf]
  %v164 = vld [vmem:[%s1 + $0x17c] sm:$0xf]
  %v165 = vld [vmem:[%s1 + $0x180] sm:$0xf]
  %v166 = vld [vmem:[%s1 + $0x184] sm:$0xf]
  %v167 = vld [vmem:[%s1 + $0x188] sm:$0xf]
  %v168 = vld [vmem:[%s1 + $0x18c] sm:$0xf]
  %v169 = vld [vmem:[%s1 + $0x190] sm:$0xf]
  %v170 = vld [vmem:[%s1 + $0x194] sm:$0xf]
  %v171 = vld [vmem:[%s1 + $0x198] sm:$0xf]
  %v172 = vld [vmem:[%s1 + $0x19c] sm:$0xf]
  %v173 = vld [vmem:[%s1 + $0x1a0] sm:$0xf]
  %v174 = vld [vmem:[%s1 + $0x1a4] sm:$0xf]
  %v175 = vld [vmem:[%s1 + $0x1a8] sm:$0xf]
  %v176 = vld [vmem:[%s1 + $0x1ac] sm:$0xf]
  %v177 = vld [vmem:[%s1 + $0x1b0] sm:$0xf]
  %v178 = vld [vmem:[%s1 + $0x1b4] sm:$0xf]
  %v179 = vld [vmem:[%s1 + $0x1b8] sm:$0xf]
  %v180 = vld [vmem:[%s1 + $0x1bc] sm:$0xf]
  %v181 = vld [vmem:[%s1 + $0x1c0] sm:$0xf]
  %v182 = vld [vmem:[%s1 + $0x1c4] sm:$0xf]
  %v183 = vld [vmem:[%s1 + $0x1c8] sm:$0xf]
  %v184 = vld [vmem:[%s1 + $0x1cc] sm:$0xf]
  %v185 = vld [vmem:[%s1 + $0x1d0] sm:$0xf]
  %v186 = vld [vmem:[%s1 + $0x1d4] sm:$0xf]
  %v187 = vld [vmem:[%s1 + $0x1d8] sm:$0xf]
  %v188 = vld [vmem:[%s1 + $0x1dc] sm:$0xf]
  %v189 = vld [vmem:[%s1 + $0x1e0] sm:$0xf]
  %v190 = vld [vmem:[%s1 + $0x1e4] sm:$0xf]
  %v191 = vld [vmem:[%s1 + $0x1e8] sm:$0xf]
  %v192 = vld [vmem:[%s1 + $0x1ec] sm:$0xf]
  %v193 = vld [vmem:[%s1 + $0x1f0] sm:$0xf]
  %v194 = vld [vmem:[%s1 + $0x1f4] sm:$0xf]
  %v195 = vld [vmem:[%s1 + $0x1f8] sm:$0xf]
  %v196 = vld [vmem:[%s1 + $0x1fc] sm:$0xf]
  %v197 = vld [vmem:[%s1 + $0x200] sm:$0xf]
  %v198 = vld [vmem:[%s1 + $0x204] sm:$0xf]
  %v199 = vld [vmem:[%s1 + $0x208] sm:$0xf]
  %v200 = vld [vmem:[%s1 + $0x20c] sm:$0xf]
  %v201 = vld [vmem:[%s1 + $0x210] sm:$0xf]
  %v202 = vld [vmem:[%s1 + $0x214] sm:$0xf]
  %v203 = vld [vmem:[%s1 + $0x218] sm:$0xf]
  %v204 = vld [vmem:[%s1 + $0x21c] sm:$0xf]
  %v205 = vld [vmem:[%s1 + $0x220] sm:$0xf]
  %v206 = vld [vmem:[%s1 + $0x224] sm:$0xf]
  %v207 = vld [vmem:[%s1 + $0x228] sm:$0xf]
  %v208 = vld [vmem:[%s1 + $0x22c] sm:$0xf]
  %v209 = vld [vmem:[%s1 + $0x230] sm:$0xf]
  %v210 = vld [vmem:[%s1 + $0x234] sm:$0xf]
  %v211 = vld [vmem:[%s1 + $0x238] sm:$0xf]
  %v212 = vld [vmem:[%s1 + $0x23c] sm:$0xf]
  %v213 = vld [vmem:[%s1 + $0x240] sm:$0xf]
  %v214 = vld [vmem:[%s1 + $0x244] sm:$0xf]
  %v215 = vld [vmem:[%s1 + $0x248] sm:$0xf]
  %v216 = vld [vmem:[%s1 + $0x24c] sm:$0xf]
  %v217 = vld [vmem:[%s1 + $0x250] sm:$0xf]
  %v218 = vld [vmem:[%s1 + $0x254] sm:$0xf]
  %v219 = vld [vmem:[%s1 + $0x258] sm:$0xf]
  %v220 = vld [vmem:[%s1 + $0x25c] sm:$0xf]
  %v221 = vld [vmem:[%s1 + $0x260] sm:$0xf]
  %v222 = vld [vmem:[%s1 + $0x264] sm:$0xf]
  %v223 = vld [vmem:[%s1 + $0x268] sm:$0xf]
  %v224 = vld [vmem:[%s1 + $0x26c] sm:$0xf]
  %v225 = vld [vmem:[%s1 + $0x270] sm:$0xf]
  %v226 = vld [vmem:[%s1 + $0x274] sm:$0xf]
  %v227 = vld [vmem:[%s1 + $0x278] sm:$0xf]
  %v228 = vld [vmem:[%s1 + $0x27c] sm:$0xf]
  %v229 = vld [vmem:[%s1 + $0x280] sm:$0xf]
  %v230 = vld [vmem:[%s1 + $0x284] sm:$0xf]
  %v231 = vld [vmem:[%s1 + $0x288] sm:$0xf]
  %v232 = vld [vmem:[%s1 + $0x28c] sm:$0xf]
  %v233 = vld [vmem:[%s1 + $0x290] sm:$0xf]
  %v234 = vld [vmem:[%s1 + $0x294] sm:$0xf]
  %v235 = vld [vmem:[%s1 + $0x298] sm:$0xf]
  %v236 = vld [vmem:[%s1 + $0x29c] sm:$0xf]
  %v237 = vld [vmem:[%s1 + $0x2a0] sm:$0xf]
  %v238 = vld [vmem:[%s1 + $0x2a4] sm:$0xf]
  %v239 = vld [vmem:[%s1 + $0x2a8] sm:$0xf]
  %v240 = vld [vmem:[%s1 + $0x2ac] sm:$0xf]
  %v241 = vld [vmem:[%s1 + $0x2b0] sm:$0xf]
  %v242 = vld [vmem:[%s1 + $0x2b4] sm:$0xf]
  %v243 = vld [vmem:[%s1 + $0x2b8] sm:$0xf]
  %v244 = vld [vmem:[%s1 + $0x2bc] sm:$0xf]
  %v245 = vld [vmem:[%s1 + $0x2c0] sm:$0xf]
  %v246 = vld [vmem:[%s1 + $0x2c4] sm:$0xf]
  %v247 = vld [vmem:[%s1 + $0x2c8] sm:$0xf]
  %v248 = vld [vmem:[%s1 + $0x2cc] sm:$0xf]
  %v249 = vld [vmem:[%s1 + $0x2d0] sm:$0xf]
  %v250 = vld [vmem:[%s1 + $0x2d4] sm:$0xf]
  %v251 = vld [vmem:[%s1 + $0x2d8] sm:$0xf]
  %v252 = vld [vmem:[%s1 + $0x2dc] sm:$0xf]
  %v253 = vld [vmem:[%s1 + $0x2e0] sm:$0xf]
  %v254 = vld [vmem:[%s1 + $0x2e4] sm:$0xf]
  %v255 = vld [vmem:[%s1 + $0x2e8] sm:$0xf]
  %v256 = vld [vmem:[%s1 + $0x2ec] sm:$0xf]
  %v257 = vld [vmem:[%s1 + $0x2f0] sm:$0xf]
  %v258 = vld [vmem:[%s1 + $0x2f4] sm:$0xf]
  %v259 = vld [vmem:[%s1 + $0x2f8] sm:$0xf]
  %v260 = vld [vmem:[%s1 + $0x2fc] sm:$0xf]
  %v261 = vld [vmem:[%s1 + $0x300] sm:$0xf]
  %v262 = vld [vmem:[%s1 + $0x304] sm:$0xf]
  %v263 = vld [vmem:[%s1 + $0x308] sm:$0xf]
  %v264 = vld [vmem:[%s1 + $0x30c] sm:$0xf]
  %v265 = vld [vmem:[%s1 + $0x310] sm:$0xf]
  %v266 = vld [vmem:[%s1 + $0x314] sm:$0xf]
  %v267 = vld [vmem:[%s1 + $0x318] sm:$0xf]
  %v268 = vld [vmem:[%s1 + $0x31c] sm:$0xf]
  %v269 = vld [vmem:[%s1 + $0x320] sm:$0xf]
  %v270 = vld [vmem:[%s1 + $0x324] sm:$0xf]
  %v271 = vld [vmem:[%s1 + $0x328] sm:$0xf]
  %v272 = vld [vmem:[%s1 + $0x32c] sm:$0xf]
  %v273 = vld [vmem:[%s1 + $0x330] sm:$0xf]
  %v274 = vld [vmem:[%s1 + $0x334] sm:$0xf]
  %v275 = vld [vmem:[%s1 + $0x338] sm:$0xf]
  %v276 = vld [vmem:[%s1 + $0x33c] sm:$0xf]
  %v277 = vld [vmem:[%s1 + $0x340] sm:$0xf]
  %v278 = vld [vmem:[%s1 + $0x344] sm:$0xf]
  %v279 = vld [vmem:[%s1 + $0x348] sm:$0xf]
  %v280 = vld [vmem:[%s1 + $0x34c] sm:$0xf]
  %v281 = vld [vmem:[%s1 + $0x350] sm:$0xf]
  %v282 = vld [vmem:[%s1 + $0x354] sm:$0xf]
  %v283 = vld [vmem:[%s1 + $0x358] sm:$0xf]
  %v284 = vld [vmem:[%s1 + $0x35c] sm:$0xf]
  %v285 = vld [vmem:[%s1 + $0x360] sm:$0xf]
  %v286 = vld [vmem:[%s1 + $0x364] sm:$0xf]
  %v287 = vld [vmem:[%s1 + $0x368] sm:$0xf]
  %v288 = vld [vmem:[%s1 + $0x36c] sm:$0xf]
  %v289 = vld [vmem:[%s1 + $0x370] sm:$0xf]
  %v290 = vld [vmem:[%s1 + $0x374] sm:$0xf]
  %v291 = vld [vmem:[%s1 + $0x378] sm:$0xf]
  %v292 = vld [vmem:[%s1 + $0x37c] sm:$0xf]
  %v293 = vld [vmem:[%s1 + $0x380] sm:$0xf]
  %v294 = vld [vmem:[%s1 + $0x384] sm:$0xf]
  %v295 = vld [vmem:[%s1 + $0x388] sm:$0xf]
  %v296 = vld [vmem:[%s1 + $0x38c] sm:$0xf]
  %v297 = vld [vmem:[%s1 + $0x390] sm:$0xf]
  %v298 = vld [vmem:[%s1 + $0x394] sm:$0xf]
  %v299 = vld [vmem:[%s1 + $0x398] sm:$0xf]
  %v300 = vld [vmem:[%s1 + $0x39c] sm:$0xf]
  %v301 = vld [vmem:[%s1 + $0x3a0] sm:$0xf]
  %v302 = vld [vmem:[%s1 + $0x3a4] sm:$0xf]
  %v303 = vld [vmem:[%s1 + $0x3a8] sm:$0xf]
  %v304 = vld [vmem:[%s1 + $0x3ac] sm:$0xf]
  %v305 = vld [vmem:[%s1 + $0x3b0] sm:$0xf]
  %v306 = vld [vmem:[%s1 + $0x3b4] sm:$0xf]
  %v307 = vld [vmem:[%s1 + $0x3b8] sm:$0xf]
  %v308 = vld [vmem:[%s1 + $0x3bc] sm:$0xf]
  %v309 = vld [vmem:[%s1 + $0x3c0] sm:$0xf]
  %v310 = vld [vmem:[%s1 + $0x3c4] sm:$0xf]
  %v311 = vld [vmem:[%s1 + $0x3c8] sm:$0xf]
  %v312 = vld [vmem:[%s1 + $0x3cc] sm:$0xf]
  %v313 = vld [vmem:[%s1 + $0x3d0] sm:$0xf]
  %v314 = vld [vmem:[%s1 + $0x3d4] sm:$0xf]
  %v315 = vld [vmem:[%s1 + $0x3d8] sm:$0xf]
  %v316 = vld [vmem:[%s1 + $0x3dc] sm:$0xf]
  %v317 = vld [vmem:[%s1 + $0x3e0] sm:$0xf]
  %v318 = vld [vmem:[%s1 + $0x3e4] sm:$0xf]
  %v319 = vld [vmem:[%s1 + $0x3e8] sm:$0xf]
  %v320 = vld [vmem:[%s1 + $0x3ec] sm:$0xf]
  %v321 = vld [vmem:[%s1 + $0x3f0] sm:$0xf]
  %v322 = vld [vmem:[%s1 + $0x3f4] sm:$0xf]
  %v323 = vld [vmem:[%s1 + $0x3f8] sm:$0xf]
  %v324 = vld [vmem:[%s1 + $0x3fc] sm:$0xf]
  %v325 = vld [vmem:[%s1 + $0x400] sm:$0xf]
  %v326 = vld [vmem:[%s1 + $0x404] sm:$0xf]
  %v327 = vld [vmem:[%s1 + $0x408] sm:$0xf]
  %v328 = vld [vmem:[%s1 + $0x40c] sm:$0xf]
  %v329 = vld [vmem:[%s1 + $0x410] sm:$0xf]
  %v330 = vld [vmem:[%s1 + $0x414] sm:$0xf]
  %v331 = vld [vmem:[%s1 + $0x418] sm:$0xf]
  %v332 = vld [vmem:[%s1 + $0x41c] sm:$0xf]
  %v333 = vld [vmem:[%s1 + $0x420] sm:$0xf]
  %v334 = vld [vmem:[%s1 + $0x424] sm:$0xf]
  %v335 = vld [vmem:[%s1 + $0x428] sm:$0xf]
  %v336 = vld [vmem:[%s1 + $0x42c] sm:$0xf]
  %v337 = vld [vmem:[%s1 + $0x430] sm:$0xf]
  %v338 = vld [vmem:[%s1 + $0x434] sm:$0xf]
  %v339 = vld [vmem:[%s1 + $0x438] sm:$0xf]
  %v340 = vld [vmem:[%s1 + $0x43c] sm:$0xf]
  %v341 = vld [vmem:[%s1 + $0x440] sm:$0xf]
  %v342 = vld [vmem:[%s1 + $0x444] sm:$0xf]
  %v343 = vld [vmem:[%s1 + $0x448] sm:$0xf]
  %v344 = vld [vmem:[%s1 + $0x44c] sm:$0xf]
  %v345 = vld [vmem:[%s1 + $0x450] sm:$0xf]
  %v346 = vld [vmem:[%s1 + $0x454] sm:$0xf]
  %v347 = vld [vmem:[%s1 + $0x458] sm:$0xf]
  %v348 = vld [vmem:[%s1 + $0x45c] sm:$0xf]
  %v349 = vld [vmem:[%s1 + $0x460] sm:$0xf]
  %v350 = vld [vmem:[%s1 + $0x464] sm:$0xf]
  %v351 = vld [vmem:[%s1 + $0x468] sm:$0xf]
  %v352 = vld [vmem:[%s1 + $0x46c] sm:$0xf]
  %v353 = vld [vmem:[%s1 + $0x470] sm:$0xf]
  %v354 = vld [vmem:[%s1 + $0x474] sm:$0xf]
  %v355 = vld [vmem:[%s1 + $0x478] sm:$0xf]
  %v356 = vld [vmem:[%s1 + $0x47c] sm:$0xf]
  %v357 = vld [vmem:[%s1 + $0x480] sm:$0xf]
  %v358 = vld [vmem:[%s1 + $0x484] sm:$0xf]
  %v359 = vld [vmem:[%s1 + $0x488] sm:$0xf]
  %v360 = vld [vmem:[%s1 + $0x48c] sm:$0xf]
  %v361 = vld [vmem:[%s1 + $0x490] sm:$0xf]
  %v362 = vld [vmem:[%s1 + $0x494] sm:$0xf]
  %v363 = vld [vmem:[%s1 + $0x498] sm:$0xf]
  %v364 = vld [vmem:[%s1 + $0x49c] sm:$0xf]
  %v365 = vld [vmem:[%s1 + $0x4a0] sm:$0xf]
  %v366 = vld [vmem:[%s1 + $0x4a4] sm:$0xf]
  %v367 = vld [vmem:[%s1 + $0x4a8] sm:$0xf]
  %v368 = vld [vmem:[%s1 + $0x4ac] sm:$0xf]
  %v369 = vld [vmem:[%s1 + $0x4b0] sm:$0xf]
  %v370 = vld [vmem:[%s1 + $0x4b4] sm:$0xf]
  %v371 = vld [vmem:[%s1 + $0x4b8] sm:$0xf]
  %v372 = vld [vmem:[%s1 + $0x4bc] sm:$0xf]
  %v373 = vld [vmem:[%s1 + $0x4c0] sm:$0xf]
  %v374 = vld [vmem:[%s1 + $0x4c4] sm:$0xf]
  %v375 = vld [vmem:[%s1 + $0x4c8] sm:$0xf]
  %v376 = vld [vmem:[%s1 + $0x4cc] sm:$0xf]
  %v377 = vld [vmem:[%s1 + $0x4d0] sm:$0xf]
  %v378 = vld [vmem:[%s1 + $0x4d4] sm:$0xf]
  %v379 = vld [vmem:[%s1 + $0x4d8] sm:$0xf]
  %v380 = vld [vmem:[%s1 + $0x4dc] sm:$0xf]
  %v381 = vld [vmem:[%s1 + $0x4e0] sm:$0xf]
  %v382 = vld [vmem:[%s1 + $0x4e4] sm:$0xf]
  %v383 = vld [vmem:[%s1 + $0x4e8] sm:$0xf]
  %v384 = vld [vmem:[%s1 + $0x4ec] sm:$0xf]
  %v385 = vld [vmem:[%s1 + $0x4f0] sm:$0xf]
  %v386 = vld [vmem:[%s1 + $0x4f4] sm:$0xf]
  %v387 = vld [vmem:[%s1 + $0x4f8] sm:$0xf]
  %v388 = vld [vmem:[%s1 + $0x4fc] sm:$0xf]
  %v389 = vld [vmem:[%s1 + $0x500] sm:$0xf]
  %v390 = vld [vmem:[%s1 + $0x504] sm:$0xf]
  %v391 = vld [vmem:[%s1 + $0x508] sm:$0xf]
  %v392 = vld [vmem:[%s1 + $0x50c] sm:$0xf]
  %v393 = vld [vmem:[%s1 + $0x510] sm:$0xf]
  %v394 = vld [vmem:[%s1 + $0x514] sm:$0xf]
  %v395 = vld [vmem:[%s1 + $0x518] sm:$0xf]
  %v396 = vld [vmem:[%s1 + $0x51c] sm:$0xf]
  %v397 = vld [vmem:[%s1 + $0x520] sm:$0xf]
  %v398 = vld [vmem:[%s1 + $0x524] sm:$0xf]
  %v399 = vld [vmem:[%s1 + $0x528] sm:$0xf]
  %v400 = vld [vmem:[%s1 + $0x52c] sm:$0xf]
  %v401 = vld [vmem:[%s1 + $0x530] sm:$0xf]
  %v402 = vld [vmem:[%s1 + $0x534] sm:$0xf]
  %v403 = vld [vmem:[%s1 + $0x538] sm:$0xf]
  %v404 = vld [vmem:[%s1 + $0x53c] sm:$0xf]
  %v405 = vld [vmem:[%s1 + $0x540] sm:$0xf]
  %v406 = vld [vmem:[%s1 + $0x544] sm:$0xf]
  %v407 = vld [vmem:[%s1 + $0x548] sm:$0xf]
  %v408 = vld [vmem:[%s1 + $0x54c] sm:$0xf]
  %v409 = vld [vmem:[%s1 + $0x550] sm:$0xf]
  %v410 = vld [vmem:[%s1 + $0x554] sm:$0xf]
  %v411 = vld [vmem:[%s1 + $0x558] sm:$0xf]
  %v412 = vld [vmem:[%s1 + $0x55c] sm:$0xf]
  %v413 = vld [vmem:[%s1 + $0x560] sm:$0xf]
  %v414 = vld [vmem:[%s1 + $0x564] sm:$0xf]
  %v415 = vld [vmem:[%s1 + $0x568] sm:$0xf]
  %v416 = vld [vmem:[%s1 + $0x56c] sm:$0xf]
  %v417 = vld [vmem:[%s1 + $0x570] sm:$0xf]
  %v418 = vld [vmem:[%s1 + $0x574] sm:$0xf]
  %v419 = vld [vmem:[%s1 + $0x578] sm:$0xf]
  %v420 = vld [vmem:[%s1 + $0x57c] sm:$0xf]
  %v421 = vld [vmem:[%s1 + $0x580] sm:$0xf]
  %v422 = vld [vmem:[%s1 + $0x584] sm:$0xf]
  %v423 = vld [vmem:[%s1 + $0x588] sm:$0xf]
  %v424 = vld [vmem:[%s1 + $0x58c] sm:$0xf]
  %v425 = vld [vmem:[%s1 + $0x590] sm:$0xf]
  %v426 = vld [vmem:[%s1 + $0x594] sm:$0xf]
  %v427 = vld [vmem:[%s1 + $0x598] sm:$0xf]
  %v428 = vld [vmem:[%s1 + $0x59c] sm:$0xf]
  %v429 = vld [vmem:[%s1 + $0x5a0] sm:$0xf]
  %v430 = vld [vmem:[%s1 + $0x5a4] sm:$0xf]
  %v431 = vld [vmem:[%s1 + $0x5a8] sm:$0xf]
  %v432 = vld [vmem:[%s1 + $0x5ac] sm:$0xf]
  %v433 = vld [vmem:[%s1 + $0x5b0] sm:$0xf]
  %v434 = vld [vmem:[%s1 + $0x5b4] sm:$0xf]
  %v435 = vld [vmem:[%s1 + $0x5b8] sm:$0xf]
  %v436 = vld [vmem:[%s1 + $0x5bc] sm:$0xf]
  %v437 = vld [vmem:[%s1 + $0x5c0] sm:$0xf]
  %v438 = vld [vmem:[%s1 + $0x5c4] sm:$0xf]
  %v439 = vld [vmem:[%s1 + $0x5c8] sm:$0xf]
  %v440 = vld [vmem:[%s1 + $0x5cc] sm:$0xf]
  %v441 = vld [vmem:[%s1 + $0x5d0] sm:$0xf]
  %v442 = vld [vmem:[%s1 + $0x5d4] sm:$0xf]
  %v443 = vld [vmem:[%s1 + $0x5d8] sm:$0xf]
  %v444 = vld [vmem:[%s1 + $0x5dc] sm:$0xf]
  %v445 = vld [vmem:[%s1 + $0x5e0] sm:$0xf]
  %v446 = vld [vmem:[%s1 + $0x5e4] sm:$0xf]
  %v447 = vld [vmem:[%s1 + $0x5e8] sm:$0xf]
  %v448 = vld [vmem:[%s1 + $0x5ec] sm:$0xf]
  %v449 = vld [vmem:[%s1 + $0x5f0] sm:$0xf]
  %v450 = vld [vmem:[%s1 + $0x5f4] sm:$0xf]
  %v451 = vld [vmem:[%s1 + $0x5f8] sm:$0xf]
  %v452 = vld [vmem:[%s1 + $0x5fc] sm:$0xf]
  %v453 = vld [vmem:[%s1 + $0x600] sm:$0xf]
  %v454 = vld [vmem:[%s1 + $0x604] sm:$0xf]
  %v455 = vld [vmem:[%s1 + $0x608] sm:$0xf]
  %v456 = vld [vmem:[%s1 + $0x60c] sm:$0xf]
  %v457 = vld [vmem:[%s1 + $0x610] sm:$0xf]
  %v458 = vld [vmem:[%s1 + $0x614] sm:$0xf]
  %v459 = vld [vmem:[%s1 + $0x618] sm:$0xf]
  %v460 = vld [vmem:[%s1 + $0x61c] sm:$0xf]
  %v461 = vld [vmem:[%s1 + $0x620] sm:$0xf]
  %v462 = vld [vmem:[%s1 + $0x624] sm:$0xf]
  %v463 = vld [vmem:[%s1 + $0x628] sm:$0xf]
  %v464 = vld [vmem:[%s1 + $0x62c] sm:$0xf]
  %v465 = vld [vmem:[%s1 + $0x630] sm:$0xf]
  %v466 = vld [vmem:[%s1 + $0x634] sm:$0xf]
  %v467 = vld [vmem:[%s1 + $0x638] sm:$0xf]
  %v468 = vld [vmem:[%s1 + $0x63c] sm:$0xf]
  %v469 = vld [vmem:[%s1 + $0x640] sm:$0xf]
  %v470 = vld [vmem:[%s1 + $0x644] sm:$0xf]
  %v471 = vld [vmem:[%s1 + $0x648] sm:$0xf]
  %v472 = vld [vmem:[%s1 + $0x64c] sm:$0xf]
  %v473 = vld [vmem:[%s1 + $0x650] sm:$0xf]
  %v474 = vld [vmem:[%s1 + $0x654] sm:$0xf]
  %v475 = vld [vmem:[%s1 + $0x658] sm:$0xf]
  %v476 = vld [vmem:[%s1 + $0x65c] sm:$0xf]
  %v477 = vld [vmem:[%s1 + $0x660] sm:$0xf]
  %v478 = vld [vmem:[%s1 + $0x664] sm:$0xf]
  %v479 = vld [vmem:[%s1 + $0x668] sm:$0xf]
  %v480 = vld [vmem:[%s1 + $0x66c] sm:$0xf]
  %v481 = vld [vmem:[%s1 + $0x670] sm:$0xf]
  %v482 = vld [vmem:[%s1 + $0x674] sm:$0xf]
  %v483 = vld [vmem:[%s1 + $0x678] sm:$0xf]
  %v484 = vld [vmem:[%s1 + $0x67c] sm:$0xf]
  %v485 = vld [vmem:[%s1 + $0x680] sm:$0xf]
  %v486 = vld [vmem:[%s1 + $0x684] sm:$0xf]
  %v487 = vld [vmem:[%s1 + $0x688] sm:$0xf]
  %v488 = vld [vmem:[%s1 + $0x68c] sm:$0xf]
  %v489 = vld [vmem:[%s1 + $0x690] sm:$0xf]
  %v490 = vld [vmem:[%s1 + $0x694] sm:$0xf]
  %v491 = vld [vmem:[%s1 + $0x698] sm:$0xf]
  %v492 = vld [vmem:[%s1 + $0x69c] sm:$0xf]
  %v493 = vld [vmem:[%s1 + $0x6a0] sm:$0xf]
  %v494 = vld [vmem:[%s1 + $0x6a4] sm:$0xf]
  %v495 = vld [vmem:[%s1 + $0x6a8] sm:$0xf]
  %v496 = vld [vmem:[%s1 + $0x6ac] sm:$0xf]
  %v497 = vld [vmem:[%s1 + $0x6b0] sm:$0xf]
  %v498 = vld [vmem:[%s1 + $0x6b4] sm:$0xf]
  %v499 = vld [vmem:[%s1 + $0x6b8] sm:$0xf]
  %v500 = vld [vmem:[%s1 + $0x6bc] sm:$0xf]
  %v501 = vld [vmem:[%s1 + $0x6c0] sm:$0xf]
  %v502 = vld [vmem:[%s1 + $0x6c4] sm:$0xf]
  %v503 = vld [vmem:[%s1 + $0x6c8] sm:$0xf]
  %v504 = vld [vmem:[%s1 + $0x6cc] sm:$0xf]
  %v505 = vld [vmem:[%s1 + $0x6d0] sm:$0xf]
  %v506 = vld [vmem:[%s1 + $0x6d4] sm:$0xf]
  %v507 = vld [vmem:[%s1 + $0x6d8] sm:$0xf]
  %v508 = vld [vmem:[%s1 + $0x6dc] sm:$0xf]
  %v509 = vld [vmem:[%s1 + $0x6e0] sm:$0xf]
  %v510 = vld [vmem:[%s1 + $0x6e4] sm:$0xf]
  %v511 = vld [vmem:[%s1 + $0x6e8] sm:$0xf]
  %v512 = vld [vmem:[%s1 + $0x6ec] sm:$0xf]
  %v513 = vld [vmem:[%s1 + $0x6f0] sm:$0xf]
  %v514 = vld [vmem:[%s1 + $0x6f4] sm:$0xf]
  %v515 = vld [vmem:[%s1 + $0x6f8] sm:$0xf]
  %v516 = vld [vmem:[%s1 + $0x6fc] sm:$0xf]
  %v517 = vld [vmem:[%s1 + $0x700] sm:$0xf]
  %v518 = vld [vmem:[%s1 + $0x704] sm:$0xf]
  %v519 = vld [vmem:[%s1 + $0x708] sm:$0xf]
  %v520 = vld [vmem:[%s1 + $0x70c] sm:$0xf]
  %v521 = vld [vmem:[%s1 + $0x710] sm:$0xf]
  %v522 = vld [vmem:[%s1 + $0x714] sm:$0xf]
  %v523 = vld [vmem:[%s1 + $0x718] sm:$0xf]
  %v524 = vld [vmem:[%s1 + $0x71c] sm:$0xf]
  %v525 = vld [vmem:[%s1 + $0x720] sm:$0xf]
  %v526 = vld [vmem:[%s1 + $0x724] sm:$0xf]
  %v527 = vld [vmem:[%s1 + $0x728] sm:$0xf]
  %v528 = vld [vmem:[%s1 + $0x72c] sm:$0xf]
  %v529 = vld [vmem:[%s1 + $0x730] sm:$0xf]
  %v530 = vld [vmem:[%s1 + $0x734] sm:$0xf]
  %v531 = vld [vmem:[%s1 + $0x738] sm:$0xf]
  %v532 = vld [vmem:[%s1 + $0x73c] sm:$0xf]
  %v533 = vld [vmem:[%s1 + $0x740] sm:$0xf]
  %v534 = vld [vmem:[%s1 + $0x744] sm:$0xf]
  %v535 = vld [vmem:[%s1 + $0x748] sm:$0xf]
  %v536 = vld [vmem:[%s1 + $0x74c] sm:$0xf]
  %v537 = vld [vmem:[%s1 + $0x750] sm:$0xf]
  %v538 = vld [vmem:[%s1 + $0x754] sm:$0xf]
  %v539 = vld [vmem:[%s1 + $0x758] sm:$0xf]
  %v540 = vld [vmem:[%s1 + $0x75c] sm:$0xf]
  %v541 = vld [vmem:[%s1 + $0x760] sm:$0xf]
  %v542 = vld [vmem:[%s1 + $0x764] sm:$0xf]
  %v543 = vld [vmem:[%s1 + $0x768] sm:$0xf]
  %v544 = vld [vmem:[%s1 + $0x76c] sm:$0xf]
  %v545 = vld [vmem:[%s1 + $0x770] sm:$0xf]
  %v546 = vld [vmem:[%s1 + $0x774] sm:$0xf]
  %v547 = vld [vmem:[%s1 + $0x778] sm:$0xf]
  %v548 = vld [vmem:[%s1 + $0x77c] sm:$0xf]
  %v549 = vld [vmem:[%s1 + $0x780] sm:$0xf]
  %v550 = vld [vmem:[%s1 + $0x784] sm:$0xf]
  %v551 = vld [vmem:[%s1 + $0x788] sm:$0xf]
  %v552 = vld [vmem:[%s1 + $0x78c] sm:$0xf]
  %v553 = vld [vmem:[%s1 + $0x790] sm:$0xf]
  %v554 = vld [vmem:[%s1 + $0x794] sm:$0xf]
  %v555 = vld [vmem:[%s1 + $0x798] sm:$0xf]
  %v556 = vld [vmem:[%s1 + $0x79c] sm:$0xf]
  %v557 = vld [vmem:[%s1 + $0x7a0] sm:$0xf]
  %v558 = vld [vmem:[%s1 + $0x7a4] sm:$0xf]
  %v559 = vld [vmem:[%s1 + $0x7a8] sm:$0xf]
  %v560 = vld [vmem:[%s1 + $0x7ac] sm:$0xf]
  %v561 = vld [vmem:[%s1 + $0x7b0] sm:$0xf]
  %v562 = vld [vmem:[%s1 + $0x7b4] sm:$0xf]
  %v563 = vld [vmem:[%s1 + $0x7b8] sm:$0xf]
  %v564 = vld [vmem:[%s1 + $0x7bc] sm:$0xf]
  %v565 = vld [vmem:[%s1 + $0x7c0] sm:$0xf]
  %v566 = vld [vmem:[%s1 + $0x7c4] sm:$0xf]
  %v567 = vld [vmem:[%s1 + $0x7c8] sm:$0xf]
  %v568 = vld [vmem:[%s1 + $0x7cc] sm:$0xf]
  %v569 = vld [vmem:[%s1 + $0x7d0] sm:$0xf]
  %v570 = vld [vmem:[%s1 + $0x7d4] sm:$0xf]
  %v571 = vld [vmem:[%s1 + $0x7d8] sm:$0xf]
  %v572 = vld [vmem:[%s1 + $0x7dc] sm:$0xf]
  %v573 = vld [vmem:[%s1 + $0x7e0] sm:$0xf]
  %v574 = vld [vmem:[%s1 + $0x7e4] sm:$0xf]
  %v575 = vld [vmem:[%s1 + $0x7e8] sm:$0xf]
  %v576 = vld [vmem:[%s1 + $0x7ec] sm:$0xf]
  %v577 = vld [vmem:[%s1 + $0x7f0] sm:$0xf]
  %v578 = vld [vmem:[%s1 + $0x7f4] sm:$0xf]
  %v579 = vld [vmem:[%s1 + $0x7f8] sm:$0xf]
  %v580 = vld [vmem:[%s1 + $0x7fc] sm:$0xf]
  %v581 = vld [vmem:[%s1 + $0x800] sm:$0xf]
  %v582 = vld [vmem:[%s1 + $0x804] sm:$0xf]
  %v583 = vld [vmem:[%s1 + $0x808] sm:$0xf]
  %v584 = vld [vmem:[%s1 + $0x80c] sm:$0xf]
  %v585 = vld [vmem:[%s1 + $0x810] sm:$0xf]
  %v586 = vld [vmem:[%s1 + $0x814] sm:$0xf]
  %v587 = vld [vmem:[%s1 + $0x818] sm:$0xf]
  %v588 = vld [vmem:[%s1 + $0x81c] sm:$0xf]
  %v589 = vld [vmem:[%s1 + $0x820] sm:$0xf]
  %v590 = vld [vmem:[%s1 + $0x824] sm:$0xf]
  %v591 = vld [vmem:[%s1 + $0x828] sm:$0xf]
  %v592 = vld [vmem:[%s1 + $0x82c] sm:$0xf]
  %v593 = vld [vmem:[%s1 + $0x830] sm:$0xf]
  %v594 = vld [vmem:[%s1 + $0x834] sm:$0xf]
  %v595 = vld [vmem:[%s1 + $0x838] sm:$0xf]
  %v596 = vld [vmem:[%s1 + $0x83c] sm:$0xf]
  %v597 = vld [vmem:[%s1 + $0x840] sm:$0xf]
  %v598 = vld [vmem:[%s1 + $0x844] sm:$0xf]
  %v599 = vld [vmem:[%s1 + $0x848] sm:$0xf]
  %v600 = vld [vmem:[%s1 + $0x84c] sm:$0xf]
  %v601 = vld [vmem:[%s1 + $0x850] sm:$0xf]
  %v602 = vld [vmem:[%s1 + $0x854] sm:$0xf]
  %v603 = vld [vmem:[%s1 + $0x858] sm:$0xf]
  %v604 = vld [vmem:[%s1 + $0x85c] sm:$0xf]
  %v605 = vld [vmem:[%s1 + $0x860] sm:$0xf]
  %v606 = vld [vmem:[%s1 + $0x864] sm:$0xf]
  %v607 = vld [vmem:[%s1 + $0x868] sm:$0xf]
  %v608 = vld [vmem:[%s1 + $0x86c] sm:$0xf]
  %v609 = vld [vmem:[%s1 + $0x870] sm:$0xf]
  %v610 = vld [vmem:[%s1 + $0x874] sm:$0xf]
  %v611 = vld [vmem:[%s1 + $0x878] sm:$0xf]
  %v612 = vld [vmem:[%s1 + $0x87c] sm:$0xf]
  %v613 = vld [vmem:[%s1 + $0x880] sm:$0xf]
  %v614 = vld [vmem:[%s1 + $0x884] sm:$0xf]
  %v615 = vld [vmem:[%s1 + $0x888] sm:$0xf]
  %v616 = vld [vmem:[%s1 + $0x88c] sm:$0xf]
  %v617 = vld [vmem:[%s1 + $0x890] sm:$0xf]
  %v618 = vld [vmem:[%s1 + $0x894] sm:$0xf]
  %v619 = vld [vmem:[%s1 + $0x898] sm:$0xf]
  %v620 = vld [vmem:[%s1 + $0x89c] sm:$0xf]
  %v621 = vld [vmem:[%s1 + $0x8a0] sm:$0xf]
  %v622 = vld [vmem:[%s1 + $0x8a4] sm:$0xf]
  %v623 = vld [vmem:[%s1 + $0x8a8] sm:$0xf]
  %v624 = vld [vmem:[%s1 + $0x8ac] sm:$0xf]
  %v625 = vld [vmem:[%s1 + $0x8b0] sm:$0xf]
  %v626 = vld [vmem:[%s1 + $0x8b4] sm:$0xf]
  %v627 = vld [vmem:[%s1 + $0x8b8] sm:$0xf]
  %v628 = vld [vmem:[%s1 + $0x8bc] sm:$0xf]
  %v629 = vld [vmem:[%s1 + $0x8c0] sm:$0xf]
  %v630 = vld [vmem:[%s1 + $0x8c4] sm:$0xf]
  %v631 = vld [vmem:[%s1 + $0x8c8] sm:$0xf]
  %v632 = vld [vmem:[%s1 + $0x8cc] sm:$0xf]
  %v633 = vld [vmem:[%s1 + $0x8d0] sm:$0xf]
  %v634 = vld [vmem:[%s1 + $0x8d4] sm:$0xf]
  %v635 = vld [vmem:[%s1 + $0x8d8] sm:$0xf]
  %v636 = vld [vmem:[%s1 + $0x8dc] sm:$0xf]
  %v637 = vld [vmem:[%s1 + $0x8e0] sm:$0xf]
  %v638 = vld [vmem:[%s1 + $0x8e4] sm:$0xf]
  %v639 = vld [vmem:[%s1 + $0x8e8] sm:$0xf]
  %v640 = vld [vmem:[%s1 + $0x8ec] sm:$0xf]
  %v641 = vld [vmem:[%s1 + $0x8f0] sm:$0xf]
  %v642 = vld [vmem:[%s1 + $0x8f4] sm:$0xf]
  %v643 = vld [vmem:[%s1 + $0x8f8] sm:$0xf]
  %v644 = vld [vmem:[%s1 + $0x8fc] sm:$0xf]
  %v645 = vld [vmem:[%s1 + $0x900] sm:$0xf]
  %v646 = vld [vmem:[%s1 + $0x904] sm:$0xf]
  %v647 = vld [vmem:[%s1 + $0x908] sm:$0xf]
  %v648 = vld [vmem:[%s1 + $0x90c] sm:$0xf]
  %v649 = vld [vmem:[%s1 + $0x910] sm:$0xf]
  %v650 = vld [vmem:[%s1 + $0x914] sm:$0xf]
  %v651 = vld [vmem:[%s1 + $0x918] sm:$0xf]
  %v652 = vld [vmem:[%s1 + $0x91c] sm:$0xf]
  %v653 = vld [vmem:[%s1 + $0x920] sm:$0xf]
  %v654 = vld [vmem:[%s1 + $0x924] sm:$0xf]
  %v655 = vld [vmem:[%s1 + $0x928] sm:$0xf]
  %v656 = vld [vmem:[%s1 + $0x92c] sm:$0xf]
  %v657 = vld [vmem:[%s1 + $0x930] sm:$0xf]
  %v658 = vld [vmem:[%s1 + $0x934] sm:$0xf]
  %v659 = vld [vmem:[%s1 + $0x938] sm:$0xf]
  %v660 = vld [vmem:[%s1 + $0x93c] sm:$0xf]
  %v661 = vld [vmem:[%s1 + $0x940] sm:$0xf]
  %v662 = vld [vmem:[%s1 + $0x944] sm:$0xf]
  %v663 = vld [vmem:[%s1 + $0x948] sm:$0xf]
  %v664 = vld [vmem:[%s1 + $0x94c] sm:$0xf]
  %v665 = vld [vmem:[%s1 + $0x950] sm:$0xf]
  %v666 = vld [vmem:[%s1 + $0x954] sm:$0xf]
  %v667 = vld [vmem:[%s1 + $0x958] sm:$0xf]
  %v668 = vld [vmem:[%s1 + $0x95c] sm:$0xf]
  %v669 = vld [vmem:[%s1 + $0x960] sm:$0xf]
  %v670 = vld [vmem:[%s1 + $0x964] sm:$0xf]
  %v671 = vld [vmem:[%s1 + $0x968] sm:$0xf]
  %v672 = vld [vmem:[%s1 + $0x96c] sm:$0xf]
  %v673 = vld [vmem:[%s1 + $0x970] sm:$0xf]
  %v674 = vld [vmem:[%s1 + $0x974] sm:$0xf]
  %v675 = vld [vmem:[%s1 + $0x978] sm:$0xf]
  %v676 = vld [vmem:[%s1 + $0x97c] sm:$0xf]
  %v677 = vld [vmem:[%s1 + $0x980] sm:$0xf]
  %v678 = vld [vmem:[%s1 + $0x984] sm:$0xf]
  %v679 = vld [vmem:[%s1 + $0x988] sm:$0xf]
  %v680 = vld [vmem:[%s1 + $0x98c] sm:$0xf]
  %v681 = vld [vmem:[%s1 + $0x990] sm:$0xf]
  %v682 = vld [vmem:[%s1 + $0x994] sm:$0xf]
  %v683 = vld [vmem:[%s1 + $0x998] sm:$0xf]
  %v684 = vld [vmem:[%s1 + $0x99c] sm:$0xf]
  %v685 = vld [vmem:[%s1 + $0x9a0] sm:$0xf]
  %v686 = vld [vmem:[%s1 + $0x9a4] sm:$0xf]
  %v687 = vld [vmem:[%s1 + $0x9a8] sm:$0xf]
  %v688 = vld [vmem:[%s1 + $0x9ac] sm:$0xf]
  %v689 = vld [vmem:[%s1 + $0x9b0] sm:$0xf]
  %v690 = vld [vmem:[%s1 + $0x9b4] sm:$0xf]
  %v691 = vld [vmem:[%s1 + $0x9b8] sm:$0xf]
  %v692 = vld [vmem:[%s1 + $0x9bc] sm:$0xf]
  %v693 = vld [vmem:[%s1 + $0x9c0] sm:$0xf]
  %v694 = vld [vmem:[%s1 + $0x9c4] sm:$0xf]
  %v695 = vld [vmem:[%s1 + $0x9c8] sm:$0xf]
  %v696 = vld [vmem:[%s1 + $0x9cc] sm:$0xf]
  %v697 = vld [vmem:[%s1 + $0x9d0] sm:$0xf]
  %v698 = vld [vmem:[%s1 + $0x9d4] sm:$0xf]
  %v699 = vld [vmem:[%s1 + $0x9d8] sm:$0xf]
  %v700 = vld [vmem:[%s1 + $0x9dc] sm:$0xf]
  %v701 = vld [vmem:[%s1 + $0x9e0] sm:$0xf]
  %v702 = vld [vmem:[%s1 + $0x9e4] sm:$0xf]
  %v703 = vld [vmem:[%s1 + $0x9e8] sm:$0xf]
  %v704 = vld [vmem:[%s1 + $0x9ec] sm:$0xf]
  %v705 = vld [vmem:[%s1 + $0x9f0] sm:$0xf]
  %v706 = vld [vmem:[%s1 + $0x9f4] sm:$0xf]
  %v707 = vld [vmem:[%s1 + $0x9f8] sm:$0xf]
  %v708 = vld [vmem:[%s1 + $0x9fc] sm:$0xf]
  %v709 = vld [vmem:[%s1 + $0xa00] sm:$0xf]
  %v710 = vld [vmem:[%s1 + $0xa04] sm:$0xf]
  %v711 = vld [vmem:[%s1 + $0xa08] sm:$0xf]
  %v712 = vld [vmem:[%s1 + $0xa0c] sm:$0xf]
  %v713 = vld [vmem:[%s1 + $0xa10] sm:$0xf]
  %v714 = vld [vmem:[%s1 + $0xa14] sm:$0xf]
  %v715 = vld [vmem:[%s1 + $0xa18] sm:$0xf]
  %v716 = vld [vmem:[%s1 + $0xa1c] sm:$0xf]
  %v717 = vld [vmem:[%s1 + $0xa20] sm:$0xf]
  %v718 = vld [vmem:[%s1 + $0xa24] sm:$0xf]
  %v719 = vld [vmem:[%s1 + $0xa28] sm:$0xf]
  %v720 = vld [vmem:[%s1 + $0xa2c] sm:$0xf]
  %v721 = vld [vmem:[%s1 + $0xa30] sm:$0xf]
  %v722 = vld [vmem:[%s1 + $0xa34] sm:$0xf]
  %v723 = vld [vmem:[%s1 + $0xa38] sm:$0xf]
  %v724 = vld [vmem:[%s1 + $0xa3c] sm:$0xf]
  %v725 = vld [vmem:[%s1 + $0xa40] sm:$0xf]
  %v726 = vld [vmem:[%s1 + $0xa44] sm:$0xf]
  %v727 = vld [vmem:[%s1 + $0xa48] sm:$0xf]
  %v728 = vld [vmem:[%s1 + $0xa4c] sm:$0xf]
  %v729 = vld [vmem:[%s1 + $0xa50] sm:$0xf]
  %v730 = vld [vmem:[%s1 + $0xa54] sm:$0xf]
  %v731 = vld [vmem:[%s1 + $0xa58] sm:$0xf]
  %v732 = vld [vmem:[%s1 + $0xa5c] sm:$0xf]
  %v733 = vld [vmem:[%s1 + $0xa60] sm:$0xf]
  %v734 = vld [vmem:[%s1 + $0xa64] sm:$0xf]
  %v735 = vld [vmem:[%s1 + $0xa68] sm:$0xf]
  %v736 = vld [vmem:[%s1 + $0xa6c] sm:$0xf]
  %v737 = vld [vmem:[%s1 + $0xa70] sm:$0xf]
  %v738 = vld [vmem:[%s1 + $0xa74] sm:$0xf]
  %v739 = vld [vmem:[%s1 + $0xa78] sm:$0xf]
  %v740 = vld [vmem:[%s1 + $0xa7c] sm:$0xf]
  %v741 = vld [vmem:[%s1 + $0xa80] sm:$0xf]
  %v742 = vld [vmem:[%s1 + $0xa84] sm:$0xf]
  %v743 = vld [vmem:[%s1 + $0xa88] sm:$0xf]
  %v744 = vld [vmem:[%s1 + $0xa8c] sm:$0xf]
  %v745 = vld [vmem:[%s1 + $0xa90] sm:$0xf]
  %v746 = vld [vmem:[%s1 + $0xa94] sm:$0xf]
  %v747 = vld [vmem:[%s1 + $0xa98] sm:$0xf]
  %v748 = vld [vmem:[%s1 + $0xa9c] sm:$0xf]
  %v749 = vld [vmem:[%s1 + $0xaa0] sm:$0xf]
  %v750 = vld [vmem:[%s1 + $0xaa4] sm:$0xf]
  %v751 = vld [vmem:[%s1 + $0xaa8] sm:$0xf]
  %v752 = vld [vmem:[%s1 + $0xaac] sm:$0xf]
  %v753 = vld [vmem:[%s1 + $0xab0] sm:$0xf]
  %v754 = vld [vmem:[%s1 + $0xab4] sm:$0xf]
  %v755 = vld [vmem:[%s1 + $0xab8] sm:$0xf]
  %v756 = vld [vmem:[%s1 + $0xabc] sm:$0xf]
  %v757 = vld [vmem:[%s1 + $0xac0] sm:$0xf]
  %v758 = vld [vmem:[%s1 + $0xac4] sm:$0xf]
  %v759 = vld [vmem:[%s1 + $0xac8] sm:$0xf]
  %v760 = vld [vmem:[%s1 + $0xacc] sm:$0xf]
  %v761 = vld [vmem:[%s1 + $0xad0] sm:$0xf]
  %v762 = vld [vmem:[%s1 + $0xad4] sm:$0xf]
  %v763 = vld [vmem:[%s1 + $0xad8] sm:$0xf]
  %v764 = vld [vmem:[%s1 + $0xadc] sm:$0xf]
  %v765 = vld [vmem:[%s1 + $0xae0] sm:$0xf]
  %v766 = vld [vmem:[%s1 + $0xae4] sm:$0xf]
  %v767 = vld [vmem:[%s1 + $0xae8] sm:$0xf]
  %v768 = vld [vmem:[%s1 + $0xaec] sm:$0xf]
  %v769 = vld [vmem:[%s1 + $0xaf0] sm:$0xf]
  %v770 = vld [vmem:[%s1 + $0xaf4] sm:$0xf]
  %v771 = vld [vmem:[%s1 + $0xaf8] sm:$0xf]
  %v772 = vld [vmem:[%s1 + $0xafc] sm:$0xf]
  %v773 = vld [vmem:[%s1 + $0xb00] sm:$0xf]
  %v774 = vld [vmem:[%s1 + $0xb04] sm:$0xf]
  %v775 = vld [vmem:[%s1 + $0xb08] sm:$0xf]
  %v776 = vld [vmem:[%s1 + $0xb0c] sm:$0xf]
  %v777 = vld [vmem:[%s1 + $0xb10] sm:$0xf]
  %v778 = vld [vmem:[%s1 + $0xb14] sm:$0xf]
  %v779 = vld [vmem:[%s1 + $0xb18] sm:$0xf]
  %v780 = vld [vmem:[%s1 + $0xb1c] sm:$0xf]
  %v781 = vld [vmem:[%s1 + $0xb20] sm:$0xf]
  %v782 = vld [vmem:[%s1 + $0xb24] sm:$0xf]
  %v783 = vld [vmem:[%s1 + $0xb28] sm:$0xf]
  %v784 = vld [vmem:[%s1 + $0xb2c] sm:$0xf]
  %v785 = vld [vmem:[%s1 + $0xb30] sm:$0xf]
  %v786 = vld [vmem:[%s1 + $0xb34] sm:$0xf]
  %v787 = vld [vmem:[%s1 + $0xb38] sm:$0xf]
  %v788 = vld [vmem:[%s1 + $0xb3c] sm:$0xf]
  %v789 = vld [vmem:[%s1 + $0xb40] sm:$0xf]
  %v790 = vld [vmem:[%s1 + $0xb44] sm:$0xf]
  %v791 = vld [vmem:[%s1 + $0xb48] sm:$0xf]
  %v792 = vld [vmem:[%s1 + $0xb4c] sm:$0xf]
  %v793 = vld [vmem:[%s1 + $0xb50] sm:$0xf]
  %v794 = vld [vmem:[%s1 + $0xb54] sm:$0xf]
  %v795 = vld [vmem:[%s1 + $0xb58] sm:$0xf]
  %v796 = vld [vmem:[%s1 + $0xb5c] sm:$0xf]
  %v797 = vld [vmem:[%s1 + $0xb60] sm:$0xf]
  %v798 = vld [vmem:[%s1 + $0xb64] sm:$0xf]
  %v799 = vld [vmem:[%s1 + $0xb68] sm:$0xf]
  %v800 = vld [vmem:[%s1 + $0xb6c] sm:$0xf]
  %v801 = vld [vmem:[%s1 + $0xb70] sm:$0xf]
  %v802 = vld [vmem:[%s1 + $0xb74] sm:$0xf]
  %v803 = vld [vmem:[%s1 + $0xb78] sm:$0xf]
  %v804 = vld [vmem:[%s1 + $0xb7c] sm:$0xf]
  %v805 = vld [vmem:[%s1 + $0xb80] sm:$0xf]
  %v806 = vld [vmem:[%s1 + $0xb84] sm:$0xf]
  %v807 = vld [vmem:[%s1 + $0xb88] sm:$0xf]
  %v808 = vld [vmem:[%s1 + $0xb8c] sm:$0xf]
  %v809 = vld [vmem:[%s1 + $0xb90] sm:$0xf]
  %v810 = vld [vmem:[%s1 + $0xb94] sm:$0xf]
  %v811 = vld [vmem:[%s1 + $0xb98] sm:$0xf]
  %v812 = vld [vmem:[%s1 + $0xb9c] sm:$0xf]
  %v813 = vld [vmem:[%s1 + $0xba0] sm:$0xf]
  %v814 = vld [vmem:[%s1 + $0xba4] sm:$0xf]
  %v815 = vld [vmem:[%s1 + $0xba8] sm:$0xf]
  %v816 = vld [vmem:[%s1 + $0xbac] sm:$0xf]
  %v817 = vld [vmem:[%s1 + $0xbb0] sm:$0xf]
  %v818 = vld [vmem:[%s1 + $0xbb4] sm:$0xf]
  %v819 = vld [vmem:[%s1 + $0xbb8] sm:$0xf]
  %v820 = vld [vmem:[%s1 + $0xbbc] sm:$0xf]
  %v821 = vld [vmem:[%s1 + $0xbc0] sm:$0xf]
  %v822 = vld [vmem:[%s1 + $0xbc4] sm:$0xf]
  %v823 = vld [vmem:[%s1 + $0xbc8] sm:$0xf]
  %v824 = vld [vmem:[%s1 + $0xbcc] sm:$0xf]
  %v825 = vld [vmem:[%s1 + $0xbd0] sm:$0xf]
  %v826 = vld [vmem:[%s1 + $0xbd4] sm:$0xf]
  %v827 = vld [vmem:[%s1 + $0xbd8] sm:$0xf]
  %v828 = vld [vmem:[%s1 + $0xbdc] sm:$0xf]
  %v829 = vld [vmem:[%s1 + $0xbe0] sm:$0xf]
  %v830 = vld [vmem:[%s1 + $0xbe4] sm:$0xf]
  %v831 = vld [vmem:[%s1 + $0xbe8] sm:$0xf]
  %v832 = vld [vmem:[%s1 + $0xbec] sm:$0xf]
  %v833 = vld [vmem:[%s1 + $0xbf0] sm:$0xf]
  %v834 = vld [vmem:[%s1 + $0xbf4] sm:$0xf]
  %v835 = vld [vmem:[%s1 + $0xbf8] sm:$0xf]
  %v836 = vld [vmem:[%s1 + $0xbfc] sm:$0xf]
  %v837 = vld [vmem:[%s1 + $0xc00] sm:$0xf]
  %v838 = vld [vmem:[%s1 + $0xc04] sm:$0xf]
  %v839 = vld [vmem:[%s1 + $0xc08] sm:$0xf]
  %v840 = vld [vmem:[%s1 + $0xc0c] sm:$0xf]
  %v841 = vld [vmem:[%s1 + $0xc10] sm:$0xf]
  %v842 = vld [vmem:[%s1 + $0xc14] sm:$0xf]
  %v843 = vld [vmem:[%s1 + $0xc18] sm:$0xf]
  %v844 = vld [vmem:[%s1 + $0xc1c] sm:$0xf]
  %v845 = vld [vmem:[%s1 + $0xc20] sm:$0xf]
  %v846 = vld [vmem:[%s1 + $0xc24] sm:$0xf]
  %v847 = vld [vmem:[%s1 + $0xc28] sm:$0xf]
  %v848 = vld [vmem:[%s1 + $0xc2c] sm:$0xf]
  %v849 = vld [vmem:[%s1 + $0xc30] sm:$0xf]
  %v850 = vld [vmem:[%s1 + $0xc34] sm:$0xf]
  %v851 = vld [vmem:[%s1 + $0xc38] sm:$0xf]
  %v852 = vld [vmem:[%s1 + $0xc3c] sm:$0xf]
  %v853 = vld [vmem:[%s1 + $0xc40] sm:$0xf]
  %v854 = vld [vmem:[%s1 + $0xc44] sm:$0xf]
  %v855 = vld [vmem:[%s1 + $0xc48] sm:$0xf]
  %v856 = vld [vmem:[%s1 + $0xc4c] sm:$0xf]
  %v857 = vld [vmem:[%s1 + $0xc50] sm:$0xf]
  %v858 = vld [vmem:[%s1 + $0xc54] sm:$0xf]
  %v859 = vld [vmem:[%s1 + $0xc58] sm:$0xf]
  %v860 = vld [vmem:[%s1 + $0xc5c] sm:$0xf]
  %v861 = vld [vmem:[%s1 + $0xc60] sm:$0xf]
  %v862 = vld [vmem:[%s1 + $0xc64] sm:$0xf]
  %v863 = vld [vmem:[%s1 + $0xc68] sm:$0xf]
  %v864 = vld [vmem:[%s1 + $0xc6c] sm:$0xf]
  %v865 = vld [vmem:[%s1 + $0xc70] sm:$0xf]
  %v866 = vld [vmem:[%s1 + $0xc74] sm:$0xf]
  %v867 = vld [vmem:[%s1 + $0xc78] sm:$0xf]
  %v868 = vld [vmem:[%s1 + $0xc7c] sm:$0xf]
  %v869 = vld [vmem:[%s1 + $0xc80] sm:$0xf]
  %v870 = vld [vmem:[%s1 + $0xc84] sm:$0xf]
  %v871 = vld [vmem:[%s1 + $0xc88] sm:$0xf]
  %v872 = vld [vmem:[%s1 + $0xc8c] sm:$0xf]
  %v873 = vld [vmem:[%s1 + $0xc90] sm:$0xf]
  %v874 = vld [vmem:[%s1 + $0xc94] sm:$0xf]
  %v875 = vld [vmem:[%s1 + $0xc98] sm:$0xf]
  %v876 = vld [vmem:[%s1 + $0xc9c] sm:$0xf]
  %v877 = vld [vmem:[%s1 + $0xca0] sm:$0xf]
  %v878 = vld [vmem:[%s1 + $0xca4] sm:$0xf]
  %v879 = vld [vmem:[%s1 + $0xca8] sm:$0xf]
  %v880 = vld [vmem:[%s1 + $0xcac] sm:$0xf]
  %v881 = vld [vmem:[%s1 + $0xcb0] sm:$0xf]
  %v882 = vld [vmem:[%s1 + $0xcb4] sm:$0xf]
  %v883 = vld [vmem:[%s1 + $0xcb8] sm:$0xf]
  %v884 = vld [vmem:[%s1 + $0xcbc] sm:$0xf]
  %v885 = vld [vmem:[%s1 + $0xcc0] sm:$0xf]
  %v886 = vld [vmem:[%s1 + $0xcc4] sm:$0xf]
  %v887 = vld [vmem:[%s1 + $0xcc8] sm:$0xf]
  %v888 = vld [vmem:[%s1 + $0xccc] sm:$0xf]
  %v889 = vld [vmem:[%s1 + $0xcd0] sm:$0xf]
  %v890 = vld [vmem:[%s1 + $0xcd4] sm:$0xf]
  %v891 = vld [vmem:[%s1 + $0xcd8] sm:$0xf]
  %v892 = vld [vmem:[%s1 + $0xcdc] sm:$0xf]
  %v893 = vld [vmem:[%s1 + $0xce0] sm:$0xf]
  %v894 = vld [vmem:[%s1 + $0xce4] sm:$0xf]
  %v895 = vld [vmem:[%s1 + $0xce8] sm:$0xf]
  %v896 = vld [vmem:[%s1 + $0xcec] sm:$0xf]
  %v897 = vld [vmem:[%s1 + $0xcf0] sm:$0xf]
  %v898 = vld [vmem:[%s1 + $0xcf4] sm:$0xf]
  %v899 = vld [vmem:[%s1 + $0xcf8] sm:$0xf]
  %v900 = vld [vmem:[%s1 + $0xcfc] sm:$0xf]
  %v901 = vld [vmem:[%s1 + $0xd00] sm:$0xf]
  %v902 = vld [vmem:[%s1 + $0xd04] sm:$0xf]
  %v903 = vld [vmem:[%s1 + $0xd08] sm:$0xf]
  %v904 = vld [vmem:[%s1 + $0xd0c] sm:$0xf]
  %v905 = vld [vmem:[%s1 + $0xd10] sm:$0xf]
  %v906 = vld [vmem:[%s1 + $0xd14] sm:$0xf]
  %v907 = vld [vmem:[%s1 + $0xd18] sm:$0xf]
  %v908 = vld [vmem:[%s1 + $0xd1c] sm:$0xf]
  %v909 = vld [vmem:[%s1 + $0xd20] sm:$0xf]
  %v910 = vld [vmem:[%s1 + $0xd24] sm:$0xf]
  %v911 = vld [vmem:[%s1 + $0xd28] sm:$0xf]
  %v912 = vld [vmem:[%s1 + $0xd2c] sm:$0xf]
  %v913 = vld [vmem:[%s1 + $0xd30] sm:$0xf]
  %v914 = vld [vmem:[%s1 + $0xd34] sm:$0xf]
  %v915 = vld [vmem:[%s1 + $0xd38] sm:$0xf]
  %v916 = vld [vmem:[%s1 + $0xd3c] sm:$0xf]
  %v917 = vld [vmem:[%s1 + $0xd40] sm:$0xf]
  %v918 = vld [vmem:[%s1 + $0xd44] sm:$0xf]
  %v919 = vld [vmem:[%s1 + $0xd48] sm:$0xf]
  %v920 = vld [vmem:[%s1 + $0xd4c] sm:$0xf]
  %v921 = vld [vmem:[%s1 + $0xd50] sm:$0xf]
  %v922 = vld [vmem:[%s1 + $0xd54] sm:$0xf]
  %v923 = vld [vmem:[%s1 + $0xd58] sm:$0xf]
  %v924 = vld [vmem:[%s1 + $0xd5c] sm:$0xf]
  %v925 = vld [vmem:[%s1 + $0xd60] sm:$0xf]
  %v926 = vld [vmem:[%s1 + $0xd64] sm:$0xf]
  %v927 = vld [vmem:[%s1 + $0xd68] sm:$0xf]
  %v928 = vld [vmem:[%s1 + $0xd6c] sm:$0xf]
  %v929 = vld [vmem:[%s1 + $0xd70] sm:$0xf]
  %v930 = vld [vmem:[%s1 + $0xd74] sm:$0xf]
  %v931 = vld [vmem:[%s1 + $0xd78] sm:$0xf]
  %v932 = vld [vmem:[%s1 + $0xd7c] sm:$0xf]
  %v933 = vld [vmem:[%s1 + $0xd80] sm:$0xf]
  %v934 = vld [vmem:[%s1 + $0xd84] sm:$0xf]
  %v935 = vld [vmem:[%s1 + $0xd88] sm:$0xf]
  %v936 = vld [vmem:[%s1 + $0xd8c] sm:$0xf]
  %v937 = vld [vmem:[%s1 + $0xd90] sm:$0xf]
  %v938 = vld [vmem:[%s1 + $0xd94] sm:$0xf]
  %v939 = vld [vmem:[%s1 + $0xd98] sm:$0xf]
  %v940 = vld [vmem:[%s1 + $0xd9c] sm:$0xf]
  %v941 = vld [vmem:[%s1 + $0xda0] sm:$0xf]
  %v942 = vld [vmem:[%s1 + $0xda4] sm:$0xf]
  %v943 = vld [vmem:[%s1 + $0xda8] sm:$0xf]
  %v944 = vld [vmem:[%s1 + $0xdac] sm:$0xf]
  %v945 = vld [vmem:[%s1 + $0xdb0] sm:$0xf]
  %v946 = vld [vmem:[%s1 + $0xdb4] sm:$0xf]
  %v947 = vld [vmem:[%s1 + $0xdb8] sm:$0xf]
  %v948 = vld [vmem:[%s1 + $0xdbc] sm:$0xf]
  %v949 = vld [vmem:[%s1 + $0xdc0] sm:$0xf]
  %v950 = vld [vmem:[%s1 + $0xdc4] sm:$0xf]
  %v951 = vld [vmem:[%s1 + $0xdc8] sm:$0xf]
  %v952 = vld [vmem:[%s1 + $0xdcc] sm:$0xf]
  %v953 = vld [vmem:[%s1 + $0xdd0] sm:$0xf]
  %v954 = vld [vmem:[%s1 + $0xdd4] sm:$0xf]
  %v955 = vld [vmem:[%s1 + $0xdd8] sm:$0xf]
  %v956 = vld [vmem:[%s1 + $0xddc] sm:$0xf]
  %v957 = vld [vmem:[%s1 + $0xde0] sm:$0xf]
  %v958 = vld [vmem:[%s1 + $0xde4] sm:$0xf]
  %v959 = vld [vmem:[%s1 + $0xde8] sm:$0xf]
  %v960 = vld [vmem:[%s1 + $0xdec] sm:$0xf]
  %v961 = vld [vmem:[%s1 + $0xdf0] sm:$0xf]
  %v962 = vld [vmem:[%s1 + $0xdf4] sm:$0xf]
  %v963 = vld [vmem:[%s1 + $0xdf8] sm:$0xf]
  %v964 = vld [vmem:[%s1 + $0xdfc] sm:$0xf]
  %v965 = vld [vmem:[%s1 + $0xe00] sm:$0xf]
  %v966 = vld [vmem:[%s1 + $0xe04] sm:$0xf]
  %v967 = vld [vmem:[%s1 + $0xe08] sm:$0xf]
  %v968 = vld [vmem:[%s1 + $0xe0c] sm:$0xf]
  %v969 = vld [vmem:[%s1 + $0xe10] sm:$0xf]
  %v970 = vld [vmem:[%s1 + $0xe14] sm:$0xf]
  %v971 = vld [vmem:[%s1 + $0xe18] sm:$0xf]
  %v972 = vld [vmem:[%s1 + $0xe1c] sm:$0xf]
  %v973 = vld [vmem:[%s1 + $0xe20] sm:$0xf]
  %v974 = vld [vmem:[%s1 + $0xe24] sm:$0xf]
  %v975 = vld [vmem:[%s1 + $0xe28] sm:$0xf]
  %v976 = vld [vmem:[%s1 + $0xe2c] sm:$0xf]
  %v977 = vld [vmem:[%s1 + $0xe30] sm:$0xf]
  %v978 = vld [vmem:[%s1 + $0xe34] sm:$0xf]
  %v979 = vld [vmem:[%s1 + $0xe38] sm:$0xf]
  %v980 = vld [vmem:[%s1 + $0xe3c] sm:$0xf]
  %v981 = vld [vmem:[%s1 + $0xe40] sm:$0xf]
  %v982 = vld [vmem:[%s1 + $0xe44] sm:$0xf]
  %v983 = vld [vmem:[%s1 + $0xe48] sm:$0xf]
  %v984 = vld [vmem:[%s1 + $0xe4c] sm:$0xf]
  %v985 = vld [vmem:[%s1 + $0xe50] sm:$0xf]
  %v986 = vld [vmem:[%s1 + $0xe54] sm:$0xf]
  %v987 = vld [vmem:[%s1 + $0xe58] sm:$0xf]
  %v988 = vld [vmem:[%s1 + $0xe5c] sm:$0xf]
  %v989 = vld [vmem:[%s1 + $0xe60] sm:$0xf]
  %v990 = vld [vmem:[%s1 + $0xe64] sm:$0xf]
  %v991 = vld [vmem:[%s1 + $0xe68] sm:$0xf]
  %v992 = vld [vmem:[%s1 + $0xe6c] sm:$0xf]
  %v993 = vld [vmem:[%s1 + $0xe70] sm:$0xf]
  %v994 = vld [vmem:[%s1 + $0xe74] sm:$0xf]
  %v995 = vld [vmem:[%s1 + $0xe78] sm:$0xf]
  %v996 = vld [vmem:[%s1 + $0xe7c] sm:$0xf]
  %v997 = vld [vmem:[%s1 + $0xe80] sm:$0xf]
  %v998 = vld [vmem:[%s1 + $0xe84] sm:$0xf]
  %v999 = vld [vmem:[%s1 + $0xe88] sm:$0xf]
  %v1000 = vld [vmem:[%s1 + $0xe8c] sm:$0xf]
  %v1001 = vld [vmem:[%s1 + $0xe90] sm:$0xf]
  %v1002 = vld [vmem:[%s1 + $0xe94] sm:$0xf]
  %v1003 = vld [vmem:[%s1 + $0xe98] sm:$0xf]
  %v1004 = vld [vmem:[%s1 + $0xe9c] sm:$0xf]
  %v1005 = vld [vmem:[%s1 + $0xea0] sm:$0xf]
  %v1006 = vld [vmem:[%s1 + $0xea4] sm:$0xf]
  %v1007 = vld [vmem:[%s1 + $0xea8] sm:$0xf]
  %v1008 = vld [vmem:[%s1 + $0xeac] sm:$0xf]
  %v1009 = vld [vmem:[%s1 + $0xeb0] sm:$0xf]
  %v1010 = vld [vmem:[%s1 + $0xeb4] sm:$0xf]
  %v1011 = vld [vmem:[%s1 + $0xeb8] sm:$0xf]
  %v1012 = vld [vmem:[%s1 + $0xebc] sm:$0xf]
  %v1013 = vld [vmem:[%s1 + $0xec0] sm:$0xf]
  %v1014 = vld [vmem:[%s1 + $0xec4] sm:$0xf]
  %v1015 = vld [vmem:[%s1 + $0xec8] sm:$0xf]
  %v1016 = vld [vmem:[%s1 + $0xecc] sm:$0xf]
  %v1017 = vld [vmem:[%s1 + $0xed0] sm:$0xf]
  %v1018 = vld [vmem:[%s1 + $0xed4] sm:$0xf]
  %v1019 = vld [vmem:[%s1 + $0xed8] sm:$0xf]
  %v1020 = vld [vmem:[%s1 + $0xedc] sm:$0xf]
  %v1021 = vld [vmem:[%s1 + $0xee0] sm:$0xf]
  %v1022 = vld [vmem:[%s1 + $0xee4] sm:$0xf]
  %v1023 = vld [vmem:[%s1 + $0xee8] sm:$0xf]
  %v1024 = vld [vmem:[%s1 + $0xeec] sm:$0xf]
  %v1025 = vld [vmem:[%s1 + $0xef0] sm:$0xf]
  %v1026 = vld [vmem:[%s1 + $0xef4] sm:$0xf]
  %v1027 = vld [vmem:[%s1 + $0xef8] sm:$0xf]
  %v1028 = vld [vmem:[%s1 + $0xefc] sm:$0xf]
  %v1029 = vld [vmem:[%s1 + $0xf00] sm:$0xf]
  %v1030 = vld [vmem:[%s1 + $0xf04] sm:$0xf]
  %v1031 = vld [vmem:[%s1 + $0xf08] sm:$0xf]
  %v1032 = vld [vmem:[%s1 + $0xf0c] sm:$0xf]
  %v1033 = vld [vmem:[%s1 + $0xf10] sm:$0xf]
  %v1034 = vld [vmem:[%s1 + $0xf14] sm:$0xf]
  %v1035 = vld [vmem:[%s1 + $0xf18] sm:$0xf]
  %v1036 = vld [vmem:[%s1 + $0xf1c] sm:$0xf]
  %v1037 = vld [vmem:[%s1 + $0xf20] sm:$0xf]
  %v1038 = vld [vmem:[%s1 + $0xf24] sm:$0xf]
  %v1039 = vld [vmem:[%s1 + $0xf28] sm:$0xf]
  %v1040 = vld [vmem:[%s1 + $0xf2c] sm:$0xf]
  %v1041 = vld [vmem:[%s1 + $0xf30] sm:$0xf]
  %v1042 = vld [vmem:[%s1 + $0xf34] sm:$0xf]
  %v1043 = vld [vmem:[%s1 + $0xf38] sm:$0xf]
  %v1044 = vld [vmem:[%s1 + $0xf3c] sm:$0xf]
  %v1045 = vld [vmem:[%s1 + $0xf40] sm:$0xf]
  %v1046 = vld [vmem:[%s1 + $0xf44] sm:$0xf]
  %v1047 = vld [vmem:[%s1 + $0xf48] sm:$0xf]
  %v1048 = vld [vmem:[%s1 + $0xf4c] sm:$0xf]
  %v1049 = vld [vmem:[%s1 + $0xf50] sm:$0xf]
  %v1050 = vld [vmem:[%s1 + $0xf54] sm:$0xf]
  %v1051 = vld [vmem:[%s1 + $0xf58] sm:$0xf]
  %v1052 = vld [vmem:[%s1 + $0xf5c] sm:$0xf]
  %v1053 = vld [vmem:[%s1 + $0xf60] sm:$0xf]
  %v1054 = vld [vmem:[%s1 + $0xf64] sm:$0xf]
  %v1055 = vld [vmem:[%s1 + $0xf68] sm:$0xf]
  %v1056 = vld [vmem:[%s1 + $0xf6c] sm:$0xf]
  %v1057 = vld [vmem:[%s1 + $0xf70] sm:$0xf]
  %v1058 = vld [vmem:[%s1 + $0xf74] sm:$0xf]
  %v1059 = vld [vmem:[%s1 + $0xf78] sm:$0xf]
  %v1060 = vld [vmem:[%s1 + $0xf7c] sm:$0xf]
  %v1061 = vld [vmem:[%s1 + $0xf80] sm:$0xf]
  %v1062 = vld [vmem:[%s1 + $0xf84] sm:$0xf]
  %v1063 = vld [vmem:[%s1 + $0xf88] sm:$0xf]
  %v1064 = vld [vmem:[%s1 + $0xf8c] sm:$0xf]
  %v1065 = vld [vmem:[%s1 + $0xf90] sm:$0xf]
  %v1066 = vld [vmem:[%s1 + $0xf94] sm:$0xf]
  %v1067 = vld [vmem:[%s1 + $0xf98] sm:$0xf]
  %v1068 = vld [vmem:[%s1 + $0xf9c] sm:$0xf]
  %v1069 = vld [vmem:[%s1 + $0xfa0] sm:$0xf]
  %v1070 = vld [vmem:[%s1 + $0xfa4] sm:$0xf]
  %v1071 = vld [vmem:[%s1 + $0xfa8] sm:$0xf]
  %v1072 = vld [vmem:[%s1 + $0xfac] sm:$0xf]
  %v1073 = vld [vmem:[%s1 + $0xfb0] sm:$0xf]
  %v1074 = vld [vmem:[%s1 + $0xfb4] sm:$0xf]
  %v1075 = vld [vmem:[%s1 + $0xfb8] sm:$0xf]
  %v1076 = vld [vmem:[%s1 + $0xfbc] sm:$0xf]
  %v1077 = vld [vmem:[%s1 + $0xfc0] sm:$0xf]
  %v1078 = vld [vmem:[%s1 + $0xfc4] sm:$0xf]
  %v1079 = vld [vmem:[%s1 + $0xfc8] sm:$0xf]
  %v1080 = vld [vmem:[%s1 + $0xfcc] sm:$0xf]
  %v1081 = vld [vmem:[%s1 + $0xfd0] sm:$0xf]
  %v1082 = vld [vmem:[%s1 + $0xfd4] sm:$0xf]
  %v1083 = vld [vmem:[%s1 + $0xfd8] sm:$0xf]
  %v1084 = vld [vmem:[%s1 + $0xfdc] sm:$0xf]
  %v1085 = vld [vmem:[%s1 + $0xfe0] sm:$0xf]
  %v1086 = vld [vmem:[%s1 + $0xfe4] sm:$0xf]
  %v1087 = vld [vmem:[%s1 + $0xfe8] sm:$0xf]
  %v1088 = vld [vmem:[%s1 + $0xfec] sm:$0xf]
  %v1089 = vld [vmem:[%s1 + $0xff0] sm:$0xf]
  %v1090 = vld [vmem:[%s1 + $0xff4] sm:$0xf]
  %v1091 = vld [vmem:[%s1 + $0xff8] sm:$0xf]
  %v1092 = vld [vmem:[%s1 + $0xffc] sm:$0xf]
  %v1093 = vld [vmem:[%s1 + $0x1000] sm:$0xf]
  %v1094 = vld [vmem:[%s1 + $0x1004] sm:$0xf]
  %v1095 = vld [vmem:[%s1 + $0x1008] sm:$0xf]
  %v1096 = vld [vmem:[%s1 + $0x100c] sm:$0xf]
  %v1097 = vld [vmem:[%s1 + $0x1010] sm:$0xf]
  %v1098 = vld [vmem:[%s1 + $0x1014] sm:$0xf]
  %v1099 = vld [vmem:[%s1 + $0x1018] sm:$0xf]
  %v1100 = vld [vmem:[%s1 + $0x101c] sm:$0xf]
  %v1101 = vld [vmem:[%s1 + $0x1020] sm:$0xf]
  %v1102 = vld [vmem:[%s1 + $0x1024] sm:$0xf]
  %v1103 = vld [vmem:[%s1 + $0x1028] sm:$0xf]
  %v1104 = vld [vmem:[%s1 + $0x102c] sm:$0xf]
  %v1105 = vld [vmem:[%s1 + $0x1030] sm:$0xf]
  %v1106 = vld [vmem:[%s1 + $0x1034] sm:$0xf]
  %v1107 = vld [vmem:[%s1 + $0x1038] sm:$0xf]
  %v1108 = vld [vmem:[%s1 + $0x103c] sm:$0xf]
  %v1109 = vld [vmem:[%s1 + $0x1040] sm:$0xf]
  %v1110 = vld [vmem:[%s1 + $0x1044] sm:$0xf]
  %v1111 = vld [vmem:[%s1 + $0x1048] sm:$0xf]
  %v1112 = vld [vmem:[%s1 + $0x104c] sm:$0xf]
  %v1113 = vld [vmem:[%s1 + $0x1050] sm:$0xf]
  %v1114 = vld [vmem:[%s1 + $0x1054] sm:$0xf]
  %v1115 = vld [vmem:[%s1 + $0x1058] sm:$0xf]
  %v1116 = vld [vmem:[%s1 + $0x105c] sm:$0xf]
  %v1117 = vld [vmem:[%s1 + $0x1060] sm:$0xf]
  %v1118 = vld [vmem:[%s1 + $0x1064] sm:$0xf]
  %v1119 = vld [vmem:[%s1 + $0x1068] sm:$0xf]
  %v1120 = vld [vmem:[%s1 + $0x106c] sm:$0xf]
  %v1121 = vld [vmem:[%s1 + $0x1070] sm:$0xf]
  %v1122 = vld [vmem:[%s1 + $0x1074] sm:$0xf]
  %v1123 = vld [vmem:[%s1 + $0x1078] sm:$0xf]
  %v1124 = vld [vmem:[%s1 + $0x107c] sm:$0xf]
  %v1125 = vld [vmem:[%s1 + $0x1080] sm:$0xf]
  %v1126 = vld [vmem:[%s1 + $0x1084] sm:$0xf]
  %v1127 = vld [vmem:[%s1 + $0x1088] sm:$0xf]
  %v1128 = vld [vmem:[%s1 + $0x108c] sm:$0xf]
  %v1129 = vld [vmem:[%s1 + $0x1090] sm:$0xf]
  %v1130 = vld [vmem:[%s1 + $0x1094] sm:$0xf]
  %v1131 = vld [vmem:[%s1 + $0x1098] sm:$0xf]
  %v1132 = vld [vmem:[%s1 + $0x109c] sm:$0xf]
  %v1133 = vld [vmem:[%s1 + $0x10a0] sm:$0xf]
  %v1134 = vld [vmem:[%s1 + $0x10a4] sm:$0xf]
  %v1135 = vld [vmem:[%s1 + $0x10a8] sm:$0xf]
  %v1136 = vld [vmem:[%s1 + $0x10ac] sm:$0xf]
  %v1137 = vld [vmem:[%s1 + $0x10b0] sm:$0xf]
  %v1138 = vld [vmem:[%s1 + $0x10b4] sm:$0xf]
  %v1139 = vld [vmem:[%s1 + $0x10b8] sm:$0xf]
  %v1140 = vld [vmem:[%s1 + $0x10bc] sm:$0xf]
  %v1141 = vld [vmem:[%s1 + $0x10c0] sm:$0xf]
  %v1142 = vld [vmem:[%s1 + $0x10c4] sm:$0xf]
  %v1143 = vld [vmem:[%s1 + $0x10c8] sm:$0xf]
  %v1144 = vld [vmem:[%s1 + $0x10cc] sm:$0xf]
  %v1145 = vld [vmem:[%s1 + $0x10d0] sm:$0xf]
  %v1146 = vld [vmem:[%s1 + $0x10d4] sm:$0xf]
  %v1147 = vld [vmem:[%s1 + $0x10d8] sm:$0xf]
  %v1148 = vld [vmem:[%s1 + $0x10dc] sm:$0xf]
  %v1149 = vld [vmem:[%s1 + $0x10e0] sm:$0xf]
  %v1150 = vld [vmem:[%s1 + $0x10e4] sm:$0xf]
  %v1151 = vld [vmem:[%s1 + $0x10e8] sm:$0xf]
  %v1152 = vld [vmem:[%s1 + $0x10ec] sm:$0xf]
  %v1153 = vld [vmem:[%s1 + $0x10f0] sm:$0xf]
  %v1154 = vld [vmem:[%s1 + $0x10f4] sm:$0xf]
  %v1155 = vld [vmem:[%s1 + $0x10f8] sm:$0xf]
  %v1156 = vld [vmem:[%s1 + $0x10fc] sm:$0xf]
  %v1157 = vld [vmem:[%s1 + $0x1100] sm:$0xf]
  %v1158 = vld [vmem:[%s1 + $0x1104] sm:$0xf]
  %v1159 = vld [vmem:[%s1 + $0x1108] sm:$0xf]
  %v1160 = vld [vmem:[%s1 + $0x110c] sm:$0xf]
  %v1161 = vld [vmem:[%s1 + $0x1110] sm:$0xf]
  %v1162 = vld [vmem:[%s1 + $0x1114] sm:$0xf]
  %v1163 = vld [vmem:[%s1 + $0x1118] sm:$0xf]
  %v1164 = vld [vmem:[%s1 + $0x111c] sm:$0xf]
  %v1165 = vld [vmem:[%s1 + $0x1120] sm:$0xf]
  %v1166 = vld [vmem:[%s1 + $0x1124] sm:$0xf]
  %v1167 = vld [vmem:[%s1 + $0x1128] sm:$0xf]
  %v1168 = vld [vmem:[%s1 + $0x112c] sm:$0xf]
  %v1169 = vld [vmem:[%s1 + $0x1130] sm:$0xf]
  %v1170 = vld [vmem:[%s1 + $0x1134] sm:$0xf]
  %v1171 = vld [vmem:[%s1 + $0x1138] sm:$0xf]
  %v1172 = vld [vmem:[%s1 + $0x113c] sm:$0xf]
  %v1173 = vld [vmem:[%s1 + $0x1140] sm:$0xf]
  %v1174 = vld [vmem:[%s1 + $0x1144] sm:$0xf]
  %v1175 = vld [vmem:[%s1 + $0x1148] sm:$0xf]
  %v1176 = vld [vmem:[%s1 + $0x114c] sm:$0xf]
  %v1177 = vld [vmem:[%s1 + $0x1150] sm:$0xf]
  %v1178 = vld [vmem:[%s1 + $0x1154] sm:$0xf]
  %v1179 = vld [vmem:[%s1 + $0x1158] sm:$0xf]
  %v1180 = vld [vmem:[%s1 + $0x115c] sm:$0xf]
  %v1181 = vld [vmem:[%s1 + $0x1160] sm:$0xf]
  %v1182 = vld [vmem:[%s1 + $0x1164] sm:$0xf]
  %v1183 = vld [vmem:[%s1 + $0x1168] sm:$0xf]
  %v1184 = vld [vmem:[%s1 + $0x116c] sm:$0xf]
  %v1185 = vld [vmem:[%s1 + $0x1170] sm:$0xf]
  %v1186 = vld [vmem:[%s1 + $0x1174] sm:$0xf]
  %v1187 = vld [vmem:[%s1 + $0x1178] sm:$0xf]
  %v1188 = vld [vmem:[%s1 + $0x117c] sm:$0xf]
  %v1224 = vunpack.c.l.b16 %v34
  %v1225 = vunpack.c.h.b16 %v34
  %v1226 = vunpack.c.l.b16 %v35
  %v1227 = vunpack.c.h.b16 %v35
  %v1228 = vunpack.c.l.b16 %v36
  %v1229 = vunpack.c.h.b16 %v36
  %v1230 = vunpack.c.l.b16 %v37
  %v1231 = vunpack.c.h.b16 %v37
  %v1232 = vunpack.c.l.b16 %v38
  %v1233 = vunpack.c.h.b16 %v38
  %v1234 = vunpack.c.l.b16 %v39
  %v1235 = vunpack.c.h.b16 %v39
  %v1236 = vunpack.c.l.b16 %v40
  %v1237 = vunpack.c.h.b16 %v40
  %v1238 = vunpack.c.l.b16 %v41
  %v1239 = vunpack.c.h.b16 %v41
  %v1240 = vunpack.c.l.b16 %v42
  %v1241 = vunpack.c.h.b16 %v42
  %v1242 = vunpack.c.l.b16 %v43
  %v1243 = vunpack.c.h.b16 %v43
  %v1244 = vunpack.c.l.b16 %v44
  %v1245 = vunpack.c.h.b16 %v44
  %v1246 = vunpack.c.l.b16 %v45
  %v1247 = vunpack.c.h.b16 %v45
  %v1248 = vunpack.c.l.b16 %v46
  %v1249 = vunpack.c.h.b16 %v46
  %v1250 = vunpack.c.l.b16 %v47
  %v1251 = vunpack.c.h.b16 %v47
  %v1252 = vunpack.c.l.b16 %v48
  %v1253 = vunpack.c.h.b16 %v48
  %v1254 = vunpack.c.l.b16 %v49
  %v1255 = vunpack.c.h.b16 %v49
  %v1256 = vunpack.c.l.b16 %v50
  %v1257 = vunpack.c.h.b16 %v50
  %v1258 = vunpack.c.l.b16 %v51
  %v1259 = vunpack.c.h.b16 %v51
  %v1260 = vunpack.c.l.b16 %v52
  %v1261 = vunpack.c.h.b16 %v52
  %v1262 = vunpack.c.l.b16 %v53
  %v1263 = vunpack.c.h.b16 %v53
  %v1264 = vunpack.c.l.b16 %v54
  %v1265 = vunpack.c.h.b16 %v54
  %v1266 = vunpack.c.l.b16 %v55
  %v1267 = vunpack.c.h.b16 %v55
  %v1268 = vunpack.c.l.b16 %v56
  %v1269 = vunpack.c.h.b16 %v56
  %v1270 = vunpack.c.l.b16 %v57
  %v1271 = vunpack.c.h.b16 %v57
  %v1272 = vunpack.c.l.b16 %v58
  %v1273 = vunpack.c.h.b16 %v58
  %v1274 = vunpack.c.l.b16 %v59
  %v1275 = vunpack.c.h.b16 %v59
  %v1276 = vunpack.c.l.b16 %v60
  %v1277 = vunpack.c.h.b16 %v60
  %v1278 = vunpack.c.l.b16 %v61
  %v1279 = vunpack.c.h.b16 %v61
  %v1280 = vunpack.c.l.b16 %v62
  %v1281 = vunpack.c.h.b16 %v62
  %v1282 = vunpack.c.l.b16 %v63
  %v1283 = vunpack.c.h.b16 %v63
  %v1284 = vunpack.c.l.b16 %v64
  %v1285 = vunpack.c.h.b16 %v64
  %v1286 = vunpack.c.l.b16 %v65
  %v1287 = vunpack.c.h.b16 %v65
  %v1288 = vunpack.c.l.b16 %v66
  %v1289 = vunpack.c.h.b16 %v66
  %v1290 = vunpack.c.l.b16 %v67
  %v1291 = vunpack.c.h.b16 %v67
  %v1292 = vunpack.c.l.b16 %v68
  %v1293 = vunpack.c.h.b16 %v68
  %v1294 = vpack.c.b16 %v1224, %v1224
  %v1295 = vpack.c.b16 %v1225, %v1225
  %v1296 = vpack.c.b16 %v1226, %v1226
  %v1297 = vpack.c.b16 %v1227, %v1227
  %v1298 = vpack.c.b16 %v1228, %v1228
  %v1299 = vpack.c.b16 %v1229, %v1229
  %v1300 = vpack.c.b16 %v1230, %v1230
  %v1301 = vpack.c.b16 %v1231, %v1231
  %v1302 = vpack.c.b16 %v1232, %v1232
  %v1303 = vpack.c.b16 %v1233, %v1233
  %v1304 = vpack.c.b16 %v1234, %v1234
  %v1305 = vpack.c.b16 %v1235, %v1235
  %v1306 = vpack.c.b16 %v1236, %v1236
  %v1307 = vpack.c.b16 %v1237, %v1237
  %v1308 = vpack.c.b16 %v1238, %v1238
  %v1309 = vpack.c.b16 %v1239, %v1239
  %v1310 = vpack.c.b16 %v1240, %v1240
  %v1311 = vpack.c.b16 %v1241, %v1241
  %v1312 = vpack.c.b16 %v1242, %v1242
  %v1313 = vpack.c.b16 %v1243, %v1243
  %v1314 = vpack.c.b16 %v1244, %v1244
  %v1315 = vpack.c.b16 %v1245, %v1245
  %v1316 = vpack.c.b16 %v1246, %v1246
  %v1317 = vpack.c.b16 %v1247, %v1247
  %v1318 = vpack.c.b16 %v1248, %v1248
  %v1319 = vpack.c.b16 %v1249, %v1249
  %v1320 = vpack.c.b16 %v1250, %v1250
  %v1321 = vpack.c.b16 %v1251, %v1251
  %v1322 = vpack.c.b16 %v1252, %v1252
  %v1323 = vpack.c.b16 %v1253, %v1253
  %v1324 = vpack.c.b16 %v1254, %v1254
  %v1325 = vpack.c.b16 %v1255, %v1255
  %v1326 = vpack.c.b16 %v1256, %v1256
  %v1327 = vpack.c.b16 %v1257, %v1257
  %v1328 = vpack.c.b16 %v1258, %v1258
  %v1329 = vpack.c.b16 %v1259, %v1259
  %v1330 = vpack.c.b16 %v1260, %v1260
  %v1331 = vpack.c.b16 %v1261, %v1261
  %v1332 = vpack.c.b16 %v1262, %v1262
  %v1333 = vpack.c.b16 %v1263, %v1263
  %v1334 = vpack.c.b16 %v1264, %v1264
  %v1335 = vpack.c.b16 %v1265, %v1265
  %v1336 = vpack.c.b16 %v1266, %v1266
  %v1337 = vpack.c.b16 %v1267, %v1267
  %v1338 = vpack.c.b16 %v1268, %v1268
  %v1339 = vpack.c.b16 %v1269, %v1269
  %v1340 = vpack.c.b16 %v1270, %v1270
  %v1341 = vpack.c.b16 %v1271, %v1271
  %v1342 = vpack.c.b16 %v1272, %v1272
  %v1343 = vpack.c.b16 %v1273, %v1273
  %v1344 = vpack.c.b16 %v1274, %v1274
  %v1345 = vpack.c.b16 %v1275, %v1275
  %v1346 = vpack.c.b16 %v1276, %v1276
  %v1347 = vpack.c.b16 %v1277, %v1277
  %v1348 = vpack.c.b16 %v1278, %v1278
  %v1349 = vpack.c.b16 %v1279, %v1279
  %v1350 = vpack.c.b16 %v1280, %v1280
  %v1351 = vpack.c.b16 %v1281, %v1281
  %v1352 = vpack.c.b16 %v1282, %v1282
  %v1353 = vpack.c.b16 %v1283, %v1283
  %v1354 = vpack.c.b16 %v1284, %v1284
  %v1355 = vpack.c.b16 %v1285, %v1285
  %v1356 = vpack.c.b16 %v1286, %v1286
  %v1357 = vpack.c.b16 %v1287, %v1287
  %v1358 = vpack.c.b16 %v1288, %v1288
  %v1359 = vpack.c.b16 %v1289, %v1289
  %v1360 = vpack.c.b16 %v1290, %v1290
  %v1361 = vpack.c.b16 %v1291, %v1291
  %v1362 = vpack.c.b16 %v1292, %v1292
  %v1363 = vpack.c.b16 %v1293, %v1293
  %v2554 = vunpack.c.l.b16 %v69
  %v2555 = vunpack.c.l.b16 %v70
  %v2556 = vunpack.c.l.b16 %v71
  %v2557 = vunpack.c.l.b16 %v72
  %v2558 = vunpack.c.l.b16 %v73
  %v2559 = vunpack.c.l.b16 %v74
  %v2560 = vunpack.c.l.b16 %v75
  %v2561 = vunpack.c.l.b16 %v76
  %v2562 = vunpack.c.l.b16 %v77
  %v2563 = vunpack.c.l.b16 %v78
  %v2564 = vunpack.c.l.b16 %v79
  %v2565 = vunpack.c.l.b16 %v80
  %v2566 = vunpack.c.l.b16 %v81
  %v2567 = vunpack.c.l.b16 %v82
  %v2568 = vunpack.c.l.b16 %v83
  %v2569 = vunpack.c.l.b16 %v84
  %v2570 = vunpack.c.l.b16 %v85
  %v2571 = vunpack.c.l.b16 %v86
  %v2572 = vunpack.c.l.b16 %v87
  %v2573 = vunpack.c.l.b16 %v88
  %v2574 = vunpack.c.l.b16 %v89
  %v2575 = vunpack.c.l.b16 %v90
  %v2576 = vunpack.c.l.b16 %v91
  %v2577 = vunpack.c.l.b16 %v92
  %v2578 = vunpack.c.l.b16 %v93
  %v2579 = vunpack.c.l.b16 %v94
  %v2580 = vunpack.c.l.b16 %v95
  %v2581 = vunpack.c.l.b16 %v96
  %v2582 = vunpack.c.l.b16 %v97
  %v2583 = vunpack.c.l.b16 %v98
  %v2584 = vunpack.c.l.b16 %v99
  %v2585 = vunpack.c.l.b16 %v100
  %v2586 = vunpack.c.l.b16 %v101
  %v2587 = vunpack.c.l.b16 %v102
  %v2588 = vunpack.c.l.b16 %v103
  %v2589 = vunpack.c.l.b16 %v104
  %v2590 = vunpack.c.l.b16 %v105
  %v2591 = vunpack.c.l.b16 %v106
  %v2592 = vunpack.c.l.b16 %v107
  %v2593 = vunpack.c.l.b16 %v108
  %v2594 = vunpack.c.l.b16 %v109
  %v2595 = vunpack.c.l.b16 %v110
  %v2596 = vunpack.c.l.b16 %v111
  %v2597 = vunpack.c.l.b16 %v112
  %v2598 = vunpack.c.l.b16 %v113
  %v2599 = vunpack.c.l.b16 %v114
  %v2600 = vunpack.c.l.b16 %v115
  %v2601 = vunpack.c.l.b16 %v116
  %v2602 = vunpack.c.l.b16 %v117
  %v2603 = vunpack.c.l.b16 %v118
  %v2604 = vunpack.c.l.b16 %v119
  %v2605 = vunpack.c.l.b16 %v120
  %v2606 = vunpack.c.l.b16 %v121
  %v2607 = vunpack.c.l.b16 %v122
  %v2608 = vunpack.c.l.b16 %v123
  %v2609 = vunpack.c.l.b16 %v124
  %v2610 = vunpack.c.l.b16 %v125
  %v2611 = vunpack.c.l.b16 %v126
  %v2612 = vunpack.c.l.b16 %v127
  %v2613 = vunpack.c.l.b16 %v128
  %v2614 = vunpack.c.l.b16 %v129
  %v2615 = vunpack.c.l.b16 %v130
  %v2616 = vunpack.c.l.b16 %v131
  %v2617 = vunpack.c.l.b16 %v132
  %v2618 = vunpack.c.l.b16 %v133
  %v2619 = vunpack.c.l.b16 %v134
  %v2620 = vunpack.c.l.b16 %v135
  %v2621 = vunpack.c.l.b16 %v136
  %v2622 = vunpack.c.l.b16 %v137
  %v2623 = vunpack.c.l.b16 %v138
  %v2624 = vunpack.c.l.b16 %v139
  %v2625 = vunpack.c.l.b16 %v140
  %v2626 = vunpack.c.l.b16 %v141
  %v2627 = vunpack.c.l.b16 %v142
  %v2628 = vunpack.c.l.b16 %v143
  %v2629 = vunpack.c.l.b16 %v144
  %v2630 = vunpack.c.l.b16 %v145
  %v2631 = vunpack.c.l.b16 %v146
  %v2632 = vunpack.c.l.b16 %v147
  %v2633 = vunpack.c.l.b16 %v148
  %v2634 = vunpack.c.l.b16 %v149
  %v2635 = vunpack.c.l.b16 %v150
  %v2636 = vunpack.c.l.b16 %v151
  %v2637 = vunpack.c.l.b16 %v152
  %v2638 = vunpack.c.l.b16 %v153
  %v2639 = vunpack.c.l.b16 %v154
  %v2640 = vunpack.c.l.b16 %v155
  %v2641 = vunpack.c.l.b16 %v156
  %v2642 = vunpack.c.l.b16 %v157
  %v2643 = vunpack.c.l.b16 %v158
  %v2644 = vunpack.c.l.b16 %v159
  %v2645 = vunpack.c.l.b16 %v160
  %v2646 = vunpack.c.l.b16 %v161
  %v2647 = vunpack.c.l.b16 %v162
  %v2648 = vunpack.c.l.b16 %v163
  %v2649 = vunpack.c.l.b16 %v164
  %v2650 = vunpack.c.l.b16 %v165
  %v2651 = vunpack.c.l.b16 %v166
  %v2652 = vunpack.c.l.b16 %v167
  %v2653 = vunpack.c.l.b16 %v168
  %v2654 = vunpack.c.l.b16 %v169
  %v2655 = vunpack.c.l.b16 %v170
  %v2656 = vunpack.c.l.b16 %v171
  %v2657 = vunpack.c.l.b16 %v172
  %v2658 = vunpack.c.l.b16 %v173
  %v2659 = vunpack.c.l.b16 %v174
  %v2660 = vunpack.c.l.b16 %v175
  %v2661 = vunpack.c.l.b16 %v176
  %v2662 = vunpack.c.l.b16 %v177
  %v2663 = vunpack.c.l.b16 %v178
  %v2664 = vunpack.c.l.b16 %v179
  %v2665 = vunpack.c.l.b16 %v180
  %v2666 = vunpack.c.l.b16 %v181
  %v2667 = vunpack.c.l.b16 %v182
  %v2668 = vunpack.c.l.b16 %v183
  %v2669 = vunpack.c.l.b16 %v184
  %v2670 = vunpack.c.l.b16 %v185
  %v2671 = vunpack.c.l.b16 %v186
  %v2672 = vunpack.c.l.b16 %v187
  %v2673 = vunpack.c.l.b16 %v188
  %v2674 = vunpack.c.l.b16 %v189
  %v2675 = vunpack.c.l.b16 %v190
  %v2676 = vunpack.c.l.b16 %v191
  %v2677 = vunpack.c.l.b16 %v192
  %v2678 = vunpack.c.l.b16 %v193
  %v2679 = vunpack.c.l.b16 %v194
  %v2680 = vunpack.c.l.b16 %v195
  %v2681 = vunpack.c.l.b16 %v196
  %v2682 = vunpack.c.l.b16 %v197
  %v2683 = vunpack.c.l.b16 %v198
  %v2684 = vunpack.c.l.b16 %v199
  %v2685 = vunpack.c.l.b16 %v200
  %v2686 = vunpack.c.l.b16 %v201
  %v2687 = vunpack.c.l.b16 %v202
  %v2688 = vunpack.c.l.b16 %v203
  %v2689 = vunpack.c.l.b16 %v204
  %v2690 = vunpack.c.l.b16 %v205
  %v2691 = vunpack.c.l.b16 %v206
  %v2692 = vunpack.c.l.b16 %v207
  %v2693 = vunpack.c.l.b16 %v208
  %v2694 = vunpack.c.l.b16 %v209
  %v2695 = vunpack.c.l.b16 %v210
  %v2696 = vunpack.c.l.b16 %v211
  %v2697 = vunpack.c.l.b16 %v212
  %v2698 = vunpack.c.l.b16 %v213
  %v2699 = vunpack.c.l.b16 %v214
  %v2700 = vunpack.c.l.b16 %v215
  %v2701 = vunpack.c.l.b16 %v216
  %v2702 = vunpack.c.l.b16 %v217
  %v2703 = vunpack.c.l.b16 %v218
  %v2704 = vunpack.c.l.b16 %v219
  %v2705 = vunpack.c.l.b16 %v220
  %v2706 = vunpack.c.l.b16 %v221
  %v2707 = vunpack.c.l.b16 %v222
  %v2708 = vunpack.c.l.b16 %v223
  %v2709 = vunpack.c.l.b16 %v224
  %v2710 = vunpack.c.l.b16 %v225
  %v2711 = vunpack.c.l.b16 %v226
  %v2712 = vunpack.c.l.b16 %v227
  %v2713 = vunpack.c.l.b16 %v228
  %v2714 = vunpack.c.l.b16 %v229
  %v2715 = vunpack.c.l.b16 %v230
  %v2716 = vunpack.c.l.b16 %v231
  %v2717 = vunpack.c.l.b16 %v232
  %v2718 = vunpack.c.l.b16 %v233
  %v2719 = vunpack.c.l.b16 %v234
  %v2720 = vunpack.c.l.b16 %v235
  %v2721 = vunpack.c.l.b16 %v236
  %v2722 = vunpack.c.l.b16 %v237
  %v2723 = vunpack.c.l.b16 %v238
  %v2724 = vunpack.c.l.b16 %v239
  %v2725 = vunpack.c.l.b16 %v240
  %v2726 = vunpack.c.l.b16 %v241
  %v2727 = vunpack.c.l.b16 %v242
  %v2728 = vunpack.c.l.b16 %v243
  %v2729 = vunpack.c.l.b16 %v244
  %v2730 = vunpack.c.l.b16 %v245
  %v2731 = vunpack.c.l.b16 %v246
  %v2732 = vunpack.c.l.b16 %v247
  %v2733 = vunpack.c.l.b16 %v248
  %v2734 = vunpack.c.l.b16 %v249
  %v2735 = vunpack.c.l.b16 %v250
  %v2736 = vunpack.c.l.b16 %v251
  %v2737 = vunpack.c.l.b16 %v252
  %v2738 = vunpack.c.l.b16 %v253
  %v2739 = vunpack.c.l.b16 %v254
  %v2740 = vunpack.c.l.b16 %v255
  %v2741 = vunpack.c.l.b16 %v256
  %v2742 = vunpack.c.l.b16 %v257
  %v2743 = vunpack.c.l.b16 %v258
  %v2744 = vunpack.c.l.b16 %v259
  %v2745 = vunpack.c.l.b16 %v260
  %v2746 = vunpack.c.l.b16 %v261
  %v2747 = vunpack.c.l.b16 %v262
  %v2748 = vunpack.c.l.b16 %v263
  %v2749 = vunpack.c.l.b16 %v264
  %v2750 = vunpack.c.l.b16 %v265
  %v2751 = vunpack.c.l.b16 %v266
  %v2752 = vunpack.c.l.b16 %v267
  %v2753 = vunpack.c.l.b16 %v268
  %v2754 = vunpack.c.l.b16 %v269
  %v2755 = vunpack.c.l.b16 %v270
  %v2756 = vunpack.c.l.b16 %v271
  %v2757 = vunpack.c.l.b16 %v272
  %v2758 = vunpack.c.l.b16 %v273
  %v2759 = vunpack.c.l.b16 %v274
  %v2760 = vunpack.c.l.b16 %v275
  %v2761 = vunpack.c.l.b16 %v276
  %v2762 = vunpack.c.l.b16 %v277
  %v2763 = vunpack.c.l.b16 %v278
  %v2764 = vunpack.c.l.b16 %v279
  %v2765 = vunpack.c.l.b16 %v280
  %v2766 = vunpack.c.l.b16 %v281
  %v2767 = vunpack.c.l.b16 %v282
  %v2768 = vunpack.c.l.b16 %v283
  %v2769 = vunpack.c.l.b16 %v284
  %v2770 = vunpack.c.l.b16 %v285
  %v2771 = vunpack.c.l.b16 %v286
  %v2772 = vunpack.c.l.b16 %v287
  %v2773 = vunpack.c.l.b16 %v288
  %v2774 = vunpack.c.l.b16 %v289
  %v2775 = vunpack.c.l.b16 %v290
  %v2776 = vunpack.c.l.b16 %v291
  %v2777 = vunpack.c.l.b16 %v292
  %v2778 = vunpack.c.l.b16 %v293
  %v2779 = vunpack.c.l.b16 %v294
  %v2780 = vunpack.c.l.b16 %v295
  %v2781 = vunpack.c.l.b16 %v296
  %v2782 = vunpack.c.l.b16 %v297
  %v2783 = vunpack.c.l.b16 %v298
  %v2784 = vunpack.c.l.b16 %v299
  %v2785 = vunpack.c.l.b16 %v300
  %v2786 = vunpack.c.l.b16 %v301
  %v2787 = vunpack.c.l.b16 %v302
  %v2788 = vunpack.c.l.b16 %v303
  %v2789 = vunpack.c.l.b16 %v304
  %v2790 = vunpack.c.l.b16 %v305
  %v2791 = vunpack.c.l.b16 %v306
  %v2792 = vunpack.c.l.b16 %v307
  %v2793 = vunpack.c.l.b16 %v308
  %v2794 = vunpack.c.l.b16 %v309
  %v2795 = vunpack.c.l.b16 %v310
  %v2796 = vunpack.c.l.b16 %v311
  %v2797 = vunpack.c.l.b16 %v312
  %v2798 = vunpack.c.l.b16 %v313
  %v2799 = vunpack.c.l.b16 %v314
  %v2800 = vunpack.c.l.b16 %v315
  %v2801 = vunpack.c.l.b16 %v316
  %v2802 = vunpack.c.l.b16 %v317
  %v2803 = vunpack.c.l.b16 %v318
  %v2804 = vunpack.c.l.b16 %v319
  %v2805 = vunpack.c.l.b16 %v320
  %v2806 = vunpack.c.l.b16 %v321
  %v2807 = vunpack.c.l.b16 %v322
  %v2808 = vunpack.c.l.b16 %v323
  %v2809 = vunpack.c.l.b16 %v324
  %v2810 = vunpack.c.l.b16 %v325
  %v2811 = vunpack.c.l.b16 %v326
  %v2812 = vunpack.c.l.b16 %v327
  %v2813 = vunpack.c.l.b16 %v328
  %v2814 = vunpack.c.l.b16 %v329
  %v2815 = vunpack.c.l.b16 %v330
  %v2816 = vunpack.c.l.b16 %v331
  %v2817 = vunpack.c.l.b16 %v332
  %v2818 = vunpack.c.l.b16 %v333
  %v2819 = vunpack.c.l.b16 %v334
  %v2820 = vunpack.c.l.b16 %v335
  %v2821 = vunpack.c.l.b16 %v336
  %v2822 = vunpack.c.l.b16 %v337
  %v2823 = vunpack.c.l.b16 %v338
  %v2824 = vunpack.c.l.b16 %v339
  %v2825 = vunpack.c.l.b16 %v340
  %v2826 = vunpack.c.l.b16 %v341
  %v2827 = vunpack.c.l.b16 %v342
  %v2828 = vunpack.c.l.b16 %v343
  %v2829 = vunpack.c.l.b16 %v344
  %v2830 = vunpack.c.l.b16 %v345
  %v2831 = vunpack.c.l.b16 %v346
  %v2832 = vunpack.c.l.b16 %v347
  %v2833 = vunpack.c.l.b16 %v348
  %v2834 = vunpack.c.l.b16 %v349
  %v2835 = vunpack.c.l.b16 %v350
  %v2836 = vunpack.c.l.b16 %v351
  %v2837 = vunpack.c.l.b16 %v352
  %v2838 = vunpack.c.l.b16 %v353
  %v2839 = vunpack.c.l.b16 %v354
  %v2840 = vunpack.c.l.b16 %v355
  %v2841 = vunpack.c.l.b16 %v356
  %v2842 = vunpack.c.l.b16 %v357
  %v2843 = vunpack.c.l.b16 %v358
  %v2844 = vunpack.c.l.b16 %v359
  %v2845 = vunpack.c.l.b16 %v360
  %v2846 = vunpack.c.l.b16 %v361
  %v2847 = vunpack.c.l.b16 %v362
  %v2848 = vunpack.c.l.b16 %v363
  %v2849 = vunpack.c.l.b16 %v364
  %v2850 = vunpack.c.l.b16 %v365
  %v2851 = vunpack.c.l.b16 %v366
  %v2852 = vunpack.c.l.b16 %v367
  %v2853 = vunpack.c.l.b16 %v368
  %v2854 = vunpack.c.l.b16 %v369
  %v2855 = vunpack.c.l.b16 %v370
  %v2856 = vunpack.c.l.b16 %v371
  %v2857 = vunpack.c.l.b16 %v372
  %v2858 = vunpack.c.l.b16 %v373
  %v2859 = vunpack.c.l.b16 %v374
  %v2860 = vunpack.c.l.b16 %v375
  %v2861 = vunpack.c.l.b16 %v376
  %v2862 = vunpack.c.l.b16 %v377
  %v2863 = vunpack.c.l.b16 %v378
  %v2864 = vunpack.c.l.b16 %v379
  %v2865 = vunpack.c.l.b16 %v380
  %v2866 = vunpack.c.l.b16 %v381
  %v2867 = vunpack.c.l.b16 %v382
  %v2868 = vunpack.c.l.b16 %v383
  %v2869 = vunpack.c.l.b16 %v384
  %v2870 = vunpack.c.l.b16 %v385
  %v2871 = vunpack.c.l.b16 %v386
  %v2872 = vunpack.c.l.b16 %v387
  %v2873 = vunpack.c.l.b16 %v388
  %v2874 = vunpack.c.l.b16 %v389
  %v2875 = vunpack.c.l.b16 %v390
  %v2876 = vunpack.c.l.b16 %v391
  %v2877 = vunpack.c.l.b16 %v392
  %v2878 = vunpack.c.l.b16 %v393
  %v2879 = vunpack.c.l.b16 %v394
  %v2880 = vunpack.c.l.b16 %v395
  %v2881 = vunpack.c.l.b16 %v396
  %v2882 = vunpack.c.l.b16 %v397
  %v2883 = vunpack.c.l.b16 %v398
  %v2884 = vunpack.c.l.b16 %v399
  %v2885 = vunpack.c.l.b16 %v400
  %v2886 = vunpack.c.l.b16 %v401
  %v2887 = vunpack.c.l.b16 %v402
  %v2888 = vunpack.c.l.b16 %v403
  %v2889 = vunpack.c.l.b16 %v404
  %v2890 = vunpack.c.l.b16 %v405
  %v2891 = vunpack.c.l.b16 %v406
  %v2892 = vunpack.c.l.b16 %v407
  %v2893 = vunpack.c.l.b16 %v408
  %v2894 = vunpack.c.l.b16 %v409
  %v2895 = vunpack.c.l.b16 %v410
  %v2896 = vunpack.c.l.b16 %v411
  %v2897 = vunpack.c.l.b16 %v412
  %v2898 = vunpack.c.l.b16 %v413
  %v2899 = vunpack.c.l.b16 %v414
  %v2900 = vunpack.c.l.b16 %v415
  %v2901 = vunpack.c.l.b16 %v416
  %v2902 = vunpack.c.l.b16 %v417
  %v2903 = vunpack.c.l.b16 %v418
  %v2904 = vunpack.c.l.b16 %v419
  %v2905 = vunpack.c.l.b16 %v420
  %v2906 = vunpack.c.l.b16 %v421
  %v2907 = vunpack.c.l.b16 %v422
  %v2908 = vunpack.c.l.b16 %v423
  %v2909 = vunpack.c.l.b16 %v424
  %v2910 = vunpack.c.l.b16 %v425
  %v2911 = vunpack.c.l.b16 %v426
  %v2912 = vunpack.c.l.b16 %v427
  %v2913 = vunpack.c.l.b16 %v428
  %v2914 = vunpack.c.l.b16 %v429
  %v2915 = vunpack.c.l.b16 %v430
  %v2916 = vunpack.c.l.b16 %v431
  %v2917 = vunpack.c.l.b16 %v432
  %v2918 = vunpack.c.l.b16 %v433
  %v2919 = vunpack.c.l.b16 %v434
  %v2920 = vunpack.c.l.b16 %v435
  %v2921 = vunpack.c.l.b16 %v436
  %v2922 = vunpack.c.l.b16 %v437
  %v2923 = vunpack.c.l.b16 %v438
  %v2924 = vunpack.c.l.b16 %v439
  %v2925 = vunpack.c.l.b16 %v440
  %v2926 = vunpack.c.l.b16 %v441
  %v2927 = vunpack.c.l.b16 %v442
  %v2928 = vunpack.c.l.b16 %v443
  %v2929 = vunpack.c.l.b16 %v444
  %v2930 = vunpack.c.l.b16 %v445
  %v2931 = vunpack.c.l.b16 %v446
  %v2932 = vunpack.c.l.b16 %v447
  %v2933 = vunpack.c.l.b16 %v448
  %v2934 = vunpack.c.l.b16 %v449
  %v2935 = vunpack.c.l.b16 %v450
  %v2936 = vunpack.c.l.b16 %v451
  %v2937 = vunpack.c.l.b16 %v452
  %v2938 = vunpack.c.l.b16 %v453
  %v2939 = vunpack.c.l.b16 %v454
  %v2940 = vunpack.c.l.b16 %v455
  %v2941 = vunpack.c.l.b16 %v456
  %v2942 = vunpack.c.l.b16 %v457
  %v2943 = vunpack.c.l.b16 %v458
  %v2944 = vunpack.c.l.b16 %v459
  %v2945 = vunpack.c.l.b16 %v460
  %v2946 = vunpack.c.l.b16 %v461
  %v2947 = vunpack.c.l.b16 %v462
  %v2948 = vunpack.c.l.b16 %v463
  %v2949 = vunpack.c.l.b16 %v464
  %v2950 = vunpack.c.l.b16 %v465
  %v2951 = vunpack.c.l.b16 %v466
  %v2952 = vunpack.c.l.b16 %v467
  %v2953 = vunpack.c.l.b16 %v468
  %v2954 = vunpack.c.l.b16 %v469
  %v2955 = vunpack.c.l.b16 %v470
  %v2956 = vunpack.c.l.b16 %v471
  %v2957 = vunpack.c.l.b16 %v472
  %v2958 = vunpack.c.l.b16 %v473
  %v2959 = vunpack.c.l.b16 %v474
  %v2960 = vunpack.c.l.b16 %v475
  %v2961 = vunpack.c.l.b16 %v476
  %v2962 = vunpack.c.l.b16 %v477
  %v2963 = vunpack.c.l.b16 %v478
  %v2964 = vunpack.c.l.b16 %v479
  %v2965 = vunpack.c.l.b16 %v480
  %v2966 = vunpack.c.l.b16 %v481
  %v2967 = vunpack.c.l.b16 %v482
  %v2968 = vunpack.c.l.b16 %v483
  %v2969 = vunpack.c.l.b16 %v484
  %v2970 = vunpack.c.l.b16 %v485
  %v2971 = vunpack.c.l.b16 %v486
  %v2972 = vunpack.c.l.b16 %v487
  %v2973 = vunpack.c.l.b16 %v488
  %v2974 = vunpack.c.l.b16 %v489
  %v2975 = vunpack.c.l.b16 %v490
  %v2976 = vunpack.c.l.b16 %v491
  %v2977 = vunpack.c.l.b16 %v492
  %v2978 = vunpack.c.l.b16 %v493
  %v2979 = vunpack.c.l.b16 %v494
  %v2980 = vunpack.c.l.b16 %v495
  %v2981 = vunpack.c.l.b16 %v496
  %v2982 = vunpack.c.l.b16 %v497
  %v2983 = vunpack.c.l.b16 %v498
  %v2984 = vunpack.c.l.b16 %v499
  %v2985 = vunpack.c.l.b16 %v500
  %v2986 = vunpack.c.l.b16 %v501
  %v2987 = vunpack.c.l.b16 %v502
  %v2988 = vunpack.c.l.b16 %v503
  %v2989 = vunpack.c.l.b16 %v504
  %v2990 = vunpack.c.l.b16 %v505
  %v2991 = vunpack.c.l.b16 %v506
  %v2992 = vunpack.c.l.b16 %v507
  %v2993 = vunpack.c.l.b16 %v508
  %v2994 = vunpack.c.l.b16 %v509
  %v2995 = vunpack.c.l.b16 %v510
  %v2996 = vunpack.c.l.b16 %v511
  %v2997 = vunpack.c.l.b16 %v512
  %v2998 = vunpack.c.l.b16 %v513
  %v2999 = vunpack.c.l.b16 %v514
  %v3000 = vunpack.c.l.b16 %v515
  %v3001 = vunpack.c.l.b16 %v516
  %v3002 = vunpack.c.l.b16 %v517
  %v3003 = vunpack.c.l.b16 %v518
  %v3004 = vunpack.c.l.b16 %v519
  %v3005 = vunpack.c.l.b16 %v520
  %v3006 = vunpack.c.l.b16 %v521
  %v3007 = vunpack.c.l.b16 %v522
  %v3008 = vunpack.c.l.b16 %v523
  %v3009 = vunpack.c.l.b16 %v524
  %v3010 = vunpack.c.l.b16 %v525
  %v3011 = vunpack.c.l.b16 %v526
  %v3012 = vunpack.c.l.b16 %v527
  %v3013 = vunpack.c.l.b16 %v528
  %v3014 = vunpack.c.l.b16 %v529
  %v3015 = vunpack.c.l.b16 %v530
  %v3016 = vunpack.c.l.b16 %v531
  %v3017 = vunpack.c.l.b16 %v532
  %v3018 = vunpack.c.l.b16 %v533
  %v3019 = vunpack.c.l.b16 %v534
  %v3020 = vunpack.c.l.b16 %v535
  %v3021 = vunpack.c.l.b16 %v536
  %v3022 = vunpack.c.l.b16 %v537
  %v3023 = vunpack.c.l.b16 %v538
  %v3024 = vunpack.c.l.b16 %v539
  %v3025 = vunpack.c.l.b16 %v540
  %v3026 = vunpack.c.l.b16 %v541
  %v3027 = vunpack.c.l.b16 %v542
  %v3028 = vunpack.c.l.b16 %v543
  %v3029 = vunpack.c.l.b16 %v544
  %v3030 = vunpack.c.l.b16 %v545
  %v3031 = vunpack.c.l.b16 %v546
  %v3032 = vunpack.c.l.b16 %v547
  %v3033 = vunpack.c.l.b16 %v548
  %v3034 = vunpack.c.l.b16 %v549
  %v3035 = vunpack.c.l.b16 %v550
  %v3036 = vunpack.c.l.b16 %v551
  %v3037 = vunpack.c.l.b16 %v552
  %v3038 = vunpack.c.l.b16 %v553
  %v3039 = vunpack.c.l.b16 %v554
  %v3040 = vunpack.c.l.b16 %v555
  %v3041 = vunpack.c.l.b16 %v556
  %v3042 = vunpack.c.l.b16 %v557
  %v3043 = vunpack.c.l.b16 %v558
  %v3044 = vunpack.c.l.b16 %v559
  %v3045 = vunpack.c.l.b16 %v560
  %v3046 = vunpack.c.l.b16 %v561
  %v3047 = vunpack.c.l.b16 %v562
  %v3048 = vunpack.c.l.b16 %v563
  %v3049 = vunpack.c.l.b16 %v564
  %v3050 = vunpack.c.l.b16 %v565
  %v3051 = vunpack.c.l.b16 %v566
  %v3052 = vunpack.c.l.b16 %v567
  %v3053 = vunpack.c.l.b16 %v568
  %v3054 = vunpack.c.l.b16 %v569
  %v3055 = vunpack.c.l.b16 %v570
  %v3056 = vunpack.c.l.b16 %v571
  %v3057 = vunpack.c.l.b16 %v572
  %v3058 = vunpack.c.l.b16 %v573
  %v3059 = vunpack.c.l.b16 %v574
  %v3060 = vunpack.c.l.b16 %v575
  %v3061 = vunpack.c.l.b16 %v576
  %v3062 = vunpack.c.l.b16 %v577
  %v3063 = vunpack.c.l.b16 %v578
  %v3064 = vunpack.c.l.b16 %v579
  %v3065 = vunpack.c.l.b16 %v580
  %v3066 = vunpack.c.l.b16 %v581
  %v3067 = vunpack.c.l.b16 %v582
  %v3068 = vunpack.c.l.b16 %v583
  %v3069 = vunpack.c.l.b16 %v584
  %v3070 = vunpack.c.l.b16 %v585
  %v3071 = vunpack.c.l.b16 %v586
  %v3072 = vunpack.c.l.b16 %v587
  %v3073 = vunpack.c.l.b16 %v588
  %v3074 = vunpack.c.l.b16 %v589
  %v3075 = vunpack.c.l.b16 %v590
  %v3076 = vunpack.c.l.b16 %v591
  %v3077 = vunpack.c.l.b16 %v592
  %v3078 = vunpack.c.l.b16 %v593
  %v3079 = vunpack.c.l.b16 %v594
  %v3080 = vunpack.c.l.b16 %v595
  %v3081 = vunpack.c.l.b16 %v596
  %v3082 = vunpack.c.l.b16 %v597
  %v3083 = vunpack.c.l.b16 %v598
  %v3084 = vunpack.c.l.b16 %v599
  %v3085 = vunpack.c.l.b16 %v600
  %v3086 = vunpack.c.l.b16 %v601
  %v3087 = vunpack.c.l.b16 %v602
  %v3088 = vunpack.c.l.b16 %v603
  %v3089 = vunpack.c.l.b16 %v604
  %v3090 = vunpack.c.l.b16 %v605
  %v3091 = vunpack.c.l.b16 %v606
  %v3092 = vunpack.c.l.b16 %v607
  %v3093 = vunpack.c.l.b16 %v608
  %v3094 = vunpack.c.l.b16 %v609
  %v3095 = vunpack.c.l.b16 %v610
  %v3096 = vunpack.c.l.b16 %v611
  %v3097 = vunpack.c.l.b16 %v612
  %v3098 = vunpack.c.l.b16 %v613
  %v3099 = vunpack.c.l.b16 %v614
  %v3100 = vunpack.c.l.b16 %v615
  %v3101 = vunpack.c.l.b16 %v616
  %v3102 = vunpack.c.l.b16 %v617
  %v3103 = vunpack.c.l.b16 %v618
  %v3104 = vunpack.c.l.b16 %v619
  %v3105 = vunpack.c.l.b16 %v620
  %v3106 = vunpack.c.l.b16 %v621
  %v3107 = vunpack.c.l.b16 %v622
  %v3108 = vunpack.c.l.b16 %v623
  %v3109 = vunpack.c.l.b16 %v624
  %v3110 = vunpack.c.l.b16 %v625
  %v3111 = vunpack.c.l.b16 %v626
  %v3112 = vunpack.c.l.b16 %v627
  %v3113 = vunpack.c.l.b16 %v628
  %v3114 = vunpack.c.l.b16 %v629
  %v3115 = vunpack.c.l.b16 %v630
  %v3116 = vunpack.c.l.b16 %v631
  %v3117 = vunpack.c.l.b16 %v632
  %v3118 = vunpack.c.l.b16 %v633
  %v3119 = vunpack.c.l.b16 %v634
  %v3120 = vunpack.c.l.b16 %v635
  %v3121 = vunpack.c.l.b16 %v636
  %v3122 = vunpack.c.l.b16 %v637
  %v3123 = vunpack.c.l.b16 %v638
  %v3124 = vunpack.c.l.b16 %v639
  %v3125 = vunpack.c.l.b16 %v640
  %v3126 = vunpack.c.l.b16 %v641
  %v3127 = vunpack.c.l.b16 %v642
  %v3128 = vunpack.c.l.b16 %v643
  %v3129 = vunpack.c.l.b16 %v644
  %v3130 = vunpack.c.l.b16 %v645
  %v3131 = vunpack.c.l.b16 %v646
  %v3132 = vunpack.c.l.b16 %v647
  %v3133 = vunpack.c.l.b16 %v648
  %v3134 = vunpack.c.l.b16 %v649
  %v3135 = vunpack.c.l.b16 %v650
  %v3136 = vunpack.c.l.b16 %v651
  %v3137 = vunpack.c.l.b16 %v652
  %v3138 = vunpack.c.l.b16 %v653
  %v3139 = vunpack.c.l.b16 %v654
  %v3140 = vunpack.c.l.b16 %v655
  %v3141 = vunpack.c.l.b16 %v656
  %v3142 = vunpack.c.l.b16 %v657
  %v3143 = vunpack.c.l.b16 %v658
  %v3144 = vunpack.c.l.b16 %v659
  %v3145 = vunpack.c.l.b16 %v660
  %v3146 = vunpack.c.l.b16 %v661
  %v3147 = vunpack.c.l.b16 %v662
  %v3148 = vunpack.c.l.b16 %v663
  %v3149 = vunpack.c.l.b16 %v664
  %v3150 = vunpack.c.l.b16 %v665
  %v3151 = vunpack.c.l.b16 %v666
  %v3152 = vunpack.c.l.b16 %v667
  %v3153 = vunpack.c.l.b16 %v668
  %v3154 = vunpack.c.l.b16 %v669
  %v3155 = vunpack.c.l.b16 %v670
  %v3156 = vunpack.c.l.b16 %v671
  %v3157 = vunpack.c.l.b16 %v672
  %v3158 = vunpack.c.l.b16 %v673
  %v3159 = vunpack.c.l.b16 %v674
  %v3160 = vunpack.c.l.b16 %v675
  %v3161 = vunpack.c.l.b16 %v676
  %v3162 = vunpack.c.l.b16 %v677
  %v3163 = vunpack.c.l.b16 %v678
  %v3164 = vunpack.c.l.b16 %v679
  %v3165 = vunpack.c.l.b16 %v680
  %v3166 = vunpack.c.l.b16 %v681
  %v3167 = vunpack.c.l.b16 %v682
  %v3168 = vunpack.c.l.b16 %v683
  %v3169 = vunpack.c.l.b16 %v684
  %v3170 = vunpack.c.l.b16 %v685
  %v3171 = vunpack.c.l.b16 %v686
  %v3172 = vunpack.c.l.b16 %v687
  %v3173 = vunpack.c.l.b16 %v688
  %v3174 = vunpack.c.l.b16 %v689
  %v3175 = vunpack.c.l.b16 %v690
  %v3176 = vunpack.c.l.b16 %v691
  %v3177 = vunpack.c.l.b16 %v692
  %v3178 = vunpack.c.l.b16 %v693
  %v3179 = vunpack.c.l.b16 %v694
  %v3180 = vunpack.c.l.b16 %v695
  %v3181 = vunpack.c.l.b16 %v696
  %v3182 = vunpack.c.l.b16 %v697
  %v3183 = vunpack.c.l.b16 %v698
  %v3184 = vunpack.c.l.b16 %v699
  %v3185 = vunpack.c.l.b16 %v700
  %v3186 = vunpack.c.l.b16 %v701
  %v3187 = vunpack.c.l.b16 %v702
  %v3188 = vunpack.c.l.b16 %v703
  %v3189 = vunpack.c.l.b16 %v704
  %v3190 = vunpack.c.l.b16 %v705
  %v3191 = vunpack.c.l.b16 %v706
  %v3192 = vunpack.c.l.b16 %v707
  %v3193 = vunpack.c.l.b16 %v708
  %v3194 = vunpack.c.l.b16 %v709
  %v3195 = vunpack.c.l.b16 %v710
  %v3196 = vunpack.c.l.b16 %v711
  %v3197 = vunpack.c.l.b16 %v712
  %v3198 = vunpack.c.l.b16 %v713
  %v3199 = vunpack.c.l.b16 %v714
  %v3200 = vunpack.c.l.b16 %v715
  %v3201 = vunpack.c.l.b16 %v716
  %v3202 = vunpack.c.l.b16 %v717
  %v3203 = vunpack.c.l.b16 %v718
  %v3204 = vunpack.c.l.b16 %v719
  %v3205 = vunpack.c.l.b16 %v720
  %v3206 = vunpack.c.l.b16 %v721
  %v3207 = vunpack.c.l.b16 %v722
  %v3208 = vunpack.c.l.b16 %v723
  %v3209 = vunpack.c.l.b16 %v724
  %v3210 = vunpack.c.l.b16 %v725
  %v3211 = vunpack.c.l.b16 %v726
  %v3212 = vunpack.c.l.b16 %v727
  %v3213 = vunpack.c.l.b16 %v728
  %v3214 = vunpack.c.l.b16 %v729
  %v3215 = vunpack.c.l.b16 %v730
  %v3216 = vunpack.c.l.b16 %v731
  %v3217 = vunpack.c.l.b16 %v732
  %v3218 = vunpack.c.l.b16 %v733
  %v3219 = vunpack.c.l.b16 %v734
  %v3220 = vunpack.c.l.b16 %v735
  %v3221 = vunpack.c.l.b16 %v736
  %v3222 = vunpack.c.l.b16 %v737
  %v3223 = vunpack.c.l.b16 %v738
  %v3224 = vunpack.c.l.b16 %v739
  %v3225 = vunpack.c.l.b16 %v740
  %v3226 = vunpack.c.l.b16 %v741
  %v3227 = vunpack.c.l.b16 %v742
  %v3228 = vunpack.c.l.b16 %v743
  %v3229 = vunpack.c.l.b16 %v744
  %v3230 = vunpack.c.l.b16 %v745
  %v3231 = vunpack.c.l.b16 %v746
  %v3232 = vunpack.c.l.b16 %v747
  %v3233 = vunpack.c.l.b16 %v748
  %v3234 = vunpack.c.l.b16 %v749
  %v3235 = vunpack.c.l.b16 %v750
  %v3236 = vunpack.c.l.b16 %v751
  %v3237 = vunpack.c.l.b16 %v752
  %v3238 = vunpack.c.l.b16 %v753
  %v3239 = vunpack.c.l.b16 %v754
  %v3240 = vunpack.c.l.b16 %v755
  %v3241 = vunpack.c.l.b16 %v756
  %v3242 = vunpack.c.l.b16 %v757
  %v3243 = vunpack.c.l.b16 %v758
  %v3244 = vunpack.c.l.b16 %v759
  %v3245 = vunpack.c.l.b16 %v760
  %v3246 = vunpack.c.l.b16 %v761
  %v3247 = vunpack.c.l.b16 %v762
  %v3248 = vunpack.c.l.b16 %v763
  %v3249 = vunpack.c.l.b16 %v764
  %v3250 = vunpack.c.l.b16 %v765
  %v3251 = vunpack.c.l.b16 %v766
  %v3252 = vunpack.c.l.b16 %v767
  %v3253 = vunpack.c.l.b16 %v768
  %v3254 = vunpack.c.l.b16 %v769
  %v3255 = vunpack.c.l.b16 %v770
  %v3256 = vunpack.c.l.b16 %v771
  %v3257 = vunpack.c.l.b16 %v772
  %v3258 = vunpack.c.l.b16 %v773
  %v3259 = vunpack.c.l.b16 %v774
  %v3260 = vunpack.c.l.b16 %v775
  %v3261 = vunpack.c.l.b16 %v776
  %v3262 = vunpack.c.l.b16 %v777
  %v3263 = vunpack.c.l.b16 %v778
  %v3264 = vunpack.c.l.b16 %v779
  %v3265 = vunpack.c.l.b16 %v780
  %v3266 = vunpack.c.l.b16 %v781
  %v3267 = vunpack.c.l.b16 %v782
  %v3268 = vunpack.c.l.b16 %v783
  %v3269 = vunpack.c.l.b16 %v784
  %v3270 = vunpack.c.l.b16 %v785
  %v3271 = vunpack.c.l.b16 %v786
  %v3272 = vunpack.c.l.b16 %v787
  %v3273 = vunpack.c.l.b16 %v788
  %v3274 = vunpack.c.l.b16 %v789
  %v3275 = vunpack.c.l.b16 %v790
  %v3276 = vunpack.c.l.b16 %v791
  %v3277 = vunpack.c.l.b16 %v792
  %v3278 = vunpack.c.l.b16 %v793
  %v3279 = vunpack.c.l.b16 %v794
  %v3280 = vunpack.c.l.b16 %v795
  %v3281 = vunpack.c.l.b16 %v796
  %v3282 = vunpack.c.l.b16 %v797
  %v3283 = vunpack.c.l.b16 %v798
  %v3284 = vunpack.c.l.b16 %v799
  %v3285 = vunpack.c.l.b16 %v800
  %v3286 = vunpack.c.l.b16 %v801
  %v3287 = vunpack.c.l.b16 %v802
  %v3288 = vunpack.c.l.b16 %v803
  %v3289 = vunpack.c.l.b16 %v804
  %v3290 = vunpack.c.l.b16 %v805
  %v3291 = vunpack.c.l.b16 %v806
  %v3292 = vunpack.c.l.b16 %v807
  %v3293 = vunpack.c.l.b16 %v808
  %v3294 = vunpack.c.l.b16 %v809
  %v3295 = vunpack.c.l.b16 %v810
  %v3296 = vunpack.c.l.b16 %v811
  %v3297 = vunpack.c.l.b16 %v812
  %v3298 = vunpack.c.l.b16 %v813
  %v3299 = vunpack.c.l.b16 %v814
  %v3300 = vunpack.c.l.b16 %v815
  %v3301 = vunpack.c.l.b16 %v816
  %v3302 = vunpack.c.l.b16 %v817
  %v3303 = vunpack.c.l.b16 %v818
  %v3304 = vunpack.c.l.b16 %v819
  %v3305 = vunpack.c.l.b16 %v820
  %v3306 = vunpack.c.l.b16 %v821
  %v3307 = vunpack.c.l.b16 %v822
  %v3308 = vunpack.c.l.b16 %v823
  %v3309 = vunpack.c.l.b16 %v824
  %v3310 = vunpack.c.l.b16 %v825
  %v3311 = vunpack.c.l.b16 %v826
  %v3312 = vunpack.c.l.b16 %v827
  %v3313 = vunpack.c.l.b16 %v828
  %v3314 = vunpack.c.l.b16 %v829
  %v3315 = vunpack.c.l.b16 %v830
  %v3316 = vunpack.c.l.b16 %v831
  %v3317 = vunpack.c.l.b16 %v832
  %v3318 = vunpack.c.l.b16 %v833
  %v3319 = vunpack.c.l.b16 %v834
  %v3320 = vunpack.c.l.b16 %v835
  %v3321 = vunpack.c.l.b16 %v836
  %v3322 = vunpack.c.l.b16 %v837
  %v3323 = vunpack.c.l.b16 %v838
  %v3324 = vunpack.c.l.b16 %v839
  %v3325 = vunpack.c.l.b16 %v840
  %v3326 = vunpack.c.l.b16 %v841
  %v3327 = vunpack.c.l.b16 %v842
  %v3328 = vunpack.c.l.b16 %v843
  %v3329 = vunpack.c.l.b16 %v844
  %v3330 = vunpack.c.l.b16 %v845
  %v3331 = vunpack.c.l.b16 %v846
  %v3332 = vunpack.c.l.b16 %v847
  %v3333 = vunpack.c.l.b16 %v848
  %v3334 = vunpack.c.l.b16 %v849
  %v3335 = vunpack.c.l.b16 %v850
  %v3336 = vunpack.c.l.b16 %v851
  %v3337 = vunpack.c.l.b16 %v852
  %v3338 = vunpack.c.l.b16 %v853
  %v3339 = vunpack.c.l.b16 %v854
  %v3340 = vunpack.c.l.b16 %v855
  %v3341 = vunpack.c.l.b16 %v856
  %v3342 = vunpack.c.l.b16 %v857
  %v3343 = vunpack.c.l.b16 %v858
  %v3344 = vunpack.c.l.b16 %v859
  %v3345 = vunpack.c.l.b16 %v860
  %v3346 = vunpack.c.l.b16 %v861
  %v3347 = vunpack.c.l.b16 %v862
  %v3348 = vunpack.c.l.b16 %v863
  %v3349 = vunpack.c.l.b16 %v864
  %v3350 = vunpack.c.l.b16 %v865
  %v3351 = vunpack.c.l.b16 %v866
  %v3352 = vunpack.c.l.b16 %v867
  %v3353 = vunpack.c.l.b16 %v868
  %v3354 = vunpack.c.l.b16 %v869
  %v3355 = vunpack.c.l.b16 %v870
  %v3356 = vunpack.c.l.b16 %v871
  %v3357 = vunpack.c.l.b16 %v872
  %v3358 = vunpack.c.l.b16 %v873
  %v3359 = vunpack.c.l.b16 %v874
  %v3360 = vunpack.c.l.b16 %v875
  %v3361 = vunpack.c.l.b16 %v876
  %v3362 = vunpack.c.l.b16 %v877
  %v3363 = vunpack.c.l.b16 %v878
  %v3364 = vunpack.c.l.b16 %v879
  %v3365 = vunpack.c.l.b16 %v880
  %v3366 = vunpack.c.l.b16 %v881
  %v3367 = vunpack.c.l.b16 %v882
  %v3368 = vunpack.c.l.b16 %v883
  %v3369 = vunpack.c.l.b16 %v884
  %v3370 = vunpack.c.l.b16 %v885
  %v3371 = vunpack.c.l.b16 %v886
  %v3372 = vunpack.c.l.b16 %v887
  %v3373 = vunpack.c.l.b16 %v888
  %v3374 = vunpack.c.l.b16 %v889
  %v3375 = vunpack.c.l.b16 %v890
  %v3376 = vunpack.c.l.b16 %v891
  %v3377 = vunpack.c.l.b16 %v892
  %v3378 = vunpack.c.l.b16 %v893
  %v3379 = vunpack.c.l.b16 %v894
  %v3380 = vunpack.c.l.b16 %v895
  %v3381 = vunpack.c.l.b16 %v896
  %v3382 = vunpack.c.l.b16 %v897
  %v3383 = vunpack.c.l.b16 %v898
  %v3384 = vunpack.c.l.b16 %v899
  %v3385 = vunpack.c.l.b16 %v900
  %v3386 = vunpack.c.l.b16 %v901
  %v3387 = vunpack.c.l.b16 %v902
  %v3388 = vunpack.c.l.b16 %v903
  %v3389 = vunpack.c.l.b16 %v904
  %v3390 = vunpack.c.l.b16 %v905
  %v3391 = vunpack.c.l.b16 %v906
  %v3392 = vunpack.c.l.b16 %v907
  %v3393 = vunpack.c.l.b16 %v908
  %v3394 = vunpack.c.l.b16 %v909
  %v3395 = vunpack.c.l.b16 %v910
  %v3396 = vunpack.c.l.b16 %v911
  %v3397 = vunpack.c.l.b16 %v912
  %v3398 = vunpack.c.l.b16 %v913
  %v3399 = vunpack.c.l.b16 %v914
  %v3400 = vunpack.c.l.b16 %v915
  %v3401 = vunpack.c.l.b16 %v916
  %v3402 = vunpack.c.l.b16 %v917
  %v3403 = vunpack.c.l.b16 %v918
  %v3404 = vunpack.c.l.b16 %v919
  %v3405 = vunpack.c.l.b16 %v920
  %v3406 = vunpack.c.l.b16 %v921
  %v3407 = vunpack.c.l.b16 %v922
  %v3408 = vunpack.c.l.b16 %v923
  %v3409 = vunpack.c.l.b16 %v924
  %v3410 = vunpack.c.l.b16 %v925
  %v3411 = vunpack.c.l.b16 %v926
  %v3412 = vunpack.c.l.b16 %v927
  %v3413 = vunpack.c.l.b16 %v928
  %v3414 = vunpack.c.l.b16 %v929
  %v3415 = vunpack.c.l.b16 %v930
  %v3416 = vunpack.c.l.b16 %v931
  %v3417 = vunpack.c.l.b16 %v932
  %v3418 = vunpack.c.l.b16 %v933
  %v3419 = vunpack.c.l.b16 %v934
  %v3420 = vunpack.c.l.b16 %v935
  %v3421 = vunpack.c.l.b16 %v936
  %v3422 = vunpack.c.l.b16 %v937
  %v3423 = vunpack.c.l.b16 %v938
  %v3424 = vunpack.c.l.b16 %v939
  %v3425 = vunpack.c.l.b16 %v940
  %v3426 = vunpack.c.l.b16 %v941
  %v3427 = vunpack.c.l.b16 %v942
  %v3428 = vunpack.c.l.b16 %v943
  %v3429 = vunpack.c.l.b16 %v944
  %v3430 = vunpack.c.l.b16 %v945
  %v3431 = vunpack.c.l.b16 %v946
  %v3432 = vunpack.c.l.b16 %v947
  %v3433 = vunpack.c.l.b16 %v948
  %v3434 = vunpack.c.l.b16 %v949
  %v3435 = vunpack.c.l.b16 %v950
  %v3436 = vunpack.c.l.b16 %v951
  %v3437 = vunpack.c.l.b16 %v952
  %v3438 = vunpack.c.l.b16 %v953
  %v3439 = vunpack.c.l.b16 %v954
  %v3440 = vunpack.c.l.b16 %v955
  %v3441 = vunpack.c.l.b16 %v956
  %v3442 = vunpack.c.l.b16 %v957
  %v3443 = vunpack.c.l.b16 %v958
  %v3444 = vunpack.c.l.b16 %v959
  %v3445 = vunpack.c.l.b16 %v960
  %v3446 = vunpack.c.l.b16 %v961
  %v3447 = vunpack.c.l.b16 %v962
  %v3448 = vunpack.c.l.b16 %v963
  %v3449 = vunpack.c.l.b16 %v964
  %v3450 = vunpack.c.l.b16 %v965
  %v3451 = vunpack.c.l.b16 %v966
  %v3452 = vunpack.c.l.b16 %v967
  %v3453 = vunpack.c.l.b16 %v968
  %v3454 = vunpack.c.l.b16 %v969
  %v3455 = vunpack.c.l.b16 %v970
  %v3456 = vunpack.c.l.b16 %v971
  %v3457 = vunpack.c.l.b16 %v972
  %v3458 = vunpack.c.l.b16 %v973
  %v3459 = vunpack.c.l.b16 %v974
  %v3460 = vunpack.c.l.b16 %v975
  %v3461 = vunpack.c.l.b16 %v976
  %v3462 = vunpack.c.l.b16 %v977
  %v3463 = vunpack.c.l.b16 %v978
  %v3464 = vunpack.c.l.b16 %v979
  %v3465 = vunpack.c.l.b16 %v980
  %v3466 = vunpack.c.l.b16 %v981
  %v3467 = vunpack.c.l.b16 %v982
  %v3468 = vunpack.c.l.b16 %v983
  %v3469 = vunpack.c.l.b16 %v984
  %v3470 = vunpack.c.l.b16 %v985
  %v3471 = vunpack.c.l.b16 %v986
  %v3472 = vunpack.c.l.b16 %v987
  %v3473 = vunpack.c.l.b16 %v988
  %v3474 = vunpack.c.l.b16 %v989
  %v3475 = vunpack.c.l.b16 %v990
  %v3476 = vunpack.c.l.b16 %v991
  %v3477 = vunpack.c.l.b16 %v992
  %v3478 = vunpack.c.l.b16 %v993
  %v3479 = vunpack.c.l.b16 %v994
  %v3480 = vunpack.c.l.b16 %v995
  %v3481 = vunpack.c.l.b16 %v996
  %v3482 = vunpack.c.l.b16 %v997
  %v3483 = vunpack.c.l.b16 %v998
  %v3484 = vunpack.c.l.b16 %v999
  %v3485 = vunpack.c.l.b16 %v1000
  %v3486 = vunpack.c.l.b16 %v1001
  %v3487 = vunpack.c.l.b16 %v1002
  %v3488 = vunpack.c.l.b16 %v1003
  %v3489 = vunpack.c.l.b16 %v1004
  %v3490 = vunpack.c.l.b16 %v1005
  %v3491 = vunpack.c.l.b16 %v1006
  %v3492 = vunpack.c.l.b16 %v1007
  %v3493 = vunpack.c.l.b16 %v1008
  %v3494 = vunpack.c.l.b16 %v1009
  %v3495 = vunpack.c.l.b16 %v1010
  %v3496 = vunpack.c.l.b16 %v1011
  %v3497 = vunpack.c.l.b16 %v1012
  %v3498 = vunpack.c.l.b16 %v1013
  %v3499 = vunpack.c.l.b16 %v1014
  %v3500 = vunpack.c.l.b16 %v1015
  %v3501 = vunpack.c.l.b16 %v1016
  %v3502 = vunpack.c.l.b16 %v1017
  %v3503 = vunpack.c.l.b16 %v1018
  %v3504 = vunpack.c.l.b16 %v1019
  %v3505 = vunpack.c.l.b16 %v1020
  %v3506 = vunpack.c.l.b16 %v1021
  %v3507 = vunpack.c.l.b16 %v1022
  %v3508 = vunpack.c.l.b16 %v1023
  %v3509 = vunpack.c.l.b16 %v1024
  %v3510 = vunpack.c.l.b16 %v1025
  %v3511 = vunpack.c.l.b16 %v1026
  %v3512 = vunpack.c.l.b16 %v1027
  %v3513 = vunpack.c.l.b16 %v1028
  %v3514 = vunpack.c.l.b16 %v1029
  %v3515 = vunpack.c.l.b16 %v1030
  %v3516 = vunpack.c.l.b16 %v1031
  %v3517 = vunpack.c.l.b16 %v1032
  %v3518 = vunpack.c.l.b16 %v1033
  %v3519 = vunpack.c.l.b16 %v1034
  %v3520 = vunpack.c.l.b16 %v1035
  %v3521 = vunpack.c.l.b16 %v1036
  %v3522 = vunpack.c.l.b16 %v1037
  %v3523 = vunpack.c.l.b16 %v1038
  %v3524 = vunpack.c.l.b16 %v1039
  %v3525 = vunpack.c.l.b16 %v1040
  %v3526 = vunpack.c.l.b16 %v1041
  %v3527 = vunpack.c.l.b16 %v1042
  %v3528 = vunpack.c.l.b16 %v1043
  %v3529 = vunpack.c.l.b16 %v1044
  %v3530 = vunpack.c.l.b16 %v1045
  %v3531 = vunpack.c.l.b16 %v1046
  %v3532 = vunpack.c.l.b16 %v1047
  %v3533 = vunpack.c.l.b16 %v1048
  %v3534 = vunpack.c.l.b16 %v1049
  %v3535 = vunpack.c.l.b16 %v1050
  %v3536 = vunpack.c.l.b16 %v1051
  %v3537 = vunpack.c.l.b16 %v1052
  %v3538 = vunpack.c.l.b16 %v1053
  %v3539 = vunpack.c.l.b16 %v1054
  %v3540 = vunpack.c.l.b16 %v1055
  %v3541 = vunpack.c.l.b16 %v1056
  %v3542 = vunpack.c.l.b16 %v1057
  %v3543 = vunpack.c.l.b16 %v1058
  %v3544 = vunpack.c.l.b16 %v1059
  %v3545 = vunpack.c.l.b16 %v1060
  %v3546 = vunpack.c.l.b16 %v1061
  %v3547 = vunpack.c.l.b16 %v1062
  %v3548 = vunpack.c.l.b16 %v1063
  %v3549 = vunpack.c.l.b16 %v1064
  %v3550 = vunpack.c.l.b16 %v1065
  %v3551 = vunpack.c.l.b16 %v1066
  %v3552 = vunpack.c.l.b16 %v1067
  %v3553 = vunpack.c.l.b16 %v1068
  %v3554 = vunpack.c.l.b16 %v1069
  %v3555 = vunpack.c.l.b16 %v1070
  %v3556 = vunpack.c.l.b16 %v1071
  %v3557 = vunpack.c.l.b16 %v1072
  %v3558 = vunpack.c.l.b16 %v1073
  %v3559 = vunpack.c.l.b16 %v1074
  %v3560 = vunpack.c.l.b16 %v1075
  %v3561 = vunpack.c.l.b16 %v1076
  %v3562 = vunpack.c.l.b16 %v1077
  %v3563 = vunpack.c.l.b16 %v1078
  %v3564 = vunpack.c.l.b16 %v1079
  %v3565 = vunpack.c.l.b16 %v1080
  %v3566 = vunpack.c.l.b16 %v1081
  %v3567 = vunpack.c.l.b16 %v1082
  %v3568 = vunpack.c.l.b16 %v1083
  %v3569 = vunpack.c.l.b16 %v1084
  %v3570 = vunpack.c.l.b16 %v1085
  %v3571 = vunpack.c.l.b16 %v1086
  %v3572 = vunpack.c.l.b16 %v1087
  %v3573 = vunpack.c.l.b16 %v1088
  %v3574 = vunpack.c.l.b16 %v1089
  %v3575 = vunpack.c.l.b16 %v1090
  %v3576 = vunpack.c.l.b16 %v1091
  %v3577 = vunpack.c.l.b16 %v1092
  %v3578 = vunpack.c.l.b16 %v1093
  %v3579 = vunpack.c.l.b16 %v1094
  %v3580 = vunpack.c.l.b16 %v1095
  %v3581 = vunpack.c.l.b16 %v1096
  %v3582 = vunpack.c.l.b16 %v1097
  %v3583 = vunpack.c.l.b16 %v1098
  %v3584 = vunpack.c.l.b16 %v1099
  %v3585 = vunpack.c.l.b16 %v1100
  %v3586 = vunpack.c.l.b16 %v1101
  %v3587 = vunpack.c.l.b16 %v1102
  %v3588 = vunpack.c.l.b16 %v1103
  %v3589 = vunpack.c.l.b16 %v1104
  %v3590 = vunpack.c.l.b16 %v1105
  %v3591 = vunpack.c.l.b16 %v1106
  %v3592 = vunpack.c.l.b16 %v1107
  %v3593 = vunpack.c.l.b16 %v1108
  %v3594 = vunpack.c.l.b16 %v1109
  %v3595 = vunpack.c.l.b16 %v1110
  %v3596 = vunpack.c.l.b16 %v1111
  %v3597 = vunpack.c.l.b16 %v1112
  %v3598 = vunpack.c.l.b16 %v1113
  %v3599 = vunpack.c.l.b16 %v1114
  %v3600 = vunpack.c.l.b16 %v1115
  %v3601 = vunpack.c.l.b16 %v1116
  %v3602 = vunpack.c.l.b16 %v1117
  %v3603 = vunpack.c.l.b16 %v1118
  %v3604 = vunpack.c.l.b16 %v1119
  %v3605 = vunpack.c.l.b16 %v1120
  %v3606 = vunpack.c.l.b16 %v1121
  %v3607 = vunpack.c.l.b16 %v1122
  %v3608 = vunpack.c.l.b16 %v1123
  %v3609 = vunpack.c.l.b16 %v1124
  %v3610 = vunpack.c.l.b16 %v1125
  %v3611 = vunpack.c.l.b16 %v1126
  %v3612 = vunpack.c.l.b16 %v1127
  %v3613 = vunpack.c.l.b16 %v1128
  %v3614 = vunpack.c.l.b16 %v1129
  %v3615 = vunpack.c.l.b16 %v1130
  %v3616 = vunpack.c.l.b16 %v1131
  %v3617 = vunpack.c.l.b16 %v1132
  %v3618 = vunpack.c.l.b16 %v1133
  %v3619 = vunpack.c.l.b16 %v1134
  %v3620 = vunpack.c.l.b16 %v1135
  %v3621 = vunpack.c.l.b16 %v1136
  %v3622 = vunpack.c.l.b16 %v1137
  %v3623 = vunpack.c.l.b16 %v1138
  %v3624 = vunpack.c.l.b16 %v1139
  %v3625 = vunpack.c.l.b16 %v1140
  %v3626 = vunpack.c.l.b16 %v1141
  %v3627 = vunpack.c.l.b16 %v1142
  %v3628 = vunpack.c.l.b16 %v1143
  %v3629 = vunpack.c.l.b16 %v1144
  %v3630 = vunpack.c.l.b16 %v1145
  %v3631 = vunpack.c.l.b16 %v1146
  %v3632 = vunpack.c.l.b16 %v1147
  %v3633 = vunpack.c.l.b16 %v1148
  %v3634 = vunpack.c.l.b16 %v1149
  %v3635 = vunpack.c.l.b16 %v1150
  %v3636 = vunpack.c.l.b16 %v1151
  %v3637 = vunpack.c.l.b16 %v1152
  %v3638 = vunpack.c.l.b16 %v1153
  %v3639 = vunpack.c.l.b16 %v1154
  %v3640 = vunpack.c.l.b16 %v1155
  %v3641 = vunpack.c.l.b16 %v1156
  %v3642 = vunpack.c.l.b16 %v1157
  %v3643 = vunpack.c.l.b16 %v1158
  %v3644 = vunpack.c.l.b16 %v1159
  %v3645 = vunpack.c.l.b16 %v1160
  %v3646 = vunpack.c.l.b16 %v1161
  %v3647 = vunpack.c.l.b16 %v1162
  %v3648 = vunpack.c.l.b16 %v1163
  %v3649 = vunpack.c.l.b16 %v1164
  %v3650 = vunpack.c.l.b16 %v1165
  %v3651 = vunpack.c.l.b16 %v1166
  %v3652 = vunpack.c.l.b16 %v1167
  %v3653 = vunpack.c.l.b16 %v1168
  %v3654 = vunpack.c.l.b16 %v1169
  %v3655 = vunpack.c.l.b16 %v1170
  %v3656 = vunpack.c.l.b16 %v1171
  %v3657 = vunpack.c.l.b16 %v1172
  %v3658 = vunpack.c.l.b16 %v1173
  %v3659 = vunpack.c.l.b16 %v1174
  %v3660 = vunpack.c.l.b16 %v1175
  %v3661 = vunpack.c.l.b16 %v1176
  %v3662 = vunpack.c.l.b16 %v1177
  %v3663 = vunpack.c.l.b16 %v1178
  %v3664 = vunpack.c.l.b16 %v1179
  %v3665 = vunpack.c.l.b16 %v1180
  %v3666 = vunpack.c.l.b16 %v1181
  %v3667 = vunpack.c.l.b16 %v1182
  %v3668 = vunpack.c.l.b16 %v1183
  %v3669 = vunpack.c.l.b16 %v1184
  %v3670 = vunpack.c.l.b16 %v1185
  %v3671 = vunpack.c.l.b16 %v1186
  %v3672 = vunpack.c.l.b16 %v1187
  %v3673 = vunpack.c.l.b16 %v1188
  %v3674 = vpack.c.b16 %v2555, %v2554
  %v3675 = vpack.c.b16 %v2557, %v2556
  %v3676 = vpack.c.b16 %v2559, %v2558
  %v3677 = vpack.c.b16 %v2561, %v2560
  %v3678 = vpack.c.b16 %v2563, %v2562
  %v3679 = vpack.c.b16 %v2565, %v2564
  %v3680 = vpack.c.b16 %v2567, %v2566
  %v3681 = vpack.c.b16 %v2569, %v2568
  %v3682 = vpack.c.b16 %v2571, %v2570
  %v3683 = vpack.c.b16 %v2573, %v2572
  %v3684 = vpack.c.b16 %v2575, %v2574
  %v3685 = vpack.c.b16 %v2577, %v2576
  %v3686 = vpack.c.b16 %v2579, %v2578
  %v3687 = vpack.c.b16 %v2581, %v2580
  %v3688 = vpack.c.b16 %v2583, %v2582
  %v3689 = vpack.c.b16 %v2585, %v2584
  %v3690 = vpack.c.b16 %v2587, %v2586
  %v3691 = vpack.c.b16 %v2589, %v2588
  %v3692 = vpack.c.b16 %v2591, %v2590
  %v3693 = vpack.c.b16 %v2593, %v2592
  %v3694 = vpack.c.b16 %v2595, %v2594
  %v3695 = vpack.c.b16 %v2597, %v2596
  %v3696 = vpack.c.b16 %v2599, %v2598
  %v3697 = vpack.c.b16 %v2601, %v2600
  %v3698 = vpack.c.b16 %v2603, %v2602
  %v3699 = vpack.c.b16 %v2605, %v2604
  %v3700 = vpack.c.b16 %v2607, %v2606
  %v3701 = vpack.c.b16 %v2609, %v2608
  %v3702 = vpack.c.b16 %v2611, %v2610
  %v3703 = vpack.c.b16 %v2613, %v2612
  %v3704 = vpack.c.b16 %v2615, %v2614
  %v3705 = vpack.c.b16 %v2617, %v2616
  %v3706 = vpack.c.b16 %v2619, %v2618
  %v3707 = vpack.c.b16 %v2621, %v2620
  %v3708 = vpack.c.b16 %v2623, %v2622
  %v3709 = vpack.c.b16 %v2625, %v2624
  %v3710 = vpack.c.b16 %v2627, %v2626
  %v3711 = vpack.c.b16 %v2629, %v2628
  %v3712 = vpack.c.b16 %v2631, %v2630
  %v3713 = vpack.c.b16 %v2633, %v2632
  %v3714 = vpack.c.b16 %v2635, %v2634
  %v3715 = vpack.c.b16 %v2637, %v2636
  %v3716 = vpack.c.b16 %v2639, %v2638
  %v3717 = vpack.c.b16 %v2641, %v2640
  %v3718 = vpack.c.b16 %v2643, %v2642
  %v3719 = vpack.c.b16 %v2645, %v2644
  %v3720 = vpack.c.b16 %v2647, %v2646
  %v3721 = vpack.c.b16 %v2649, %v2648
  %v3722 = vpack.c.b16 %v2651, %v2650
  %v3723 = vpack.c.b16 %v2653, %v2652
  %v3724 = vpack.c.b16 %v2655, %v2654
  %v3725 = vpack.c.b16 %v2657, %v2656
  %v3726 = vpack.c.b16 %v2659, %v2658
  %v3727 = vpack.c.b16 %v2661, %v2660
  %v3728 = vpack.c.b16 %v2663, %v2662
  %v3729 = vpack.c.b16 %v2665, %v2664
  %v3730 = vpack.c.b16 %v2667, %v2666
  %v3731 = vpack.c.b16 %v2669, %v2668
  %v3732 = vpack.c.b16 %v2671, %v2670
  %v3733 = vpack.c.b16 %v2673, %v2672
  %v3734 = vpack.c.b16 %v2675, %v2674
  %v3735 = vpack.c.b16 %v2677, %v2676
  %v3736 = vpack.c.b16 %v2679, %v2678
  %v3737 = vpack.c.b16 %v2681, %v2680
  %v3738 = vpack.c.b16 %v2683, %v2682
  %v3739 = vpack.c.b16 %v2685, %v2684
  %v3740 = vpack.c.b16 %v2687, %v2686
  %v3741 = vpack.c.b16 %v2689, %v2688
  %v3742 = vpack.c.b16 %v2691, %v2690
  %v3743 = vpack.c.b16 %v2693, %v2692
  %v3744 = vpack.c.b16 %v2695, %v2694
  %v3745 = vpack.c.b16 %v2697, %v2696
  %v3746 = vpack.c.b16 %v2699, %v2698
  %v3747 = vpack.c.b16 %v2701, %v2700
  %v3748 = vpack.c.b16 %v2703, %v2702
  %v3749 = vpack.c.b16 %v2705, %v2704
  %v3750 = vpack.c.b16 %v2707, %v2706
  %v3751 = vpack.c.b16 %v2709, %v2708
  %v3752 = vpack.c.b16 %v2711, %v2710
  %v3753 = vpack.c.b16 %v2713, %v2712
  %v3754 = vpack.c.b16 %v2715, %v2714
  %v3755 = vpack.c.b16 %v2717, %v2716
  %v3756 = vpack.c.b16 %v2719, %v2718
  %v3757 = vpack.c.b16 %v2721, %v2720
  %v3758 = vpack.c.b16 %v2723, %v2722
  %v3759 = vpack.c.b16 %v2725, %v2724
  %v3760 = vpack.c.b16 %v2727, %v2726
  %v3761 = vpack.c.b16 %v2729, %v2728
  %v3762 = vpack.c.b16 %v2731, %v2730
  %v3763 = vpack.c.b16 %v2733, %v2732
  %v3764 = vpack.c.b16 %v2735, %v2734
  %v3765 = vpack.c.b16 %v2737, %v2736
  %v3766 = vpack.c.b16 %v2739, %v2738
  %v3767 = vpack.c.b16 %v2741, %v2740
  %v3768 = vpack.c.b16 %v2743, %v2742
  %v3769 = vpack.c.b16 %v2745, %v2744
  %v3770 = vpack.c.b16 %v2747, %v2746
  %v3771 = vpack.c.b16 %v2749, %v2748
  %v3772 = vpack.c.b16 %v2751, %v2750
  %v3773 = vpack.c.b16 %v2753, %v2752
  %v3774 = vpack.c.b16 %v2755, %v2754
  %v3775 = vpack.c.b16 %v2757, %v2756
  %v3776 = vpack.c.b16 %v2759, %v2758
  %v3777 = vpack.c.b16 %v2761, %v2760
  %v3778 = vpack.c.b16 %v2763, %v2762
  %v3779 = vpack.c.b16 %v2765, %v2764
  %v3780 = vpack.c.b16 %v2767, %v2766
  %v3781 = vpack.c.b16 %v2769, %v2768
  %v3782 = vpack.c.b16 %v2771, %v2770
  %v3783 = vpack.c.b16 %v2773, %v2772
  %v3784 = vpack.c.b16 %v2775, %v2774
  %v3785 = vpack.c.b16 %v2777, %v2776
  %v3786 = vpack.c.b16 %v2779, %v2778
  %v3787 = vpack.c.b16 %v2781, %v2780
  %v3788 = vpack.c.b16 %v2783, %v2782
  %v3789 = vpack.c.b16 %v2785, %v2784
  %v3790 = vpack.c.b16 %v2787, %v2786
  %v3791 = vpack.c.b16 %v2789, %v2788
  %v3792 = vpack.c.b16 %v2791, %v2790
  %v3793 = vpack.c.b16 %v2793, %v2792
  %v3794 = vpack.c.b16 %v2795, %v2794
  %v3795 = vpack.c.b16 %v2797, %v2796
  %v3796 = vpack.c.b16 %v2799, %v2798
  %v3797 = vpack.c.b16 %v2801, %v2800
  %v3798 = vpack.c.b16 %v2803, %v2802
  %v3799 = vpack.c.b16 %v2805, %v2804
  %v3800 = vpack.c.b16 %v2807, %v2806
  %v3801 = vpack.c.b16 %v2809, %v2808
  %v3802 = vpack.c.b16 %v2811, %v2810
  %v3803 = vpack.c.b16 %v2813, %v2812
  %v3804 = vpack.c.b16 %v2815, %v2814
  %v3805 = vpack.c.b16 %v2817, %v2816
  %v3806 = vpack.c.b16 %v2819, %v2818
  %v3807 = vpack.c.b16 %v2821, %v2820
  %v3808 = vpack.c.b16 %v2823, %v2822
  %v3809 = vpack.c.b16 %v2825, %v2824
  %v3810 = vpack.c.b16 %v2827, %v2826
  %v3811 = vpack.c.b16 %v2829, %v2828
  %v3812 = vpack.c.b16 %v2831, %v2830
  %v3813 = vpack.c.b16 %v2833, %v2832
  %v3814 = vpack.c.b16 %v2835, %v2834
  %v3815 = vpack.c.b16 %v2837, %v2836
  %v3816 = vpack.c.b16 %v2839, %v2838
  %v3817 = vpack.c.b16 %v2841, %v2840
  %v3818 = vpack.c.b16 %v2843, %v2842
  %v3819 = vpack.c.b16 %v2845, %v2844
  %v3820 = vpack.c.b16 %v2847, %v2846
  %v3821 = vpack.c.b16 %v2849, %v2848
  %v3822 = vpack.c.b16 %v2851, %v2850
  %v3823 = vpack.c.b16 %v2853, %v2852
  %v3824 = vpack.c.b16 %v2855, %v2854
  %v3825 = vpack.c.b16 %v2857, %v2856
  %v3826 = vpack.c.b16 %v2859, %v2858
  %v3827 = vpack.c.b16 %v2861, %v2860
  %v3828 = vpack.c.b16 %v2863, %v2862
  %v3829 = vpack.c.b16 %v2865, %v2864
  %v3830 = vpack.c.b16 %v2867, %v2866
  %v3831 = vpack.c.b16 %v2869, %v2868
  %v3832 = vpack.c.b16 %v2871, %v2870
  %v3833 = vpack.c.b16 %v2873, %v2872
  %v3834 = vpack.c.b16 %v2875, %v2874
  %v3835 = vpack.c.b16 %v2877, %v2876
  %v3836 = vpack.c.b16 %v2879, %v2878
  %v3837 = vpack.c.b16 %v2881, %v2880
  %v3838 = vpack.c.b16 %v2883, %v2882
  %v3839 = vpack.c.b16 %v2885, %v2884
  %v3840 = vpack.c.b16 %v2887, %v2886
  %v3841 = vpack.c.b16 %v2889, %v2888
  %v3842 = vpack.c.b16 %v2891, %v2890
  %v3843 = vpack.c.b16 %v2893, %v2892
  %v3844 = vpack.c.b16 %v2895, %v2894
  %v3845 = vpack.c.b16 %v2897, %v2896
  %v3846 = vpack.c.b16 %v2899, %v2898
  %v3847 = vpack.c.b16 %v2901, %v2900
  %v3848 = vpack.c.b16 %v2903, %v2902
  %v3849 = vpack.c.b16 %v2905, %v2904
  %v3850 = vpack.c.b16 %v2907, %v2906
  %v3851 = vpack.c.b16 %v2909, %v2908
  %v3852 = vpack.c.b16 %v2911, %v2910
  %v3853 = vpack.c.b16 %v2913, %v2912
  %v3854 = vpack.c.b16 %v2915, %v2914
  %v3855 = vpack.c.b16 %v2917, %v2916
  %v3856 = vpack.c.b16 %v2919, %v2918
  %v3857 = vpack.c.b16 %v2921, %v2920
  %v3858 = vpack.c.b16 %v2923, %v2922
  %v3859 = vpack.c.b16 %v2925, %v2924
  %v3860 = vpack.c.b16 %v2927, %v2926
  %v3861 = vpack.c.b16 %v2929, %v2928
  %v3862 = vpack.c.b16 %v2931, %v2930
  %v3863 = vpack.c.b16 %v2933, %v2932
  %v3864 = vpack.c.b16 %v2935, %v2934
  %v3865 = vpack.c.b16 %v2937, %v2936
  %v3866 = vpack.c.b16 %v2939, %v2938
  %v3867 = vpack.c.b16 %v2941, %v2940
  %v3868 = vpack.c.b16 %v2943, %v2942
  %v3869 = vpack.c.b16 %v2945, %v2944
  %v3870 = vpack.c.b16 %v2947, %v2946
  %v3871 = vpack.c.b16 %v2949, %v2948
  %v3872 = vpack.c.b16 %v2951, %v2950
  %v3873 = vpack.c.b16 %v2953, %v2952
  %v3874 = vpack.c.b16 %v2955, %v2954
  %v3875 = vpack.c.b16 %v2957, %v2956
  %v3876 = vpack.c.b16 %v2959, %v2958
  %v3877 = vpack.c.b16 %v2961, %v2960
  %v3878 = vpack.c.b16 %v2963, %v2962
  %v3879 = vpack.c.b16 %v2965, %v2964
  %v3880 = vpack.c.b16 %v2967, %v2966
  %v3881 = vpack.c.b16 %v2969, %v2968
  %v3882 = vpack.c.b16 %v2971, %v2970
  %v3883 = vpack.c.b16 %v2973, %v2972
  %v3884 = vpack.c.b16 %v2975, %v2974
  %v3885 = vpack.c.b16 %v2977, %v2976
  %v3886 = vpack.c.b16 %v2979, %v2978
  %v3887 = vpack.c.b16 %v2981, %v2980
  %v3888 = vpack.c.b16 %v2983, %v2982
  %v3889 = vpack.c.b16 %v2985, %v2984
  %v3890 = vpack.c.b16 %v2987, %v2986
  %v3891 = vpack.c.b16 %v2989, %v2988
  %v3892 = vpack.c.b16 %v2991, %v2990
  %v3893 = vpack.c.b16 %v2993, %v2992
  %v3894 = vpack.c.b16 %v2995, %v2994
  %v3895 = vpack.c.b16 %v2997, %v2996
  %v3896 = vpack.c.b16 %v2999, %v2998
  %v3897 = vpack.c.b16 %v3001, %v3000
  %v3898 = vpack.c.b16 %v3003, %v3002
  %v3899 = vpack.c.b16 %v3005, %v3004
  %v3900 = vpack.c.b16 %v3007, %v3006
  %v3901 = vpack.c.b16 %v3009, %v3008
  %v3902 = vpack.c.b16 %v3011, %v3010
  %v3903 = vpack.c.b16 %v3013, %v3012
  %v3904 = vpack.c.b16 %v3015, %v3014
  %v3905 = vpack.c.b16 %v3017, %v3016
  %v3906 = vpack.c.b16 %v3019, %v3018
  %v3907 = vpack.c.b16 %v3021, %v3020
  %v3908 = vpack.c.b16 %v3023, %v3022
  %v3909 = vpack.c.b16 %v3025, %v3024
  %v3910 = vpack.c.b16 %v3027, %v3026
  %v3911 = vpack.c.b16 %v3029, %v3028
  %v3912 = vpack.c.b16 %v3031, %v3030
  %v3913 = vpack.c.b16 %v3033, %v3032
  %v3914 = vpack.c.b16 %v3035, %v3034
  %v3915 = vpack.c.b16 %v3037, %v3036
  %v3916 = vpack.c.b16 %v3039, %v3038
  %v3917 = vpack.c.b16 %v3041, %v3040
  %v3918 = vpack.c.b16 %v3043, %v3042
  %v3919 = vpack.c.b16 %v3045, %v3044
  %v3920 = vpack.c.b16 %v3047, %v3046
  %v3921 = vpack.c.b16 %v3049, %v3048
  %v3922 = vpack.c.b16 %v3051, %v3050
  %v3923 = vpack.c.b16 %v3053, %v3052
  %v3924 = vpack.c.b16 %v3055, %v3054
  %v3925 = vpack.c.b16 %v3057, %v3056
  %v3926 = vpack.c.b16 %v3059, %v3058
  %v3927 = vpack.c.b16 %v3061, %v3060
  %v3928 = vpack.c.b16 %v3063, %v3062
  %v3929 = vpack.c.b16 %v3065, %v3064
  %v3930 = vpack.c.b16 %v3067, %v3066
  %v3931 = vpack.c.b16 %v3069, %v3068
  %v3932 = vpack.c.b16 %v3071, %v3070
  %v3933 = vpack.c.b16 %v3073, %v3072
  %v3934 = vpack.c.b16 %v3075, %v3074
  %v3935 = vpack.c.b16 %v3077, %v3076
  %v3936 = vpack.c.b16 %v3079, %v3078
  %v3937 = vpack.c.b16 %v3081, %v3080
  %v3938 = vpack.c.b16 %v3083, %v3082
  %v3939 = vpack.c.b16 %v3085, %v3084
  %v3940 = vpack.c.b16 %v3087, %v3086
  %v3941 = vpack.c.b16 %v3089, %v3088
  %v3942 = vpack.c.b16 %v3091, %v3090
  %v3943 = vpack.c.b16 %v3093, %v3092
  %v3944 = vpack.c.b16 %v3095, %v3094
  %v3945 = vpack.c.b16 %v3097, %v3096
  %v3946 = vpack.c.b16 %v3099, %v3098
  %v3947 = vpack.c.b16 %v3101, %v3100
  %v3948 = vpack.c.b16 %v3103, %v3102
  %v3949 = vpack.c.b16 %v3105, %v3104
  %v3950 = vpack.c.b16 %v3107, %v3106
  %v3951 = vpack.c.b16 %v3109, %v3108
  %v3952 = vpack.c.b16 %v3111, %v3110
  %v3953 = vpack.c.b16 %v3113, %v3112
  %v3954 = vpack.c.b16 %v3115, %v3114
  %v3955 = vpack.c.b16 %v3117, %v3116
  %v3956 = vpack.c.b16 %v3119, %v3118
  %v3957 = vpack.c.b16 %v3121, %v3120
  %v3958 = vpack.c.b16 %v3123, %v3122
  %v3959 = vpack.c.b16 %v3125, %v3124
  %v3960 = vpack.c.b16 %v3127, %v3126
  %v3961 = vpack.c.b16 %v3129, %v3128
  %v3962 = vpack.c.b16 %v3131, %v3130
  %v3963 = vpack.c.b16 %v3133, %v3132
  %v3964 = vpack.c.b16 %v3135, %v3134
  %v3965 = vpack.c.b16 %v3137, %v3136
  %v3966 = vpack.c.b16 %v3139, %v3138
  %v3967 = vpack.c.b16 %v3141, %v3140
  %v3968 = vpack.c.b16 %v3143, %v3142
  %v3969 = vpack.c.b16 %v3145, %v3144
  %v3970 = vpack.c.b16 %v3147, %v3146
  %v3971 = vpack.c.b16 %v3149, %v3148
  %v3972 = vpack.c.b16 %v3151, %v3150
  %v3973 = vpack.c.b16 %v3153, %v3152
  %v3974 = vpack.c.b16 %v3155, %v3154
  %v3975 = vpack.c.b16 %v3157, %v3156
  %v3976 = vpack.c.b16 %v3159, %v3158
  %v3977 = vpack.c.b16 %v3161, %v3160
  %v3978 = vpack.c.b16 %v3163, %v3162
  %v3979 = vpack.c.b16 %v3165, %v3164
  %v3980 = vpack.c.b16 %v3167, %v3166
  %v3981 = vpack.c.b16 %v3169, %v3168
  %v3982 = vpack.c.b16 %v3171, %v3170
  %v3983 = vpack.c.b16 %v3173, %v3172
  %v3984 = vpack.c.b16 %v3175, %v3174
  %v3985 = vpack.c.b16 %v3177, %v3176
  %v3986 = vpack.c.b16 %v3179, %v3178
  %v3987 = vpack.c.b16 %v3181, %v3180
  %v3988 = vpack.c.b16 %v3183, %v3182
  %v3989 = vpack.c.b16 %v3185, %v3184
  %v3990 = vpack.c.b16 %v3187, %v3186
  %v3991 = vpack.c.b16 %v3189, %v3188
  %v3992 = vpack.c.b16 %v3191, %v3190
  %v3993 = vpack.c.b16 %v3193, %v3192
  %v3994 = vpack.c.b16 %v3195, %v3194
  %v3995 = vpack.c.b16 %v3197, %v3196
  %v3996 = vpack.c.b16 %v3199, %v3198
  %v3997 = vpack.c.b16 %v3201, %v3200
  %v3998 = vpack.c.b16 %v3203, %v3202
  %v3999 = vpack.c.b16 %v3205, %v3204
  %v4000 = vpack.c.b16 %v3207, %v3206
  %v4001 = vpack.c.b16 %v3209, %v3208
  %v4002 = vpack.c.b16 %v3211, %v3210
  %v4003 = vpack.c.b16 %v3213, %v3212
  %v4004 = vpack.c.b16 %v3215, %v3214
  %v4005 = vpack.c.b16 %v3217, %v3216
  %v4006 = vpack.c.b16 %v3219, %v3218
  %v4007 = vpack.c.b16 %v3221, %v3220
  %v4008 = vpack.c.b16 %v3223, %v3222
  %v4009 = vpack.c.b16 %v3225, %v3224
  %v4010 = vpack.c.b16 %v3227, %v3226
  %v4011 = vpack.c.b16 %v3229, %v3228
  %v4012 = vpack.c.b16 %v3231, %v3230
  %v4013 = vpack.c.b16 %v3233, %v3232
  %v4014 = vpack.c.b16 %v3235, %v3234
  %v4015 = vpack.c.b16 %v3237, %v3236
  %v4016 = vpack.c.b16 %v3239, %v3238
  %v4017 = vpack.c.b16 %v3241, %v3240
  %v4018 = vpack.c.b16 %v3243, %v3242
  %v4019 = vpack.c.b16 %v3245, %v3244
  %v4020 = vpack.c.b16 %v3247, %v3246
  %v4021 = vpack.c.b16 %v3249, %v3248
  %v4022 = vpack.c.b16 %v3251, %v3250
  %v4023 = vpack.c.b16 %v3253, %v3252
  %v4024 = vpack.c.b16 %v3255, %v3254
  %v4025 = vpack.c.b16 %v3257, %v3256
  %v4026 = vpack.c.b16 %v3259, %v3258
  %v4027 = vpack.c.b16 %v3261, %v3260
  %v4028 = vpack.c.b16 %v3263, %v3262
  %v4029 = vpack.c.b16 %v3265, %v3264
  %v4030 = vpack.c.b16 %v3267, %v3266
  %v4031 = vpack.c.b16 %v3269, %v3268
  %v4032 = vpack.c.b16 %v3271, %v3270
  %v4033 = vpack.c.b16 %v3273, %v3272
  %v4034 = vpack.c.b16 %v3275, %v3274
  %v4035 = vpack.c.b16 %v3277, %v3276
  %v4036 = vpack.c.b16 %v3279, %v3278
  %v4037 = vpack.c.b16 %v3281, %v3280
  %v4038 = vpack.c.b16 %v3283, %v3282
  %v4039 = vpack.c.b16 %v3285, %v3284
  %v4040 = vpack.c.b16 %v3287, %v3286
  %v4041 = vpack.c.b16 %v3289, %v3288
  %v4042 = vpack.c.b16 %v3291, %v3290
  %v4043 = vpack.c.b16 %v3293, %v3292
  %v4044 = vpack.c.b16 %v3295, %v3294
  %v4045 = vpack.c.b16 %v3297, %v3296
  %v4046 = vpack.c.b16 %v3299, %v3298
  %v4047 = vpack.c.b16 %v3301, %v3300
  %v4048 = vpack.c.b16 %v3303, %v3302
  %v4049 = vpack.c.b16 %v3305, %v3304
  %v4050 = vpack.c.b16 %v3307, %v3306
  %v4051 = vpack.c.b16 %v3309, %v3308
  %v4052 = vpack.c.b16 %v3311, %v3310
  %v4053 = vpack.c.b16 %v3313, %v3312
  %v4054 = vpack.c.b16 %v3315, %v3314
  %v4055 = vpack.c.b16 %v3317, %v3316
  %v4056 = vpack.c.b16 %v3319, %v3318
  %v4057 = vpack.c.b16 %v3321, %v3320
  %v4058 = vpack.c.b16 %v3323, %v3322
  %v4059 = vpack.c.b16 %v3325, %v3324
  %v4060 = vpack.c.b16 %v3327, %v3326
  %v4061 = vpack.c.b16 %v3329, %v3328
  %v4062 = vpack.c.b16 %v3331, %v3330
  %v4063 = vpack.c.b16 %v3333, %v3332
  %v4064 = vpack.c.b16 %v3335, %v3334
  %v4065 = vpack.c.b16 %v3337, %v3336
  %v4066 = vpack.c.b16 %v3339, %v3338
  %v4067 = vpack.c.b16 %v3341, %v3340
  %v4068 = vpack.c.b16 %v3343, %v3342
  %v4069 = vpack.c.b16 %v3345, %v3344
  %v4070 = vpack.c.b16 %v3347, %v3346
  %v4071 = vpack.c.b16 %v3349, %v3348
  %v4072 = vpack.c.b16 %v3351, %v3350
  %v4073 = vpack.c.b16 %v3353, %v3352
  %v4074 = vpack.c.b16 %v3355, %v3354
  %v4075 = vpack.c.b16 %v3357, %v3356
  %v4076 = vpack.c.b16 %v3359, %v3358
  %v4077 = vpack.c.b16 %v3361, %v3360
  %v4078 = vpack.c.b16 %v3363, %v3362
  %v4079 = vpack.c.b16 %v3365, %v3364
  %v4080 = vpack.c.b16 %v3367, %v3366
  %v4081 = vpack.c.b16 %v3369, %v3368
  %v4082 = vpack.c.b16 %v3371, %v3370
  %v4083 = vpack.c.b16 %v3373, %v3372
  %v4084 = vpack.c.b16 %v3375, %v3374
  %v4085 = vpack.c.b16 %v3377, %v3376
  %v4086 = vpack.c.b16 %v3379, %v3378
  %v4087 = vpack.c.b16 %v3381, %v3380
  %v4088 = vpack.c.b16 %v3383, %v3382
  %v4089 = vpack.c.b16 %v3385, %v3384
  %v4090 = vpack.c.b16 %v3387, %v3386
  %v4091 = vpack.c.b16 %v3389, %v3388
  %v4092 = vpack.c.b16 %v3391, %v3390
  %v4093 = vpack.c.b16 %v3393, %v3392
  %v4094 = vpack.c.b16 %v3395, %v3394
  %v4095 = vpack.c.b16 %v3397, %v3396
  %v4096 = vpack.c.b16 %v3399, %v3398
  %v4097 = vpack.c.b16 %v3401, %v3400
  %v4098 = vpack.c.b16 %v3403, %v3402
  %v4099 = vpack.c.b16 %v3405, %v3404
  %v4100 = vpack.c.b16 %v3407, %v3406
  %v4101 = vpack.c.b16 %v3409, %v3408
  %v4102 = vpack.c.b16 %v3411, %v3410
  %v4103 = vpack.c.b16 %v3413, %v3412
  %v4104 = vpack.c.b16 %v3415, %v3414
  %v4105 = vpack.c.b16 %v3417, %v3416
  %v4106 = vpack.c.b16 %v3419, %v3418
  %v4107 = vpack.c.b16 %v3421, %v3420
  %v4108 = vpack.c.b16 %v3423, %v3422
  %v4109 = vpack.c.b16 %v3425, %v3424
  %v4110 = vpack.c.b16 %v3427, %v3426
  %v4111 = vpack.c.b16 %v3429, %v3428
  %v4112 = vpack.c.b16 %v3431, %v3430
  %v4113 = vpack.c.b16 %v3433, %v3432
  %v4114 = vpack.c.b16 %v3435, %v3434
  %v4115 = vpack.c.b16 %v3437, %v3436
  %v4116 = vpack.c.b16 %v3439, %v3438
  %v4117 = vpack.c.b16 %v3441, %v3440
  %v4118 = vpack.c.b16 %v3443, %v3442
  %v4119 = vpack.c.b16 %v3445, %v3444
  %v4120 = vpack.c.b16 %v3447, %v3446
  %v4121 = vpack.c.b16 %v3449, %v3448
  %v4122 = vpack.c.b16 %v3451, %v3450
  %v4123 = vpack.c.b16 %v3453, %v3452
  %v4124 = vpack.c.b16 %v3455, %v3454
  %v4125 = vpack.c.b16 %v3457, %v3456
  %v4126 = vpack.c.b16 %v3459, %v3458
  %v4127 = vpack.c.b16 %v3461, %v3460
  %v4128 = vpack.c.b16 %v3463, %v3462
  %v4129 = vpack.c.b16 %v3465, %v3464
  %v4130 = vpack.c.b16 %v3467, %v3466
  %v4131 = vpack.c.b16 %v3469, %v3468
  %v4132 = vpack.c.b16 %v3471, %v3470
  %v4133 = vpack.c.b16 %v3473, %v3472
  %v4134 = vpack.c.b16 %v3475, %v3474
  %v4135 = vpack.c.b16 %v3477, %v3476
  %v4136 = vpack.c.b16 %v3479, %v3478
  %v4137 = vpack.c.b16 %v3481, %v3480
  %v4138 = vpack.c.b16 %v3483, %v3482
  %v4139 = vpack.c.b16 %v3485, %v3484
  %v4140 = vpack.c.b16 %v3487, %v3486
  %v4141 = vpack.c.b16 %v3489, %v3488
  %v4142 = vpack.c.b16 %v3491, %v3490
  %v4143 = vpack.c.b16 %v3493, %v3492
  %v4144 = vpack.c.b16 %v3495, %v3494
  %v4145 = vpack.c.b16 %v3497, %v3496
  %v4146 = vpack.c.b16 %v3499, %v3498
  %v4147 = vpack.c.b16 %v3501, %v3500
  %v4148 = vpack.c.b16 %v3503, %v3502
  %v4149 = vpack.c.b16 %v3505, %v3504
  %v4150 = vpack.c.b16 %v3507, %v3506
  %v4151 = vpack.c.b16 %v3509, %v3508
  %v4152 = vpack.c.b16 %v3511, %v3510
  %v4153 = vpack.c.b16 %v3513, %v3512
  %v4154 = vpack.c.b16 %v3515, %v3514
  %v4155 = vpack.c.b16 %v3517, %v3516
  %v4156 = vpack.c.b16 %v3519, %v3518
  %v4157 = vpack.c.b16 %v3521, %v3520
  %v4158 = vpack.c.b16 %v3523, %v3522
  %v4159 = vpack.c.b16 %v3525, %v3524
  %v4160 = vpack.c.b16 %v3527, %v3526
  %v4161 = vpack.c.b16 %v3529, %v3528
  %v4162 = vpack.c.b16 %v3531, %v3530
  %v4163 = vpack.c.b16 %v3533, %v3532
  %v4164 = vpack.c.b16 %v3535, %v3534
  %v4165 = vpack.c.b16 %v3537, %v3536
  %v4166 = vpack.c.b16 %v3539, %v3538
  %v4167 = vpack.c.b16 %v3541, %v3540
  %v4168 = vpack.c.b16 %v3543, %v3542
  %v4169 = vpack.c.b16 %v3545, %v3544
  %v4170 = vpack.c.b16 %v3547, %v3546
  %v4171 = vpack.c.b16 %v3549, %v3548
  %v4172 = vpack.c.b16 %v3551, %v3550
  %v4173 = vpack.c.b16 %v3553, %v3552
  %v4174 = vpack.c.b16 %v3555, %v3554
  %v4175 = vpack.c.b16 %v3557, %v3556
  %v4176 = vpack.c.b16 %v3559, %v3558
  %v4177 = vpack.c.b16 %v3561, %v3560
  %v4178 = vpack.c.b16 %v3563, %v3562
  %v4179 = vpack.c.b16 %v3565, %v3564
  %v4180 = vpack.c.b16 %v3567, %v3566
  %v4181 = vpack.c.b16 %v3569, %v3568
  %v4182 = vpack.c.b16 %v3571, %v3570
  %v4183 = vpack.c.b16 %v3573, %v3572
  %v4184 = vpack.c.b16 %v3575, %v3574
  %v4185 = vpack.c.b16 %v3577, %v3576
  %v4186 = vpack.c.b16 %v3579, %v3578
  %v4187 = vpack.c.b16 %v3581, %v3580
  %v4188 = vpack.c.b16 %v3583, %v3582
  %v4189 = vpack.c.b16 %v3585, %v3584
  %v4190 = vpack.c.b16 %v3587, %v3586
  %v4191 = vpack.c.b16 %v3589, %v3588
  %v4192 = vpack.c.b16 %v3591, %v3590
  %v4193 = vpack.c.b16 %v3593, %v3592
  %v4194 = vpack.c.b16 %v3595, %v3594
  %v4195 = vpack.c.b16 %v3597, %v3596
  %v4196 = vpack.c.b16 %v3599, %v3598
  %v4197 = vpack.c.b16 %v3601, %v3600
  %v4198 = vpack.c.b16 %v3603, %v3602
  %v4199 = vpack.c.b16 %v3605, %v3604
  %v4200 = vpack.c.b16 %v3607, %v3606
  %v4201 = vpack.c.b16 %v3609, %v3608
  %v4202 = vpack.c.b16 %v3611, %v3610
  %v4203 = vpack.c.b16 %v3613, %v3612
  %v4204 = vpack.c.b16 %v3615, %v3614
  %v4205 = vpack.c.b16 %v3617, %v3616
  %v4206 = vpack.c.b16 %v3619, %v3618
  %v4207 = vpack.c.b16 %v3621, %v3620
  %v4208 = vpack.c.b16 %v3623, %v3622
  %v4209 = vpack.c.b16 %v3625, %v3624
  %v4210 = vpack.c.b16 %v3627, %v3626
  %v4211 = vpack.c.b16 %v3629, %v3628
  %v4212 = vpack.c.b16 %v3631, %v3630
  %v4213 = vpack.c.b16 %v3633, %v3632
  %v4214 = vpack.c.b16 %v3635, %v3634
  %v4215 = vpack.c.b16 %v3637, %v3636
  %v4216 = vpack.c.b16 %v3639, %v3638
  %v4217 = vpack.c.b16 %v3641, %v3640
  %v4218 = vpack.c.b16 %v3643, %v3642
  %v4219 = vpack.c.b16 %v3645, %v3644
  %v4220 = vpack.c.b16 %v3647, %v3646
  %v4221 = vpack.c.b16 %v3649, %v3648
  %v4222 = vpack.c.b16 %v3651, %v3650
  %v4223 = vpack.c.b16 %v3653, %v3652
  %v4224 = vpack.c.b16 %v3655, %v3654
  %v4225 = vpack.c.b16 %v3657, %v3656
  %v4226 = vpack.c.b16 %v3659, %v3658
  %v4227 = vpack.c.b16 %v3661, %v3660
  %v4228 = vpack.c.b16 %v3663, %v3662
  %v4229 = vpack.c.b16 %v3665, %v3664
  %v4230 = vpack.c.b16 %v3667, %v3666
  %v4231 = vpack.c.b16 %v3669, %v3668
  %v4232 = vpack.c.b16 %v3671, %v3670
  %v4233 = vpack.c.b16 %v3673, %v3672
  %4794 = vmatpush.bf16.msra.mxu0 %v3681
  %4795 = vmatpush.bf16.msra.mxu0 %v3680
  %4796 = vmatpush.bf16.msra.mxu0 %v3679
  %4797 = vmatpush.bf16.msra.mxu0 %v3678
  %4798 = vmatpush.bf16.msra.mxu0 %v3677
  %4799 = vmatpush.bf16.msra.mxu0 %v3676
  %4800 = vmatpush.bf16.msra.mxu0 %v3675
  %4801 = vmatpush.bf16.msra.mxu0 %v3674
  %4802 = vmatmul.bf16.gmra.mxu0 %v1294
  %v4803 = vpop.f32.mrf.mxu0
  %v4804 = vadd.f32 0.0, %v4803
  %v4805 = vpop.f32.mrf.mxu0
  %4806 = vdwg.mxu0
  %4807 = vmatpush.bf16.msra.mxu0 %v3689
  %4808 = vmatpush.bf16.msra.mxu0 %v3688
  %4809 = vmatpush.bf16.msra.mxu0 %v3687
  %4810 = vmatpush.bf16.msra.mxu0 %v3686
  %4811 = vmatpush.bf16.msra.mxu0 %v3685
  %4812 = vmatpush.bf16.msra.mxu0 %v3684
  %4813 = vmatpush.bf16.msra.mxu0 %v3683
  %4814 = vmatpush.bf16.msra.mxu0 %v3682
  %4815 = vmatmul.bf16.gmra.mxu0 %v1295
  %v4816 = vpop.f32.mrf.mxu0
  %v4817 = vadd.f32 %v4804, %v4816
  %v4818 = vpop.f32.mrf.mxu0
  %4819 = vdwg.mxu0
  %4820 = vmatpush.bf16.msra.mxu0 %v3697
  %4821 = vmatpush.bf16.msra.mxu0 %v3696
  %4822 = vmatpush.bf16.msra.mxu0 %v3695
  %4823 = vmatpush.bf16.msra.mxu0 %v3694
  %4824 = vmatpush.bf16.msra.mxu0 %v3693
  %4825 = vmatpush.bf16.msra.mxu0 %v3692
  %4826 = vmatpush.bf16.msra.mxu0 %v3691
  %4827 = vmatpush.bf16.msra.mxu0 %v3690
  %4828 = vmatmul.bf16.gmra.mxu0 %v1296
  %v4829 = vpop.f32.mrf.mxu0
  %v4830 = vadd.f32 %v4817, %v4829
  %v4831 = vpop.f32.mrf.mxu0
  %4832 = vdwg.mxu0
  %4833 = vmatpush.bf16.msra.mxu0 %v3705
  %4834 = vmatpush.bf16.msra.mxu0 %v3704
  %4835 = vmatpush.bf16.msra.mxu0 %v3703
  %4836 = vmatpush.bf16.msra.mxu0 %v3702
  %4837 = vmatpush.bf16.msra.mxu0 %v3701
  %4838 = vmatpush.bf16.msra.mxu0 %v3700
  %4839 = vmatpush.bf16.msra.mxu0 %v3699
  %4840 = vmatpush.bf16.msra.mxu0 %v3698
  %4841 = vmatmul.bf16.gmra.mxu0 %v1297
  %v4842 = vpop.f32.mrf.mxu0
  %v4843 = vadd.f32 %v4830, %v4842
  %v4844 = vpop.f32.mrf.mxu0
  %4845 = vdwg.mxu0
  %4846 = vmatpush.bf16.msra.mxu0 %v3713
  %4847 = vmatpush.bf16.msra.mxu0 %v3712
  %4848 = vmatpush.bf16.msra.mxu0 %v3711
  %4849 = vmatpush.bf16.msra.mxu0 %v3710
  %4850 = vmatpush.bf16.msra.mxu0 %v3709
  %4851 = vmatpush.bf16.msra.mxu0 %v3708
  %4852 = vmatpush.bf16.msra.mxu0 %v3707
  %4853 = vmatpush.bf16.msra.mxu0 %v3706
  %4854 = vmatmul.bf16.gmra.mxu0 %v1298
  %v4855 = vpop.f32.mrf.mxu0
  %v4856 = vadd.f32 %v4843, %v4855
  %v4857 = vpop.f32.mrf.mxu0
  %4858 = vdwg.mxu0
  %4859 = vmatpush.bf16.msra.mxu0 %v3721
  %4860 = vmatpush.bf16.msra.mxu0 %v3720
  %4861 = vmatpush.bf16.msra.mxu0 %v3719
  %4862 = vmatpush.bf16.msra.mxu0 %v3718
  %4863 = vmatpush.bf16.msra.mxu0 %v3717
  %4864 = vmatpush.bf16.msra.mxu0 %v3716
  %4865 = vmatpush.bf16.msra.mxu0 %v3715
  %4866 = vmatpush.bf16.msra.mxu0 %v3714
  %4867 = vmatmul.bf16.gmra.mxu0 %v1299
  %v4868 = vpop.f32.mrf.mxu0
  %v4869 = vadd.f32 %v4856, %v4868
  %v4870 = vpop.f32.mrf.mxu0
  %4871 = vdwg.mxu0
  %4872 = vmatpush.bf16.msra.mxu0 %v3729
  %4873 = vmatpush.bf16.msra.mxu0 %v3728
  %4874 = vmatpush.bf16.msra.mxu0 %v3727
  %4875 = vmatpush.bf16.msra.mxu0 %v3726
  %4876 = vmatpush.bf16.msra.mxu0 %v3725
  %4877 = vmatpush.bf16.msra.mxu0 %v3724
  %4878 = vmatpush.bf16.msra.mxu0 %v3723
  %4879 = vmatpush.bf16.msra.mxu0 %v3722
  %4880 = vmatmul.bf16.gmra.mxu0 %v1300
  %v4881 = vpop.f32.mrf.mxu0
  %v4882 = vadd.f32 %v4869, %v4881
  %v4883 = vpop.f32.mrf.mxu0
  %4884 = vdwg.mxu0
  %4885 = vmatpush.bf16.msra.mxu0 %v3737
  %4886 = vmatpush.bf16.msra.mxu0 %v3736
  %4887 = vmatpush.bf16.msra.mxu0 %v3735
  %4888 = vmatpush.bf16.msra.mxu0 %v3734
  %4889 = vmatpush.bf16.msra.mxu0 %v3733
  %4890 = vmatpush.bf16.msra.mxu0 %v3732
  %4891 = vmatpush.bf16.msra.mxu0 %v3731
  %4892 = vmatpush.bf16.msra.mxu0 %v3730
  %4893 = vmatmul.bf16.gmra.mxu0 %v1301
  %v4894 = vpop.f32.mrf.mxu0
  %v4895 = vadd.f32 %v4882, %v4894
  %v4896 = vpop.f32.mrf.mxu0
  %4897 = vdwg.mxu0
  %4898 = vmatpush.bf16.msra.mxu0 %v3745
  %4899 = vmatpush.bf16.msra.mxu0 %v3744
  %4900 = vmatpush.bf16.msra.mxu0 %v3743
  %4901 = vmatpush.bf16.msra.mxu0 %v3742
  %4902 = vmatpush.bf16.msra.mxu0 %v3741
  %4903 = vmatpush.bf16.msra.mxu0 %v3740
  %4904 = vmatpush.bf16.msra.mxu0 %v3739
  %4905 = vmatpush.bf16.msra.mxu0 %v3738
  %4906 = vmatmul.bf16.gmra.mxu0 %v1302
  %v4907 = vpop.f32.mrf.mxu0
  %v4908 = vadd.f32 %v4895, %v4907
  %v4909 = vpop.f32.mrf.mxu0
  %4910 = vdwg.mxu0
  %4911 = vmatpush.bf16.msra.mxu0 %v3753
  %4912 = vmatpush.bf16.msra.mxu0 %v3752
  %4913 = vmatpush.bf16.msra.mxu0 %v3751
  %4914 = vmatpush.bf16.msra.mxu0 %v3750
  %4915 = vmatpush.bf16.msra.mxu0 %v3749
  %4916 = vmatpush.bf16.msra.mxu0 %v3748
  %4917 = vmatpush.bf16.msra.mxu0 %v3747
  %4918 = vmatpush.bf16.msra.mxu0 %v3746
  %4919 = vmatmul.bf16.gmra.mxu0 %v1303
  %v4920 = vpop.f32.mrf.mxu0
  %v4921 = vadd.f32 %v4908, %v4920
  %v4922 = vpop.f32.mrf.mxu0
  %4923 = vdwg.mxu0
  %4924 = vmatpush.bf16.msra.mxu0 %v3761
  %4925 = vmatpush.bf16.msra.mxu0 %v3760
  %4926 = vmatpush.bf16.msra.mxu0 %v3759
  %4927 = vmatpush.bf16.msra.mxu0 %v3758
  %4928 = vmatpush.bf16.msra.mxu0 %v3757
  %4929 = vmatpush.bf16.msra.mxu0 %v3756
  %4930 = vmatpush.bf16.msra.mxu0 %v3755
  %4931 = vmatpush.bf16.msra.mxu0 %v3754
  %4932 = vmatmul.bf16.gmra.mxu0 %v1304
  %v4933 = vpop.f32.mrf.mxu0
  %v4934 = vadd.f32 %v4921, %v4933
  %v4935 = vpop.f32.mrf.mxu0
  %4936 = vdwg.mxu0
  %4937 = vmatpush.bf16.msra.mxu0 %v3769
  %4938 = vmatpush.bf16.msra.mxu0 %v3768
  %4939 = vmatpush.bf16.msra.mxu0 %v3767
  %4940 = vmatpush.bf16.msra.mxu0 %v3766
  %4941 = vmatpush.bf16.msra.mxu0 %v3765
  %4942 = vmatpush.bf16.msra.mxu0 %v3764
  %4943 = vmatpush.bf16.msra.mxu0 %v3763
  %4944 = vmatpush.bf16.msra.mxu0 %v3762
  %4945 = vmatmul.bf16.gmra.mxu0 %v1305
  %v4946 = vpop.f32.mrf.mxu0
  %v4947 = vadd.f32 %v4934, %v4946
  %v4948 = vpop.f32.mrf.mxu0
  %4949 = vdwg.mxu0
  %4950 = vmatpush.bf16.msra.mxu0 %v3777
  %4951 = vmatpush.bf16.msra.mxu0 %v3776
  %4952 = vmatpush.bf16.msra.mxu0 %v3775
  %4953 = vmatpush.bf16.msra.mxu0 %v3774
  %4954 = vmatpush.bf16.msra.mxu0 %v3773
  %4955 = vmatpush.bf16.msra.mxu0 %v3772
  %4956 = vmatpush.bf16.msra.mxu0 %v3771
  %4957 = vmatpush.bf16.msra.mxu0 %v3770
  %4958 = vmatmul.bf16.gmra.mxu0 %v1306
  %v4959 = vpop.f32.mrf.mxu0
  %v4960 = vadd.f32 %v4947, %v4959
  %v4961 = vpop.f32.mrf.mxu0
  %4962 = vdwg.mxu0
  %4963 = vmatpush.bf16.msra.mxu0 %v3785
  %4964 = vmatpush.bf16.msra.mxu0 %v3784
  %4965 = vmatpush.bf16.msra.mxu0 %v3783
  %4966 = vmatpush.bf16.msra.mxu0 %v3782
  %4967 = vmatpush.bf16.msra.mxu0 %v3781
  %4968 = vmatpush.bf16.msra.mxu0 %v3780
  %4969 = vmatpush.bf16.msra.mxu0 %v3779
  %4970 = vmatpush.bf16.msra.mxu0 %v3778
  %4971 = vmatmul.bf16.gmra.mxu0 %v1307
  %v4972 = vpop.f32.mrf.mxu0
  %v4973 = vadd.f32 %v4960, %v4972
  %v4974 = vpop.f32.mrf.mxu0
  %4975 = vdwg.mxu0
  %4976 = vmatpush.bf16.msra.mxu0 %v3793
  %4977 = vmatpush.bf16.msra.mxu0 %v3792
  %4978 = vmatpush.bf16.msra.mxu0 %v3791
  %4979 = vmatpush.bf16.msra.mxu0 %v3790
  %4980 = vmatpush.bf16.msra.mxu0 %v3789
  %4981 = vmatpush.bf16.msra.mxu0 %v3788
  %4982 = vmatpush.bf16.msra.mxu0 %v3787
  %4983 = vmatpush.bf16.msra.mxu0 %v3786
  %4984 = vmatmul.bf16.gmra.mxu0 %v1308
  %v4985 = vpop.f32.mrf.mxu0
  %v4986 = vadd.f32 %v4973, %v4985
  %v4987 = vpop.f32.mrf.mxu0
  %4988 = vdwg.mxu0
  %4989 = vmatpush.bf16.msra.mxu0 %v3801
  %4990 = vmatpush.bf16.msra.mxu0 %v3800
  %4991 = vmatpush.bf16.msra.mxu0 %v3799
  %4992 = vmatpush.bf16.msra.mxu0 %v3798
  %4993 = vmatpush.bf16.msra.mxu0 %v3797
  %4994 = vmatpush.bf16.msra.mxu0 %v3796
  %4995 = vmatpush.bf16.msra.mxu0 %v3795
  %4996 = vmatpush.bf16.msra.mxu0 %v3794
  %4997 = vmatmul.bf16.gmra.mxu0 %v1309
  %v4998 = vpop.f32.mrf.mxu0
  %v4999 = vadd.f32 %v4986, %v4998
  %v5000 = vpop.f32.mrf.mxu0
  %5001 = vdwg.mxu0
  %5002 = vmatpush.bf16.msra.mxu0 %v3809
  %5003 = vmatpush.bf16.msra.mxu0 %v3808
  %5004 = vmatpush.bf16.msra.mxu0 %v3807
  %5005 = vmatpush.bf16.msra.mxu0 %v3806
  %5006 = vmatpush.bf16.msra.mxu0 %v3805
  %5007 = vmatpush.bf16.msra.mxu0 %v3804
  %5008 = vmatpush.bf16.msra.mxu0 %v3803
  %5009 = vmatpush.bf16.msra.mxu0 %v3802
  %5010 = vmatmul.bf16.gmra.mxu0 %v1310
  %v5011 = vpop.f32.mrf.mxu0
  %v5012 = vadd.f32 %v4999, %v5011
  %v5013 = vpop.f32.mrf.mxu0
  %5014 = vdwg.mxu0
  %5015 = vmatpush.bf16.msra.mxu0 %v3817
  %5016 = vmatpush.bf16.msra.mxu0 %v3816
  %5017 = vmatpush.bf16.msra.mxu0 %v3815
  %5018 = vmatpush.bf16.msra.mxu0 %v3814
  %5019 = vmatpush.bf16.msra.mxu0 %v3813
  %5020 = vmatpush.bf16.msra.mxu0 %v3812
  %5021 = vmatpush.bf16.msra.mxu0 %v3811
  %5022 = vmatpush.bf16.msra.mxu0 %v3810
  %5023 = vmatmul.bf16.gmra.mxu0 %v1311
  %v5024 = vpop.f32.mrf.mxu0
  %v5025 = vadd.f32 %v5012, %v5024
  %v5026 = vpop.f32.mrf.mxu0
  %5027 = vdwg.mxu0
  %5028 = vmatpush.bf16.msra.mxu0 %v3825
  %5029 = vmatpush.bf16.msra.mxu0 %v3824
  %5030 = vmatpush.bf16.msra.mxu0 %v3823
  %5031 = vmatpush.bf16.msra.mxu0 %v3822
  %5032 = vmatpush.bf16.msra.mxu0 %v3821
  %5033 = vmatpush.bf16.msra.mxu0 %v3820
  %5034 = vmatpush.bf16.msra.mxu0 %v3819
  %5035 = vmatpush.bf16.msra.mxu0 %v3818
  %5036 = vmatmul.bf16.gmra.mxu0 %v1312
  %v5037 = vpop.f32.mrf.mxu0
  %v5038 = vadd.f32 %v5025, %v5037
  %v5039 = vpop.f32.mrf.mxu0
  %5040 = vdwg.mxu0
  %5041 = vmatpush.bf16.msra.mxu0 %v3833
  %5042 = vmatpush.bf16.msra.mxu0 %v3832
  %5043 = vmatpush.bf16.msra.mxu0 %v3831
  %5044 = vmatpush.bf16.msra.mxu0 %v3830
  %5045 = vmatpush.bf16.msra.mxu0 %v3829
  %5046 = vmatpush.bf16.msra.mxu0 %v3828
  %5047 = vmatpush.bf16.msra.mxu0 %v3827
  %5048 = vmatpush.bf16.msra.mxu0 %v3826
  %5049 = vmatmul.bf16.gmra.mxu0 %v1313
  %v5050 = vpop.f32.mrf.mxu0
  %v5051 = vadd.f32 %v5038, %v5050
  %v5052 = vpop.f32.mrf.mxu0
  %5053 = vdwg.mxu0
  %5054 = vmatpush.bf16.msra.mxu0 %v3841
  %5055 = vmatpush.bf16.msra.mxu0 %v3840
  %5056 = vmatpush.bf16.msra.mxu0 %v3839
  %5057 = vmatpush.bf16.msra.mxu0 %v3838
  %5058 = vmatpush.bf16.msra.mxu0 %v3837
  %5059 = vmatpush.bf16.msra.mxu0 %v3836
  %5060 = vmatpush.bf16.msra.mxu0 %v3835
  %5061 = vmatpush.bf16.msra.mxu0 %v3834
  %5062 = vmatmul.bf16.gmra.mxu0 %v1314
  %v5063 = vpop.f32.mrf.mxu0
  %v5064 = vadd.f32 %v5051, %v5063
  %v5065 = vpop.f32.mrf.mxu0
  %5066 = vdwg.mxu0
  %5067 = vmatpush.bf16.msra.mxu0 %v3849
  %5068 = vmatpush.bf16.msra.mxu0 %v3848
  %5069 = vmatpush.bf16.msra.mxu0 %v3847
  %5070 = vmatpush.bf16.msra.mxu0 %v3846
  %5071 = vmatpush.bf16.msra.mxu0 %v3845
  %5072 = vmatpush.bf16.msra.mxu0 %v3844
  %5073 = vmatpush.bf16.msra.mxu0 %v3843
  %5074 = vmatpush.bf16.msra.mxu0 %v3842
  %5075 = vmatmul.bf16.gmra.mxu0 %v1315
  %v5076 = vpop.f32.mrf.mxu0
  %v5077 = vadd.f32 %v5064, %v5076
  %v5078 = vpop.f32.mrf.mxu0
  %5079 = vdwg.mxu0
  %5080 = vmatpush.bf16.msra.mxu0 %v3857
  %5081 = vmatpush.bf16.msra.mxu0 %v3856
  %5082 = vmatpush.bf16.msra.mxu0 %v3855
  %5083 = vmatpush.bf16.msra.mxu0 %v3854
  %5084 = vmatpush.bf16.msra.mxu0 %v3853
  %5085 = vmatpush.bf16.msra.mxu0 %v3852
  %5086 = vmatpush.bf16.msra.mxu0 %v3851
  %5087 = vmatpush.bf16.msra.mxu0 %v3850
  %5088 = vmatmul.bf16.gmra.mxu0 %v1316
  %v5089 = vpop.f32.mrf.mxu0
  %v5090 = vadd.f32 %v5077, %v5089
  %v5091 = vpop.f32.mrf.mxu0
  %5092 = vdwg.mxu0
  %5093 = vmatpush.bf16.msra.mxu0 %v3865
  %5094 = vmatpush.bf16.msra.mxu0 %v3864
  %5095 = vmatpush.bf16.msra.mxu0 %v3863
  %5096 = vmatpush.bf16.msra.mxu0 %v3862
  %5097 = vmatpush.bf16.msra.mxu0 %v3861
  %5098 = vmatpush.bf16.msra.mxu0 %v3860
  %5099 = vmatpush.bf16.msra.mxu0 %v3859
  %5100 = vmatpush.bf16.msra.mxu0 %v3858
  %5101 = vmatmul.bf16.gmra.mxu0 %v1317
  %v5102 = vpop.f32.mrf.mxu0
  %v5103 = vadd.f32 %v5090, %v5102
  %v5104 = vpop.f32.mrf.mxu0
  %5105 = vdwg.mxu0
  %5106 = vmatpush.bf16.msra.mxu0 %v3873
  %5107 = vmatpush.bf16.msra.mxu0 %v3872
  %5108 = vmatpush.bf16.msra.mxu0 %v3871
  %5109 = vmatpush.bf16.msra.mxu0 %v3870
  %5110 = vmatpush.bf16.msra.mxu0 %v3869
  %5111 = vmatpush.bf16.msra.mxu0 %v3868
  %5112 = vmatpush.bf16.msra.mxu0 %v3867
  %5113 = vmatpush.bf16.msra.mxu0 %v3866
  %5114 = vmatmul.bf16.gmra.mxu0 %v1318
  %v5115 = vpop.f32.mrf.mxu0
  %v5116 = vadd.f32 %v5103, %v5115
  %v5117 = vpop.f32.mrf.mxu0
  %5118 = vdwg.mxu0
  %5119 = vmatpush.bf16.msra.mxu0 %v3881
  %5120 = vmatpush.bf16.msra.mxu0 %v3880
  %5121 = vmatpush.bf16.msra.mxu0 %v3879
  %5122 = vmatpush.bf16.msra.mxu0 %v3878
  %5123 = vmatpush.bf16.msra.mxu0 %v3877
  %5124 = vmatpush.bf16.msra.mxu0 %v3876
  %5125 = vmatpush.bf16.msra.mxu0 %v3875
  %5126 = vmatpush.bf16.msra.mxu0 %v3874
  %5127 = vmatmul.bf16.gmra.mxu0 %v1319
  %v5128 = vpop.f32.mrf.mxu0
  %v5129 = vadd.f32 %v5116, %v5128
  %v5130 = vpop.f32.mrf.mxu0
  %5131 = vdwg.mxu0
  %5132 = vmatpush.bf16.msra.mxu0 %v3889
  %5133 = vmatpush.bf16.msra.mxu0 %v3888
  %5134 = vmatpush.bf16.msra.mxu0 %v3887
  %5135 = vmatpush.bf16.msra.mxu0 %v3886
  %5136 = vmatpush.bf16.msra.mxu0 %v3885
  %5137 = vmatpush.bf16.msra.mxu0 %v3884
  %5138 = vmatpush.bf16.msra.mxu0 %v3883
  %5139 = vmatpush.bf16.msra.mxu0 %v3882
  %5140 = vmatmul.bf16.gmra.mxu0 %v1320
  %v5141 = vpop.f32.mrf.mxu0
  %v5142 = vadd.f32 %v5129, %v5141
  %v5143 = vpop.f32.mrf.mxu0
  %5144 = vdwg.mxu0
  %5145 = vmatpush.bf16.msra.mxu0 %v3897
  %5146 = vmatpush.bf16.msra.mxu0 %v3896
  %5147 = vmatpush.bf16.msra.mxu0 %v3895
  %5148 = vmatpush.bf16.msra.mxu0 %v3894
  %5149 = vmatpush.bf16.msra.mxu0 %v3893
  %5150 = vmatpush.bf16.msra.mxu0 %v3892
  %5151 = vmatpush.bf16.msra.mxu0 %v3891
  %5152 = vmatpush.bf16.msra.mxu0 %v3890
  %5153 = vmatmul.bf16.gmra.mxu0 %v1321
  %v5154 = vpop.f32.mrf.mxu0
  %v5155 = vadd.f32 %v5142, %v5154
  %v5156 = vpop.f32.mrf.mxu0
  %5157 = vdwg.mxu0
  %5158 = vmatpush.bf16.msra.mxu0 %v3905
  %5159 = vmatpush.bf16.msra.mxu0 %v3904
  %5160 = vmatpush.bf16.msra.mxu0 %v3903
  %5161 = vmatpush.bf16.msra.mxu0 %v3902
  %5162 = vmatpush.bf16.msra.mxu0 %v3901
  %5163 = vmatpush.bf16.msra.mxu0 %v3900
  %5164 = vmatpush.bf16.msra.mxu0 %v3899
  %5165 = vmatpush.bf16.msra.mxu0 %v3898
  %5166 = vmatmul.bf16.gmra.mxu0 %v1322
  %v5167 = vpop.f32.mrf.mxu0
  %v5168 = vadd.f32 %v5155, %v5167
  %v5169 = vpop.f32.mrf.mxu0
  %5170 = vdwg.mxu0
  %5171 = vmatpush.bf16.msra.mxu0 %v3913
  %5172 = vmatpush.bf16.msra.mxu0 %v3912
  %5173 = vmatpush.bf16.msra.mxu0 %v3911
  %5174 = vmatpush.bf16.msra.mxu0 %v3910
  %5175 = vmatpush.bf16.msra.mxu0 %v3909
  %5176 = vmatpush.bf16.msra.mxu0 %v3908
  %5177 = vmatpush.bf16.msra.mxu0 %v3907
  %5178 = vmatpush.bf16.msra.mxu0 %v3906
  %5179 = vmatmul.bf16.gmra.mxu0 %v1323
  %v5180 = vpop.f32.mrf.mxu0
  %v5181 = vadd.f32 %v5168, %v5180
  %v5182 = vpop.f32.mrf.mxu0
  %5183 = vdwg.mxu0
  %5184 = vmatpush.bf16.msra.mxu0 %v3921
  %5185 = vmatpush.bf16.msra.mxu0 %v3920
  %5186 = vmatpush.bf16.msra.mxu0 %v3919
  %5187 = vmatpush.bf16.msra.mxu0 %v3918
  %5188 = vmatpush.bf16.msra.mxu0 %v3917
  %5189 = vmatpush.bf16.msra.mxu0 %v3916
  %5190 = vmatpush.bf16.msra.mxu0 %v3915
  %5191 = vmatpush.bf16.msra.mxu0 %v3914
  %5192 = vmatmul.bf16.gmra.mxu0 %v1324
  %v5193 = vpop.f32.mrf.mxu0
  %v5194 = vadd.f32 %v5181, %v5193
  %v5195 = vpop.f32.mrf.mxu0
  %5196 = vdwg.mxu0
  %5197 = vmatpush.bf16.msra.mxu0 %v3929
  %5198 = vmatpush.bf16.msra.mxu0 %v3928
  %5199 = vmatpush.bf16.msra.mxu0 %v3927
  %5200 = vmatpush.bf16.msra.mxu0 %v3926
  %5201 = vmatpush.bf16.msra.mxu0 %v3925
  %5202 = vmatpush.bf16.msra.mxu0 %v3924
  %5203 = vmatpush.bf16.msra.mxu0 %v3923
  %5204 = vmatpush.bf16.msra.mxu0 %v3922
  %5205 = vmatmul.bf16.gmra.mxu0 %v1325
  %v5206 = vpop.f32.mrf.mxu0
  %v5207 = vadd.f32 %v5194, %v5206
  %v5208 = vpop.f32.mrf.mxu0
  %5209 = vdwg.mxu0
  %5210 = vmatpush.bf16.msra.mxu0 %v3937
  %5211 = vmatpush.bf16.msra.mxu0 %v3936
  %5212 = vmatpush.bf16.msra.mxu0 %v3935
  %5213 = vmatpush.bf16.msra.mxu0 %v3934
  %5214 = vmatpush.bf16.msra.mxu0 %v3933
  %5215 = vmatpush.bf16.msra.mxu0 %v3932
  %5216 = vmatpush.bf16.msra.mxu0 %v3931
  %5217 = vmatpush.bf16.msra.mxu0 %v3930
  %5218 = vmatmul.bf16.gmra.mxu0 %v1326
  %v5219 = vpop.f32.mrf.mxu0
  %v5220 = vadd.f32 %v5207, %v5219
  %v5221 = vpop.f32.mrf.mxu0
  %5222 = vdwg.mxu0
  %5223 = vmatpush.bf16.msra.mxu0 %v3945
  %5224 = vmatpush.bf16.msra.mxu0 %v3944
  %5225 = vmatpush.bf16.msra.mxu0 %v3943
  %5226 = vmatpush.bf16.msra.mxu0 %v3942
  %5227 = vmatpush.bf16.msra.mxu0 %v3941
  %5228 = vmatpush.bf16.msra.mxu0 %v3940
  %5229 = vmatpush.bf16.msra.mxu0 %v3939
  %5230 = vmatpush.bf16.msra.mxu0 %v3938
  %5231 = vmatmul.bf16.gmra.mxu0 %v1327
  %v5232 = vpop.f32.mrf.mxu0
  %v5233 = vadd.f32 %v5220, %v5232
  %v5234 = vpop.f32.mrf.mxu0
  %5235 = vdwg.mxu0
  %5236 = vmatpush.bf16.msra.mxu0 %v3953
  %5237 = vmatpush.bf16.msra.mxu0 %v3952
  %5238 = vmatpush.bf16.msra.mxu0 %v3951
  %5239 = vmatpush.bf16.msra.mxu0 %v3950
  %5240 = vmatpush.bf16.msra.mxu0 %v3949
  %5241 = vmatpush.bf16.msra.mxu0 %v3948
  %5242 = vmatpush.bf16.msra.mxu0 %v3947
  %5243 = vmatpush.bf16.msra.mxu0 %v3946
  %5244 = vmatmul.bf16.gmra.mxu0 %v1328
  %v5245 = vpop.f32.mrf.mxu0
  %v5246 = vadd.f32 %v5233, %v5245
  %v5247 = vpop.f32.mrf.mxu0
  %5248 = vdwg.mxu0
  %5249 = vmatpush.bf16.msra.mxu0 %v3961
  %5250 = vmatpush.bf16.msra.mxu0 %v3960
  %5251 = vmatpush.bf16.msra.mxu0 %v3959
  %5252 = vmatpush.bf16.msra.mxu0 %v3958
  %5253 = vmatpush.bf16.msra.mxu0 %v3957
  %5254 = vmatpush.bf16.msra.mxu0 %v3956
  %5255 = vmatpush.bf16.msra.mxu0 %v3955
  %5256 = vmatpush.bf16.msra.mxu0 %v3954
  %5257 = vmatmul.bf16.gmra.mxu0 %v1329
  %v5258 = vpop.f32.mrf.mxu0
  %v5259 = vadd.f32 %v5246, %v5258
  %v5260 = vpop.f32.mrf.mxu0
  %5261 = vdwg.mxu0
  %5262 = vmatpush.bf16.msra.mxu0 %v3969
  %5263 = vmatpush.bf16.msra.mxu0 %v3968
  %5264 = vmatpush.bf16.msra.mxu0 %v3967
  %5265 = vmatpush.bf16.msra.mxu0 %v3966
  %5266 = vmatpush.bf16.msra.mxu0 %v3965
  %5267 = vmatpush.bf16.msra.mxu0 %v3964
  %5268 = vmatpush.bf16.msra.mxu0 %v3963
  %5269 = vmatpush.bf16.msra.mxu0 %v3962
  %5270 = vmatmul.bf16.gmra.mxu0 %v1330
  %v5271 = vpop.f32.mrf.mxu0
  %v5272 = vadd.f32 %v5259, %v5271
  %v5273 = vpop.f32.mrf.mxu0
  %5274 = vdwg.mxu0
  %5275 = vmatpush.bf16.msra.mxu0 %v3977
  %5276 = vmatpush.bf16.msra.mxu0 %v3976
  %5277 = vmatpush.bf16.msra.mxu0 %v3975
  %5278 = vmatpush.bf16.msra.mxu0 %v3974
  %5279 = vmatpush.bf16.msra.mxu0 %v3973
  %5280 = vmatpush.bf16.msra.mxu0 %v3972
  %5281 = vmatpush.bf16.msra.mxu0 %v3971
  %5282 = vmatpush.bf16.msra.mxu0 %v3970
  %5283 = vmatmul.bf16.gmra.mxu0 %v1331
  %v5284 = vpop.f32.mrf.mxu0
  %v5285 = vadd.f32 %v5272, %v5284
  %v5286 = vpop.f32.mrf.mxu0
  %5287 = vdwg.mxu0
  %5288 = vmatpush.bf16.msra.mxu0 %v3985
  %5289 = vmatpush.bf16.msra.mxu0 %v3984
  %5290 = vmatpush.bf16.msra.mxu0 %v3983
  %5291 = vmatpush.bf16.msra.mxu0 %v3982
  %5292 = vmatpush.bf16.msra.mxu0 %v3981
  %5293 = vmatpush.bf16.msra.mxu0 %v3980
  %5294 = vmatpush.bf16.msra.mxu0 %v3979
  %5295 = vmatpush.bf16.msra.mxu0 %v3978
  %5296 = vmatmul.bf16.gmra.mxu0 %v1332
  %v5297 = vpop.f32.mrf.mxu0
  %v5298 = vadd.f32 %v5285, %v5297
  %v5299 = vpop.f32.mrf.mxu0
  %5300 = vdwg.mxu0
  %5301 = vmatpush.bf16.msra.mxu0 %v3993
  %5302 = vmatpush.bf16.msra.mxu0 %v3992
  %5303 = vmatpush.bf16.msra.mxu0 %v3991
  %5304 = vmatpush.bf16.msra.mxu0 %v3990
  %5305 = vmatpush.bf16.msra.mxu0 %v3989
  %5306 = vmatpush.bf16.msra.mxu0 %v3988
  %5307 = vmatpush.bf16.msra.mxu0 %v3987
  %5308 = vmatpush.bf16.msra.mxu0 %v3986
  %5309 = vmatmul.bf16.gmra.mxu0 %v1333
  %v5310 = vpop.f32.mrf.mxu0
  %v5311 = vadd.f32 %v5298, %v5310
  %v5312 = vpop.f32.mrf.mxu0
  %5313 = vdwg.mxu0
  %5314 = vmatpush.bf16.msra.mxu0 %v4001
  %5315 = vmatpush.bf16.msra.mxu0 %v4000
  %5316 = vmatpush.bf16.msra.mxu0 %v3999
  %5317 = vmatpush.bf16.msra.mxu0 %v3998
  %5318 = vmatpush.bf16.msra.mxu0 %v3997
  %5319 = vmatpush.bf16.msra.mxu0 %v3996
  %5320 = vmatpush.bf16.msra.mxu0 %v3995
  %5321 = vmatpush.bf16.msra.mxu0 %v3994
  %5322 = vmatmul.bf16.gmra.mxu0 %v1334
  %v5323 = vpop.f32.mrf.mxu0
  %v5324 = vadd.f32 %v5311, %v5323
  %v5325 = vpop.f32.mrf.mxu0
  %5326 = vdwg.mxu0
  %5327 = vmatpush.bf16.msra.mxu0 %v4009
  %5328 = vmatpush.bf16.msra.mxu0 %v4008
  %5329 = vmatpush.bf16.msra.mxu0 %v4007
  %5330 = vmatpush.bf16.msra.mxu0 %v4006
  %5331 = vmatpush.bf16.msra.mxu0 %v4005
  %5332 = vmatpush.bf16.msra.mxu0 %v4004
  %5333 = vmatpush.bf16.msra.mxu0 %v4003
  %5334 = vmatpush.bf16.msra.mxu0 %v4002
  %5335 = vmatmul.bf16.gmra.mxu0 %v1335
  %v5336 = vpop.f32.mrf.mxu0
  %v5337 = vadd.f32 %v5324, %v5336
  %v5338 = vpop.f32.mrf.mxu0
  %5339 = vdwg.mxu0
  %5340 = vmatpush.bf16.msra.mxu0 %v4017
  %5341 = vmatpush.bf16.msra.mxu0 %v4016
  %5342 = vmatpush.bf16.msra.mxu0 %v4015
  %5343 = vmatpush.bf16.msra.mxu0 %v4014
  %5344 = vmatpush.bf16.msra.mxu0 %v4013
  %5345 = vmatpush.bf16.msra.mxu0 %v4012
  %5346 = vmatpush.bf16.msra.mxu0 %v4011
  %5347 = vmatpush.bf16.msra.mxu0 %v4010
  %5348 = vmatmul.bf16.gmra.mxu0 %v1336
  %v5349 = vpop.f32.mrf.mxu0
  %v5350 = vadd.f32 %v5337, %v5349
  %v5351 = vpop.f32.mrf.mxu0
  %5352 = vdwg.mxu0
  %5353 = vmatpush.bf16.msra.mxu0 %v4025
  %5354 = vmatpush.bf16.msra.mxu0 %v4024
  %5355 = vmatpush.bf16.msra.mxu0 %v4023
  %5356 = vmatpush.bf16.msra.mxu0 %v4022
  %5357 = vmatpush.bf16.msra.mxu0 %v4021
  %5358 = vmatpush.bf16.msra.mxu0 %v4020
  %5359 = vmatpush.bf16.msra.mxu0 %v4019
  %5360 = vmatpush.bf16.msra.mxu0 %v4018
  %5361 = vmatmul.bf16.gmra.mxu0 %v1337
  %v5362 = vpop.f32.mrf.mxu0
  %v5363 = vadd.f32 %v5350, %v5362
  %v5364 = vpop.f32.mrf.mxu0
  %5365 = vdwg.mxu0
  %5366 = vmatpush.bf16.msra.mxu0 %v4033
  %5367 = vmatpush.bf16.msra.mxu0 %v4032
  %5368 = vmatpush.bf16.msra.mxu0 %v4031
  %5369 = vmatpush.bf16.msra.mxu0 %v4030
  %5370 = vmatpush.bf16.msra.mxu0 %v4029
  %5371 = vmatpush.bf16.msra.mxu0 %v4028
  %5372 = vmatpush.bf16.msra.mxu0 %v4027
  %5373 = vmatpush.bf16.msra.mxu0 %v4026
  %5374 = vmatmul.bf16.gmra.mxu0 %v1338
  %v5375 = vpop.f32.mrf.mxu0
  %v5376 = vadd.f32 %v5363, %v5375
  %v5377 = vpop.f32.mrf.mxu0
  %5378 = vdwg.mxu0
  %5379 = vmatpush.bf16.msra.mxu0 %v4041
  %5380 = vmatpush.bf16.msra.mxu0 %v4040
  %5381 = vmatpush.bf16.msra.mxu0 %v4039
  %5382 = vmatpush.bf16.msra.mxu0 %v4038
  %5383 = vmatpush.bf16.msra.mxu0 %v4037
  %5384 = vmatpush.bf16.msra.mxu0 %v4036
  %5385 = vmatpush.bf16.msra.mxu0 %v4035
  %5386 = vmatpush.bf16.msra.mxu0 %v4034
  %5387 = vmatmul.bf16.gmra.mxu0 %v1339
  %v5388 = vpop.f32.mrf.mxu0
  %v5389 = vadd.f32 %v5376, %v5388
  %v5390 = vpop.f32.mrf.mxu0
  %5391 = vdwg.mxu0
  %5392 = vmatpush.bf16.msra.mxu0 %v4049
  %5393 = vmatpush.bf16.msra.mxu0 %v4048
  %5394 = vmatpush.bf16.msra.mxu0 %v4047
  %5395 = vmatpush.bf16.msra.mxu0 %v4046
  %5396 = vmatpush.bf16.msra.mxu0 %v4045
  %5397 = vmatpush.bf16.msra.mxu0 %v4044
  %5398 = vmatpush.bf16.msra.mxu0 %v4043
  %5399 = vmatpush.bf16.msra.mxu0 %v4042
  %5400 = vmatmul.bf16.gmra.mxu0 %v1340
  %v5401 = vpop.f32.mrf.mxu0
  %v5402 = vadd.f32 %v5389, %v5401
  %v5403 = vpop.f32.mrf.mxu0
  %5404 = vdwg.mxu0
  %5405 = vmatpush.bf16.msra.mxu0 %v4057
  %5406 = vmatpush.bf16.msra.mxu0 %v4056
  %5407 = vmatpush.bf16.msra.mxu0 %v4055
  %5408 = vmatpush.bf16.msra.mxu0 %v4054
  %5409 = vmatpush.bf16.msra.mxu0 %v4053
  %5410 = vmatpush.bf16.msra.mxu0 %v4052
  %5411 = vmatpush.bf16.msra.mxu0 %v4051
  %5412 = vmatpush.bf16.msra.mxu0 %v4050
  %5413 = vmatmul.bf16.gmra.mxu0 %v1341
  %v5414 = vpop.f32.mrf.mxu0
  %v5415 = vadd.f32 %v5402, %v5414
  %v5416 = vpop.f32.mrf.mxu0
  %5417 = vdwg.mxu0
  %5418 = vmatpush.bf16.msra.mxu0 %v4065
  %5419 = vmatpush.bf16.msra.mxu0 %v4064
  %5420 = vmatpush.bf16.msra.mxu0 %v4063
  %5421 = vmatpush.bf16.msra.mxu0 %v4062
  %5422 = vmatpush.bf16.msra.mxu0 %v4061
  %5423 = vmatpush.bf16.msra.mxu0 %v4060
  %5424 = vmatpush.bf16.msra.mxu0 %v4059
  %5425 = vmatpush.bf16.msra.mxu0 %v4058
  %5426 = vmatmul.bf16.gmra.mxu0 %v1342
  %v5427 = vpop.f32.mrf.mxu0
  %v5428 = vadd.f32 %v5415, %v5427
  %v5429 = vpop.f32.mrf.mxu0
  %5430 = vdwg.mxu0
  %5431 = vmatpush.bf16.msra.mxu0 %v4073
  %5432 = vmatpush.bf16.msra.mxu0 %v4072
  %5433 = vmatpush.bf16.msra.mxu0 %v4071
  %5434 = vmatpush.bf16.msra.mxu0 %v4070
  %5435 = vmatpush.bf16.msra.mxu0 %v4069
  %5436 = vmatpush.bf16.msra.mxu0 %v4068
  %5437 = vmatpush.bf16.msra.mxu0 %v4067
  %5438 = vmatpush.bf16.msra.mxu0 %v4066
  %5439 = vmatmul.bf16.gmra.mxu0 %v1343
  %v5440 = vpop.f32.mrf.mxu0
  %v5441 = vadd.f32 %v5428, %v5440
  %v5442 = vpop.f32.mrf.mxu0
  %5443 = vdwg.mxu0
  %5444 = vmatpush.bf16.msra.mxu0 %v4081
  %5445 = vmatpush.bf16.msra.mxu0 %v4080
  %5446 = vmatpush.bf16.msra.mxu0 %v4079
  %5447 = vmatpush.bf16.msra.mxu0 %v4078
  %5448 = vmatpush.bf16.msra.mxu0 %v4077
  %5449 = vmatpush.bf16.msra.mxu0 %v4076
  %5450 = vmatpush.bf16.msra.mxu0 %v4075
  %5451 = vmatpush.bf16.msra.mxu0 %v4074
  %5452 = vmatmul.bf16.gmra.mxu0 %v1344
  %v5453 = vpop.f32.mrf.mxu0
  %v5454 = vadd.f32 %v5441, %v5453
  %v5455 = vpop.f32.mrf.mxu0
  %5456 = vdwg.mxu0
  %5457 = vmatpush.bf16.msra.mxu0 %v4089
  %5458 = vmatpush.bf16.msra.mxu0 %v4088
  %5459 = vmatpush.bf16.msra.mxu0 %v4087
  %5460 = vmatpush.bf16.msra.mxu0 %v4086
  %5461 = vmatpush.bf16.msra.mxu0 %v4085
  %5462 = vmatpush.bf16.msra.mxu0 %v4084
  %5463 = vmatpush.bf16.msra.mxu0 %v4083
  %5464 = vmatpush.bf16.msra.mxu0 %v4082
  %5465 = vmatmul.bf16.gmra.mxu0 %v1345
  %v5466 = vpop.f32.mrf.mxu0
  %v5467 = vadd.f32 %v5454, %v5466
  %v5468 = vpop.f32.mrf.mxu0
  %5469 = vdwg.mxu0
  %5470 = vmatpush.bf16.msra.mxu0 %v4097
  %5471 = vmatpush.bf16.msra.mxu0 %v4096
  %5472 = vmatpush.bf16.msra.mxu0 %v4095
  %5473 = vmatpush.bf16.msra.mxu0 %v4094
  %5474 = vmatpush.bf16.msra.mxu0 %v4093
  %5475 = vmatpush.bf16.msra.mxu0 %v4092
  %5476 = vmatpush.bf16.msra.mxu0 %v4091
  %5477 = vmatpush.bf16.msra.mxu0 %v4090
  %5478 = vmatmul.bf16.gmra.mxu0 %v1346
  %v5479 = vpop.f32.mrf.mxu0
  %v5480 = vadd.f32 %v5467, %v5479
  %v5481 = vpop.f32.mrf.mxu0
  %5482 = vdwg.mxu0
  %5483 = vmatpush.bf16.msra.mxu0 %v4105
  %5484 = vmatpush.bf16.msra.mxu0 %v4104
  %5485 = vmatpush.bf16.msra.mxu0 %v4103
  %5486 = vmatpush.bf16.msra.mxu0 %v4102
  %5487 = vmatpush.bf16.msra.mxu0 %v4101
  %5488 = vmatpush.bf16.msra.mxu0 %v4100
  %5489 = vmatpush.bf16.msra.mxu0 %v4099
  %5490 = vmatpush.bf16.msra.mxu0 %v4098
  %5491 = vmatmul.bf16.gmra.mxu0 %v1347
  %v5492 = vpop.f32.mrf.mxu0
  %v5493 = vadd.f32 %v5480, %v5492
  %v5494 = vpop.f32.mrf.mxu0
  %5495 = vdwg.mxu0
  %5496 = vmatpush.bf16.msra.mxu0 %v4113
  %5497 = vmatpush.bf16.msra.mxu0 %v4112
  %5498 = vmatpush.bf16.msra.mxu0 %v4111
  %5499 = vmatpush.bf16.msra.mxu0 %v4110
  %5500 = vmatpush.bf16.msra.mxu0 %v4109
  %5501 = vmatpush.bf16.msra.mxu0 %v4108
  %5502 = vmatpush.bf16.msra.mxu0 %v4107
  %5503 = vmatpush.bf16.msra.mxu0 %v4106
  %5504 = vmatmul.bf16.gmra.mxu0 %v1348
  %v5505 = vpop.f32.mrf.mxu0
  %v5506 = vadd.f32 %v5493, %v5505
  %v5507 = vpop.f32.mrf.mxu0
  %5508 = vdwg.mxu0
  %5509 = vmatpush.bf16.msra.mxu0 %v4121
  %5510 = vmatpush.bf16.msra.mxu0 %v4120
  %5511 = vmatpush.bf16.msra.mxu0 %v4119
  %5512 = vmatpush.bf16.msra.mxu0 %v4118
  %5513 = vmatpush.bf16.msra.mxu0 %v4117
  %5514 = vmatpush.bf16.msra.mxu0 %v4116
  %5515 = vmatpush.bf16.msra.mxu0 %v4115
  %5516 = vmatpush.bf16.msra.mxu0 %v4114
  %5517 = vmatmul.bf16.gmra.mxu0 %v1349
  %v5518 = vpop.f32.mrf.mxu0
  %v5519 = vadd.f32 %v5506, %v5518
  %v5520 = vpop.f32.mrf.mxu0
  %5521 = vdwg.mxu0
  %5522 = vmatpush.bf16.msra.mxu0 %v4129
  %5523 = vmatpush.bf16.msra.mxu0 %v4128
  %5524 = vmatpush.bf16.msra.mxu0 %v4127
  %5525 = vmatpush.bf16.msra.mxu0 %v4126
  %5526 = vmatpush.bf16.msra.mxu0 %v4125
  %5527 = vmatpush.bf16.msra.mxu0 %v4124
  %5528 = vmatpush.bf16.msra.mxu0 %v4123
  %5529 = vmatpush.bf16.msra.mxu0 %v4122
  %5530 = vmatmul.bf16.gmra.mxu0 %v1350
  %v5531 = vpop.f32.mrf.mxu0
  %v5532 = vadd.f32 %v5519, %v5531
  %v5533 = vpop.f32.mrf.mxu0
  %5534 = vdwg.mxu0
  %5535 = vmatpush.bf16.msra.mxu0 %v4137
  %5536 = vmatpush.bf16.msra.mxu0 %v4136
  %5537 = vmatpush.bf16.msra.mxu0 %v4135
  %5538 = vmatpush.bf16.msra.mxu0 %v4134
  %5539 = vmatpush.bf16.msra.mxu0 %v4133
  %5540 = vmatpush.bf16.msra.mxu0 %v4132
  %5541 = vmatpush.bf16.msra.mxu0 %v4131
  %5542 = vmatpush.bf16.msra.mxu0 %v4130
  %5543 = vmatmul.bf16.gmra.mxu0 %v1351
  %v5544 = vpop.f32.mrf.mxu0
  %v5545 = vadd.f32 %v5532, %v5544
  %v5546 = vpop.f32.mrf.mxu0
  %5547 = vdwg.mxu0
  %5548 = vmatpush.bf16.msra.mxu0 %v4145
  %5549 = vmatpush.bf16.msra.mxu0 %v4144
  %5550 = vmatpush.bf16.msra.mxu0 %v4143
  %5551 = vmatpush.bf16.msra.mxu0 %v4142
  %5552 = vmatpush.bf16.msra.mxu0 %v4141
  %5553 = vmatpush.bf16.msra.mxu0 %v4140
  %5554 = vmatpush.bf16.msra.mxu0 %v4139
  %5555 = vmatpush.bf16.msra.mxu0 %v4138
  %5556 = vmatmul.bf16.gmra.mxu0 %v1352
  %v5557 = vpop.f32.mrf.mxu0
  %v5558 = vadd.f32 %v5545, %v5557
  %v5559 = vpop.f32.mrf.mxu0
  %5560 = vdwg.mxu0
  %5561 = vmatpush.bf16.msra.mxu0 %v4153
  %5562 = vmatpush.bf16.msra.mxu0 %v4152
  %5563 = vmatpush.bf16.msra.mxu0 %v4151
  %5564 = vmatpush.bf16.msra.mxu0 %v4150
  %5565 = vmatpush.bf16.msra.mxu0 %v4149
  %5566 = vmatpush.bf16.msra.mxu0 %v4148
  %5567 = vmatpush.bf16.msra.mxu0 %v4147
  %5568 = vmatpush.bf16.msra.mxu0 %v4146
  %5569 = vmatmul.bf16.gmra.mxu0 %v1353
  %v5570 = vpop.f32.mrf.mxu0
  %v5571 = vadd.f32 %v5558, %v5570
  %v5572 = vpop.f32.mrf.mxu0
  %5573 = vdwg.mxu0
  %5574 = vmatpush.bf16.msra.mxu0 %v4161
  %5575 = vmatpush.bf16.msra.mxu0 %v4160
  %5576 = vmatpush.bf16.msra.mxu0 %v4159
  %5577 = vmatpush.bf16.msra.mxu0 %v4158
  %5578 = vmatpush.bf16.msra.mxu0 %v4157
  %5579 = vmatpush.bf16.msra.mxu0 %v4156
  %5580 = vmatpush.bf16.msra.mxu0 %v4155
  %5581 = vmatpush.bf16.msra.mxu0 %v4154
  %5582 = vmatmul.bf16.gmra.mxu0 %v1354
  %v5583 = vpop.f32.mrf.mxu0
  %v5584 = vadd.f32 %v5571, %v5583
  %v5585 = vpop.f32.mrf.mxu0
  %5586 = vdwg.mxu0
  %5587 = vmatpush.bf16.msra.mxu0 %v4169
  %5588 = vmatpush.bf16.msra.mxu0 %v4168
  %5589 = vmatpush.bf16.msra.mxu0 %v4167
  %5590 = vmatpush.bf16.msra.mxu0 %v4166
  %5591 = vmatpush.bf16.msra.mxu0 %v4165
  %5592 = vmatpush.bf16.msra.mxu0 %v4164
  %5593 = vmatpush.bf16.msra.mxu0 %v4163
  %5594 = vmatpush.bf16.msra.mxu0 %v4162
  %5595 = vmatmul.bf16.gmra.mxu0 %v1355
  %v5596 = vpop.f32.mrf.mxu0
  %v5597 = vadd.f32 %v5584, %v5596
  %v5598 = vpop.f32.mrf.mxu0
  %5599 = vdwg.mxu0
  %5600 = vmatpush.bf16.msra.mxu0 %v4177
  %5601 = vmatpush.bf16.msra.mxu0 %v4176
  %5602 = vmatpush.bf16.msra.mxu0 %v4175
  %5603 = vmatpush.bf16.msra.mxu0 %v4174
  %5604 = vmatpush.bf16.msra.mxu0 %v4173
  %5605 = vmatpush.bf16.msra.mxu0 %v4172
  %5606 = vmatpush.bf16.msra.mxu0 %v4171
  %5607 = vmatpush.bf16.msra.mxu0 %v4170
  %5608 = vmatmul.bf16.gmra.mxu0 %v1356
  %v5609 = vpop.f32.mrf.mxu0
  %v5610 = vadd.f32 %v5597, %v5609
  %v5611 = vpop.f32.mrf.mxu0
  %5612 = vdwg.mxu0
  %5613 = vmatpush.bf16.msra.mxu0 %v4185
  %5614 = vmatpush.bf16.msra.mxu0 %v4184
  %5615 = vmatpush.bf16.msra.mxu0 %v4183
  %5616 = vmatpush.bf16.msra.mxu0 %v4182
  %5617 = vmatpush.bf16.msra.mxu0 %v4181
  %5618 = vmatpush.bf16.msra.mxu0 %v4180
  %5619 = vmatpush.bf16.msra.mxu0 %v4179
  %5620 = vmatpush.bf16.msra.mxu0 %v4178
  %5621 = vmatmul.bf16.gmra.mxu0 %v1357
  %v5622 = vpop.f32.mrf.mxu0
  %v5623 = vadd.f32 %v5610, %v5622
  %v5624 = vpop.f32.mrf.mxu0
  %5625 = vdwg.mxu0
  %5626 = vmatpush.bf16.msra.mxu0 %v4193
  %5627 = vmatpush.bf16.msra.mxu0 %v4192
  %5628 = vmatpush.bf16.msra.mxu0 %v4191
  %5629 = vmatpush.bf16.msra.mxu0 %v4190
  %5630 = vmatpush.bf16.msra.mxu0 %v4189
  %5631 = vmatpush.bf16.msra.mxu0 %v4188
  %5632 = vmatpush.bf16.msra.mxu0 %v4187
  %5633 = vmatpush.bf16.msra.mxu0 %v4186
  %5634 = vmatmul.bf16.gmra.mxu0 %v1358
  %v5635 = vpop.f32.mrf.mxu0
  %v5636 = vadd.f32 %v5623, %v5635
  %v5637 = vpop.f32.mrf.mxu0
  %5638 = vdwg.mxu0
  %5639 = vmatpush.bf16.msra.mxu0 %v4201
  %5640 = vmatpush.bf16.msra.mxu0 %v4200
  %5641 = vmatpush.bf16.msra.mxu0 %v4199
  %5642 = vmatpush.bf16.msra.mxu0 %v4198
  %5643 = vmatpush.bf16.msra.mxu0 %v4197
  %5644 = vmatpush.bf16.msra.mxu0 %v4196
  %5645 = vmatpush.bf16.msra.mxu0 %v4195
  %5646 = vmatpush.bf16.msra.mxu0 %v4194
  %5647 = vmatmul.bf16.gmra.mxu0 %v1359
  %v5648 = vpop.f32.mrf.mxu0
  %v5649 = vadd.f32 %v5636, %v5648
  %v5650 = vpop.f32.mrf.mxu0
  %5651 = vdwg.mxu0
  %5652 = vmatpush.bf16.msra.mxu0 %v4209
  %5653 = vmatpush.bf16.msra.mxu0 %v4208
  %5654 = vmatpush.bf16.msra.mxu0 %v4207
  %5655 = vmatpush.bf16.msra.mxu0 %v4206
  %5656 = vmatpush.bf16.msra.mxu0 %v4205
  %5657 = vmatpush.bf16.msra.mxu0 %v4204
  %5658 = vmatpush.bf16.msra.mxu0 %v4203
  %5659 = vmatpush.bf16.msra.mxu0 %v4202
  %5660 = vmatmul.bf16.gmra.mxu0 %v1360
  %v5661 = vpop.f32.mrf.mxu0
  %v5662 = vadd.f32 %v5649, %v5661
  %v5663 = vpop.f32.mrf.mxu0
  %5664 = vdwg.mxu0
  %5665 = vmatpush.bf16.msra.mxu0 %v4217
  %5666 = vmatpush.bf16.msra.mxu0 %v4216
  %5667 = vmatpush.bf16.msra.mxu0 %v4215
  %5668 = vmatpush.bf16.msra.mxu0 %v4214
  %5669 = vmatpush.bf16.msra.mxu0 %v4213
  %5670 = vmatpush.bf16.msra.mxu0 %v4212
  %5671 = vmatpush.bf16.msra.mxu0 %v4211
  %5672 = vmatpush.bf16.msra.mxu0 %v4210
  %5673 = vmatmul.bf16.gmra.mxu0 %v1361
  %v5674 = vpop.f32.mrf.mxu0
  %v5675 = vadd.f32 %v5662, %v5674
  %v5676 = vpop.f32.mrf.mxu0
  %5677 = vdwg.mxu0
  %5678 = vmatpush.bf16.msra.mxu0 %v4225
  %5679 = vmatpush.bf16.msra.mxu0 %v4224
  %5680 = vmatpush.bf16.msra.mxu0 %v4223
  %5681 = vmatpush.bf16.msra.mxu0 %v4222
  %5682 = vmatpush.bf16.msra.mxu0 %v4221
  %5683 = vmatpush.bf16.msra.mxu0 %v4220
  %5684 = vmatpush.bf16.msra.mxu0 %v4219
  %5685 = vmatpush.bf16.msra.mxu0 %v4218
  %5686 = vmatmul.bf16.gmra.mxu0 %v1362
  %v5687 = vpop.f32.mrf.mxu0
  %v5688 = vadd.f32 %v5675, %v5687
  %v5689 = vpop.f32.mrf.mxu0
  %5690 = vdwg.mxu0
  %5691 = vmatpush.bf16.msra.mxu0 %v4233
  %5692 = vmatpush.bf16.msra.mxu0 %v4232
  %5693 = vmatpush.bf16.msra.mxu0 %v4231
  %5694 = vmatpush.bf16.msra.mxu0 %v4230
  %5695 = vmatpush.bf16.msra.mxu0 %v4229
  %5696 = vmatpush.bf16.msra.mxu0 %v4228
  %5697 = vmatpush.bf16.msra.mxu0 %v4227
  %5698 = vmatpush.bf16.msra.mxu0 %v4226
  %5699 = vmatmul.bf16.gmra.mxu0 %v1363
  %v5700 = vpop.f32.mrf.mxu0
  %v5701 = vadd.f32 %v5688, %v5700
  %v5702 = vpop.f32.mrf.mxu0
  %5703 = vdwg.mxu0
  %v5704 = vadd.f32 %v33, %v5701
  %vm5705 = vcmask 523264
  %5706 = vst.msk [vmem:[#allocation2] sm:$0xff] %vm5705, %v5704
  // Predicated region
  $region34: #{model_reports_forward.1} parent=0 // pred_check
    %p5707 = pneg %p27
  $region35: #{model_reports_forward.1} parent=0 // pred_check_branch
    %5709 = sbr.rel (%p5707) target = $region37
  $region36: #{model_reports_forward.1} parent=0 // pred_region
    %v5710 = vld [vmem:[#allocation2] sm:$0xff]
    %v5711 = vld [vmem:[%s2] sm:$0x1]
    %v5713 = vperm.slane %v5711, 0
    %v5715 = vadd.f32 %v5710, %v5713
    %v5716 = vmax.f32 %v5715, 0.0
    %v5717 = vpack.c.bf16 %v5716, %v5716
    %v5718 = vld [vmem:[%s3] sm:$0xf]
    %v5719 = vld [vmem:[%s3 + $0x4] sm:$0xf]
    %v5720 = vld [vmem:[%s3 + $0x8] sm:$0xf]
    %v5721 = vld [vmem:[%s3 + $0xc] sm:$0xf]
    %v5722 = vld [vmem:[%s3 + $0x10] sm:$0xf]
    %v5723 = vld [vmem:[%s3 + $0x14] sm:$0xf]
    %v5724 = vld [vmem:[%s3 + $0x18] sm:$0xf]
    %v5725 = vld [vmem:[%s3 + $0x1c] sm:$0xf]
    %v5726 = vld [vmem:[%s4] sm:$0x1]
    %v5728 = vperm.slane %v5726, 0
    %v5738 = vunpack.c.l.b16 %v5718
    %v5739 = vunpack.c.l.b16 %v5719
    %v5740 = vunpack.c.l.b16 %v5720
    %v5741 = vunpack.c.l.b16 %v5721
    %v5742 = vunpack.c.l.b16 %v5722
    %v5743 = vunpack.c.l.b16 %v5723
    %v5744 = vunpack.c.l.b16 %v5724
    %v5745 = vunpack.c.l.b16 %v5725
    %v5746 = vpack.c.b16 %v5739, %v5738
    %v5747 = vpack.c.b16 %v5741, %v5740
    %v5748 = vpack.c.b16 %v5743, %v5742
    %v5749 = vpack.c.b16 %v5745, %v5744
    %v5755 = vsel %vm5705, %v5717, 0
    %5757 = vmatpush.bf16.msra.mxu0 0
    %5758 = vmatpush.bf16.msra.mxu0 0
    %5759 = vmatpush.bf16.msra.mxu0 0
    %5760 = vmatpush.bf16.msra.mxu0 0
    %5761 = vmatpush.bf16.msra.mxu0 %v5749
    %5762 = vmatpush.bf16.msra.mxu0 %v5748
    %5763 = vmatpush.bf16.msra.mxu0 %v5747
    %5764 = vmatpush.bf16.msra.mxu0 %v5746
    %5765 = vmatmul.bf16.gmra.mxu0 %v5755
    %v5766 = vpop.f32.mrf.mxu0
    %v5767 = vadd.f32 %v5728, %v5766
    %v5768 = vpop.f32.mrf.mxu0
    %5769 = vdwg.mxu0
    %v5770 = vmax.f32 %v5767, 0.0
    %v5771 = vpack.c.bf16 %v5770, %v5770
    %v5772 = vld [vmem:[%s5] sm:$0xf]
    %v5773 = vld [vmem:[%s5 + $0x4] sm:$0xf]
    %v5774 = vld [vmem:[%s5 + $0x8] sm:$0xf]
    %v5775 = vld [vmem:[%s5 + $0xc] sm:$0xf]
    %v5776 = vld [vmem:[%s5 + $0x10] sm:$0xf]
    %v5777 = vld [vmem:[%s5 + $0x14] sm:$0xf]
    %v5778 = vld [vmem:[%s5 + $0x18] sm:$0xf]
    %v5779 = vld [vmem:[%s5 + $0x1c] sm:$0xf]
    %v5780 = vld [vmem:[%s5 + $0x20] sm:$0xf]
    %v5781 = vld [vmem:[%s5 + $0x24] sm:$0xf]
    %v5782 = vld [vmem:[%s5 + $0x28] sm:$0xf]
    %v5783 = vld [vmem:[%s5 + $0x2c] sm:$0xf]
    %v5784 = vld [vmem:[%s5 + $0x30] sm:$0xf]
    %v5785 = vld [vmem:[%s5 + $0x34] sm:$0xf]
    %v5786 = vld [vmem:[%s5 + $0x38] sm:$0xf]
    %v5787 = vld [vmem:[%s5 + $0x3c] sm:$0xf]
    %v5788 = vld [vmem:[%s6] sm:$0x1]
    %v5790 = vperm.slane %v5788, 0
    %v5808 = vunpack.c.l.b16 %v5772
    %v5809 = vunpack.c.l.b16 %v5773
    %v5810 = vunpack.c.l.b16 %v5774
    %v5811 = vunpack.c.l.b16 %v5775
    %v5812 = vunpack.c.l.b16 %v5776
    %v5813 = vunpack.c.l.b16 %v5777
    %v5814 = vunpack.c.l.b16 %v5778
    %v5815 = vunpack.c.l.b16 %v5779
    %v5816 = vunpack.c.l.b16 %v5780
    %v5817 = vunpack.c.l.b16 %v5781
    %v5818 = vunpack.c.l.b16 %v5782
    %v5819 = vunpack.c.l.b16 %v5783
    %v5820 = vunpack.c.l.b16 %v5784
    %v5821 = vunpack.c.l.b16 %v5785
    %v5822 = vunpack.c.l.b16 %v5786
    %v5823 = vunpack.c.l.b16 %v5787
    %v5824 = vpack.c.b16 %v5809, %v5808
    %v5825 = vpack.c.b16 %v5811, %v5810
    %v5826 = vpack.c.b16 %v5813, %v5812
    %v5827 = vpack.c.b16 %v5815, %v5814
    %v5828 = vpack.c.b16 %v5817, %v5816
    %v5829 = vpack.c.b16 %v5819, %v5818
    %v5830 = vpack.c.b16 %v5821, %v5820
    %v5831 = vpack.c.b16 %v5823, %v5822
    %5840 = vmatpush.bf16.msra.mxu0 %v5831
    %5841 = vmatpush.bf16.msra.mxu0 %v5830
    %5842 = vmatpush.bf16.msra.mxu0 %v5829
    %5843 = vmatpush.bf16.msra.mxu0 %v5828
    %5844 = vmatpush.bf16.msra.mxu0 %v5827
    %5845 = vmatpush.bf16.msra.mxu0 %v5826
    %5846 = vmatpush.bf16.msra.mxu0 %v5825
    %5847 = vmatpush.bf16.msra.mxu0 %v5824
    %5848 = vmatmul.bf16.gmra.mxu0 %v5771
    %v5849 = vpop.f32.mrf.mxu0
    %v5850 = vadd.f32 %v5790, %v5849
    %v5851 = vpop.f32.mrf.mxu0
    %5852 = vdwg.mxu0
    %v5853 = vmax.f32 %v5850, 0.0
    %5854 = vst [vmem:[%s7] sm:$0xff] %v5853
  $region37: #{model_reports_forward.1} parent=0 // pred_fallthru
    _
  // Predicated region
  $region38: #{model_reports_forward.1} parent=0 // pred_check
    _
  $region39: #{model_reports_forward.1} parent=0 // pred_check_branch
    %5856 = sbr.rel (0) target = $region41
  $region40: #{model_reports_forward.1} parent=0 // pred_region
    _
  $region41: #{model_reports_forward.1} parent=0 // pred_fallthru
    _
  // Predicated region
  $region42: #{model_reports_forward.1} parent=0 // pred_check
    _
  $region43: #{model_reports_forward.1} parent=0 // pred_check_branch
    %5858 = sbr.rel (0) target = $region45
  $region44: #{model_reports_forward.1} parent=0 // pred_region
    _
  $region45: #{model_reports_forward.1} parent=0 // pred_fallthru
    _

</llo_original>
